<compile_context>
chip_gen: v7x
topology: tpu7x:2x2x1
jax: 0.10.0
libtpu: 0.0.40
codegen_flags: <defaults>
</compile_context>

<pallas_src>
import functools

import jax
import jax.numpy as jnp
import numpy as np
from jax.experimental import pallas as pl
from jax.experimental.pallas import tpu as pltpu


# ----------------------------- kernel helpers --------------------------------

def _layer_norm(h, gamma, beta, eps):
    mu = jnp.mean(h, axis=-1, keepdims=True)
    var = jnp.mean((h - mu) ** 2, axis=-1, keepdims=True)
    return (h - mu) * jax.lax.rsqrt(var + eps) * gamma + beta


# ----------------------------- fused kernel -----------------------------------

def fused_layer_kernel(x_ref, wqkv_ref, bqkv_ref, wo_ref, bo_ref, g1_ref, be1_ref,
                       gw_ref, gb_ref, w1_ref, b1_ref, w2_ref, b2_ref,
                       g2_ref, be2_ref, o_ref, ff_ref,
                       *, nhead, head_dim, batch_block, seq_len, num_experts, eps):
    """attention + norm1 + top-2 MoE FFN + norm2 for one block of batch elements."""
    H, hd = nhead, head_dim
    D = H * hd
    BB, T = batch_block, seq_len
    R = BB * T                                # rows in this block
    bf16 = jnp.bfloat16

    x = x_ref[...]                            # (R, D) f32

    # ---- fused QKV projection (bf16 MXU, f32 accumulate) ----
    qkv = jnp.dot(x.astype(bf16), wqkv_ref[...],
                  preferred_element_type=jnp.float32) + bqkv_ref[...]      # (R, 3D) f32
    qkv = qkv.reshape(BB, T, 3 * D)

    # gather per-head q/k/v and merge (head, batch) into ONE leading batch axis
    qs, ks, vs = [], [], []
    for h in range(H):                        # static unroll; slicing/concat is XLU work
        lo = h * hd
        qs.append(qkv[:, :, lo:lo + hd])
        ks.append(qkv[:, :, D + lo:D + lo + hd])
        vs.append(qkv[:, :, 2 * D + lo:2 * D + lo + hd])
    q = jnp.concatenate(qs, axis=0).astype(bf16)          # (H*BB, T, hd)
    k = jnp.concatenate(ks, axis=0).astype(bf16)
    v = jnp.concatenate(vs, axis=0).astype(bf16)

    scale = hd ** (-0.5)
    s = jnp.einsum('btd,bsd->bts', q, k,
                   preferred_element_type=jnp.float32) * scale            # (H*BB, T, T) f32
    s = s - jnp.max(s, axis=-1, keepdims=True)
    p = jnp.exp(s)
    p = p * pl.reciprocal(jnp.sum(p, axis=-1, keepdims=True), approx=True)
    oh = jnp.einsum('bts,bsd->btd', p.astype(bf16), v,
                    preferred_element_type=jnp.float32)                   # (H*BB, T, hd)

    # scatter heads back onto the lane axis -> (R, D), then ONE full-K W_o matmul
    heads = [oh[h * BB:(h + 1) * BB] for h in range(H)]
    attn_in = jnp.concatenate(heads, axis=-1).reshape(R, D)               # (R, D) f32
    attn = jnp.dot(attn_in.astype(bf16), wo_ref[...],
                   preferred_element_type=jnp.float32) + bo_ref[...]

    y1 = _layer_norm(x + attn, g1_ref[...], be1_ref[...], eps)            # (R, D) f32
    y1_bf = y1.astype(bf16)

    # ---- MoE gate (kept f32 so rounding cannot flip top-2 routing) ----
    E = num_experts
    logits = jnp.dot(y1, gw_ref[...], preferred_element_type=jnp.float32) + gb_ref[...]
    logits = logits - jnp.max(logits, axis=-1, keepdims=True)
    ex = jnp.exp(logits)
    scores = ex * pl.reciprocal(jnp.sum(ex, axis=-1, keepdims=True), approx=True)  # (R, E)

    eidx = jax.lax.broadcasted_iota(jnp.int32, (R, E), 1)
    m1 = jnp.max(scores, axis=-1, keepdims=True)
    i1 = jnp.min(jnp.where(scores == m1, eidx, E), axis=-1, keepdims=True)
    masked = jnp.where(eidx == i1, -jnp.inf, scores)
    m2 = jnp.max(masked, axis=-1, keepdims=True)
    i2 = jnp.min(jnp.where(masked == m2, eidx, E), axis=-1, keepdims=True)
    # per-expert weight: its softmax score if chosen in the top-2, else 0
    w = jnp.where(eidx == i1, m1, 0.0) + jnp.where(eidx == i2, m2, 0.0)             # (R, E)

    # ---- experts: bf16 matmuls, f32 accumulate; skip experts nobody routed to ----
    ff_ref[...] = jnp.zeros_like(ff_ref)
    for e in range(E):                        # static unroll (E is small here)
        we = w[:, e:e + 1]                    # (R, 1) f32, >= 0

        @pl.when(jnp.max(we) > 0.0)
        def _(we=we, e=e):
            hmid = jnp.dot(y1_bf, w1_ref[e], preferred_element_type=jnp.float32) + b1_ref[e]
            hmid = jnp.maximum(hmid, 0.0)     # ReLU
            he = jnp.dot(hmid.astype(bf16), w2_ref[e],
                         preferred_element_type=jnp.float32) + b2_ref[e]
            ff_ref[...] += we * he

    o_ref[...] = _layer_norm(y1 + ff_ref[...], g2_ref[...], be2_ref[...], eps)


# ----------------------------- wrapper ----------------------------------------

def prepare_weights(p):
    """One-time weight prep: fuse QKV, cast large matmul weights to bf16."""
    bf = jnp.bfloat16
    wqkv = jnp.concatenate([p["wq"], p["wk"], p["wv"]], axis=1).astype(bf)
    bqkv = jnp.concatenate([p["bq"], p["bk"], p["bv"]], axis=1).astype(jnp.float32)
    return (wqkv, bqkv,
            p["wo"].astype(bf), p["bo"],
            p["g1"], p["be1"],
            p["gw"].astype(jnp.float32), p["gb"],        # gate stays f32 (routing stability)
            p["ew1"].astype(bf), p["eb1"],
            p["ew2"].astype(bf), p["eb2"],
            p["g2"], p["be2"])


def _resident_spec(shape, buffered):
    nd = len(shape)
    idx = lambda i, _nd=nd: (0,) * _nd
    if buffered:
        # constant block index -> single buffer (halves weight VMEM residency)
        return pl.BlockSpec(shape, idx, pipeline_mode=pl.Buffered(1))
    return pl.BlockSpec(shape, idx)


def _vmem_limit_bytes():
    try:
        cap = int(pltpu.get_tpu_info().vmem_capacity_bytes)
    except Exception:
        cap = 64 * 1024 * 1024
    # ~100 MiB on 128-MiB chips (v5e/v6e), ~51 MiB on 64-MiB v7x
    return max(32 * 1024 * 1024, min(100 * 1024 * 1024, int(cap * 0.8)))


def _pick_batch_block(B, T, rows_per_block):
    bb = max(1, min(B, max(1, rows_per_block // T)))
    if B >= 2:
        bb = min(bb, B // 2)     # keep grid >= 2 so "parallel" can shard across 2 TCs (v7x)
    bb = max(bb, 1)
    while B % bb != 0:
        bb -= 1
    return bb


def _cost_estimate(B, T, D, FF, E, nhead):
    R = B * T
    hd = D // nhead
    flops = 2 * R * D * (3 * D)                       # fused QKV
    flops += 2 * B * nhead * T * T * hd * 2           # scores + PV
    flops += 2 * R * D * D                            # out projection
    flops += 2 * R * D * E                            # gate
    flops += 2 * R * (D * FF + FF * D) * min(2, E)    # top-2 expert FFN work
    transcendentals = B * nhead * T * T + R * E       # softmax exps
    bytes_accessed = 4 * R * D * 2                    # activations in + out (f32)
    bytes_accessed += 2 * (3 * D * D + D * D + 2 * E * D * FF)          # bf16 weights
    bytes_accessed += 4 * (7 * D + E + E * (FF + D))                    # f32 biases / LN / gate
    return pl.CostEstimate(flops=int(flops), transcendentals=int(transcendentals),
                           bytes_accessed=int(bytes_accessed))


def transformer_encoder_moe_layer(x, weights, *, nhead, num_experts, eps=1e-5,
                                  rows_per_block=512):
    # rows_per_block: ~512-1024 is a good target on v5e/v6e (128 MiB VMEM);
    # keep ~256 on v7x if weight residency gets tight.
    B, T, D = x.shape
    head_dim = D // nhead
    R = B * T
    FF = weights[8].shape[-1]                          # ew1: (E, D, FF)

    bb = _pick_batch_block(B, T, rows_per_block)
    rows_blk = bb * T
    grid = (B // bb,)

    x2d = x.reshape(R, D)
    act_spec = pl.BlockSpec((rows_blk, D), lambda i: (i, 0))
    kernel = functools.partial(fused_layer_kernel, nhead=nhead, head_dim=head_dim,
                               batch_block=bb, seq_len=T, num_experts=num_experts, eps=eps)
    ce = _cost_estimate(B, T, D, FF, num_experts, nhead)
    vmem_limit = _vmem_limit_bytes()

    def run(buffered):
        return pl.pallas_call(
            kernel,
            out_shape=jax.ShapeDtypeStruct((R, D), jnp.float32),
            grid=grid,
            in_specs=[act_spec] + [_resident_spec(w.shape, buffered) for w in weights],
            out_specs=act_spec,
            scratch_shapes=[pltpu.VMEM((rows_blk, D), jnp.float32)],
            compiler_params=pltpu.CompilerParams(
                dimension_semantics=("parallel",),
                vmem_limit_bytes=vmem_limit),
            cost_estimate=ce,
        )(x2d, *weights)

    try:
        y = run(True)
    except Exception:
        # TODO(synk): drop this fallback once pl.Buffered(1) is guaranteed on the target jax.
        y = run(False)

    return y.reshape(B, T, D)


# ----------------------------- reference (pure JAX, for sanity) ---------------

def reference(x, p, *, nhead, num_experts, eps=1e-5):
    B, T, D = x.shape
    hd = D // nhead
    hi = jax.lax.Precision.HIGHEST

    def lin(a, w, b):
        return jnp.dot(a, w, precision=hi) + b

    q = lin(x, p["wq"], p["bq"]).reshape(B, T, nhead, hd).transpose(0, 2, 1, 3)
    k = lin(x, p["wk"], p["bk"]).reshape(B, T, nhead, hd).transpose(0, 2, 1, 3)
    v = lin(x, p["wv"], p["bv"]).reshape(B, T, nhead, hd).transpose(0, 2, 1, 3)
    s = jnp.einsum("bhtd,bhsd->bhts", q, k, precision=hi) * (hd ** -0.5)
    pr = jax.nn.softmax(s, axis=-1)
    o = jnp.einsum("bhts,bhsd->bhtd", pr, v, precision=hi)
    o = o.transpose(0, 2, 1, 3).reshape(B, T, D)
    o = lin(o, p["wo"], p["bo"])

    def ln(h, g, be):
        mu = jnp.mean(h, axis=-1, keepdims=True)
        var = jnp.mean((h - mu) ** 2, axis=-1, keepdims=True)
        return (h - mu) * jax.lax.rsqrt(var + eps) * g + be

    y1 = ln(x + o, p["g1"], p["be1"])

    logits = lin(y1, p["gw"], p["gb"])
    scores = jax.nn.softmax(logits, axis=-1)                       # (B,T,E)
    top2_scores, top2_idx = jax.lax.top_k(scores, 2)
    w = jnp.zeros_like(scores)
    for r in range(2):
        w = w + jax.nn.one_hot(top2_idx[..., r], num_experts) * top2_scores[..., r:r + 1]
    ff = jnp.zeros_like(y1)
    for e in range(num_experts):
        h = jnp.maximum(jnp.dot(y1, p["ew1"][e], precision=hi) + p["eb1"][e], 0.0)
        he = jnp.dot(h, p["ew2"][e], precision=hi) + p["eb2"][e]
        ff = ff + w[..., e:e + 1] * he
    return ln(y1 + ff, p["g2"], p["be2"])


# ----------------------------- main -------------------------------------------

if __name__ == "__main__":
    B, T, D = 2, 8, 32
    NHEAD = 4
    FF = 64
    E = 4
    EPS = 1e-5

    key = jax.random.PRNGKey(0)
    ks = jax.random.split(key, 16)

    def init(k, shape, scale=0.05):
        return (scale * jax.random.normal(k, shape)).astype(jnp.float32)

    params = {
        # attention projections (pre-transposed [in, out]); biases shaped (1, D)
        "wq": init(ks[0], (D, D)), "bq": init(ks[1], (1, D)),
        "wk": init(ks[2], (D, D)), "bk": init(ks[3], (1, D)),
        "wv": init(ks[4], (D, D)), "bv": init(ks[5], (1, D)),
        "wo": init(ks[6], (D, D)), "bo": init(ks[7], (1, D)),
        # layer norms
        "g1": jnp.ones((1, D), jnp.float32), "be1": jnp.zeros((1, D), jnp.float32),
        "g2": jnp.ones((1, D), jnp.float32), "be2": jnp.zeros((1, D), jnp.float32),
        # MoE gate
        "gw": init(ks[8], (D, E)), "gb": init(ks[9], (1, E)),
        # experts stacked along leading axis
        "ew1": init(ks[10], (E, D, FF)), "eb1": init(ks[11], (E, 1, FF)),
        "ew2": init(ks[12], (E, FF, D)), "eb2": init(ks[13], (E, 1, D)),
    }

    x = jax.random.normal(ks[14], (B, T, D), dtype=jnp.float32)

    weights = prepare_weights(params)          # one-time concat + bf16 casts
    out = transformer_encoder_moe_layer(x, weights, nhead=NHEAD, num_experts=E, eps=EPS)
    out = jax.block_until_ready(out)

    ref = reference(x, params, nhead=NHEAD, num_experts=E, eps=EPS)
    # bf16 matmuls (f32 accumulate) + approx reciprocals vs f32 reference
    np.testing.assert_allclose(np.asarray(out), np.asarray(ref), atol=1e-2, rtol=1e-2)

    print("KERNEL_OK")
</pallas_src>

<mosaic_0001>
module attributes {stable_mosaic.version = 11 : i64} {
  func.func @fused_layer_kernel(%arg0: i32, %arg1: memref<8x32xf32, #tpu.memory_space<vmem>>, %arg2: memref<32x96xbf16, #tpu.memory_space<vmem>>, %arg3: memref<1x96xf32, #tpu.memory_space<vmem>>, %arg4: memref<32x32xbf16, #tpu.memory_space<vmem>>, %arg5: memref<1x32xf32, #tpu.memory_space<vmem>>, %arg6: memref<1x32xf32, #tpu.memory_space<vmem>>, %arg7: memref<1x32xf32, #tpu.memory_space<vmem>>, %arg8: memref<32x4xf32, #tpu.memory_space<vmem>>, %arg9: memref<1x4xf32, #tpu.memory_space<vmem>>, %arg10: memref<4x32x64xbf16, #tpu.memory_space<vmem>>, %arg11: memref<4x1x64xf32, #tpu.memory_space<vmem>>, %arg12: memref<4x64x32xbf16, #tpu.memory_space<vmem>>, %arg13: memref<4x1x32xf32, #tpu.memory_space<vmem>>, %arg14: memref<1x32xf32, #tpu.memory_space<vmem>>, %arg15: memref<1x32xf32, #tpu.memory_space<vmem>>, %arg16: memref<8x32xf32, #tpu.memory_space<vmem>>, %arg17: memref<8x32xf32, #tpu.memory_space<vmem>>) attributes {dimension_semantics = [#tpu.dimension_semantics<parallel>], iteration_bounds = array<i64: 2>, scalar_prefetch = 0 : i64, scratch_operands = 1 : i64, tpu.core_type = #tpu.core_type<tc>, window_params = [{transform_indices = @transform_0, window_bounds = array<i64: 8, 32>}, {pipeline_mode = #tpu.pipeline_mode<synchronous>, transform_indices = @transform_1, window_bounds = array<i64: 32, 96>}, {pipeline_mode = #tpu.pipeline_mode<synchronous>, transform_indices = @transform_2, window_bounds = array<i64: 1, 96>}, {pipeline_mode = #tpu.pipeline_mode<synchronous>, transform_indices = @transform_3, window_bounds = array<i64: 32, 32>}, {pipeline_mode = #tpu.pipeline_mode<synchronous>, transform_indices = @transform_4, window_bounds = array<i64: 1, 32>}, {pipeline_mode = #tpu.pipeline_mode<synchronous>, transform_indices = @transform_5, window_bounds = array<i64: 1, 32>}, {pipeline_mode = #tpu.pipeline_mode<synchronous>, transform_indices = @transform_6, window_bounds = array<i64: 1, 32>}, {pipeline_mode = #tpu.pipeline_mode<synchronous>, transform_indices = @transform_7, window_bounds = array<i64: 32, 4>}, {pipeline_mode = #tpu.pipeline_mode<synchronous>, transform_indices = @transform_8, window_bounds = array<i64: 1, 4>}, {pipeline_mode = #tpu.pipeline_mode<synchronous>, transform_indices = @transform_9, window_bounds = array<i64: 4, 32, 64>}, {pipeline_mode = #tpu.pipeline_mode<synchronous>, transform_indices = @transform_10, window_bounds = array<i64: 4, 1, 64>}, {pipeline_mode = #tpu.pipeline_mode<synchronous>, transform_indices = @transform_11, window_bounds = array<i64: 4, 64, 32>}, {pipeline_mode = #tpu.pipeline_mode<synchronous>, transform_indices = @transform_12, window_bounds = array<i64: 4, 1, 32>}, {pipeline_mode = #tpu.pipeline_mode<synchronous>, transform_indices = @transform_13, window_bounds = array<i64: 1, 32>}, {pipeline_mode = #tpu.pipeline_mode<synchronous>, transform_indices = @transform_14, window_bounds = array<i64: 1, 32>}, {transform_indices = @transform_15, window_bounds = array<i64: 8, 32>}]} {
    %c0 = arith.constant 0 : index
    %c0_0 = arith.constant 0 : index
    %0 = vector.load %arg1[%c0, %c0_0] : memref<8x32xf32, #tpu.memory_space<vmem>>, vector<8x32xf32>
    %1 = arith.truncf %0 : vector<8x32xf32> to vector<8x32xbf16>
    %c0_1 = arith.constant 0 : index
    %c0_2 = arith.constant 0 : index
    %2 = vector.load %arg2[%c0_1, %c0_2] : memref<32x96xbf16, #tpu.memory_space<vmem>>, vector<32x96xbf16>
    %cst = arith.constant dense<0.000000e+00> : vector<8x96xf32>
    %3 = tpu.matmul %1, %2, %cst {dimension_numbers = #tpu.dot_dimension_numbers<[1], [0], [0], [1], [0, 0, 1, 1], [], []>} : vector<8x32xbf16>, vector<32x96xbf16>, vector<8x96xf32> -> vector<8x96xf32>
    %c0_3 = arith.constant 0 : index
    %c0_4 = arith.constant 0 : index
    %4 = vector.load %arg3[%c0_3, %c0_4] : memref<1x96xf32, #tpu.memory_space<vmem>>, vector<1x96xf32>
    %5 = vector.broadcast %4 : vector<1x96xf32> to vector<8x96xf32>
    %6 = arith.addf %3, %5 : vector<8x96xf32>
    %7 = vector.shape_cast %6 : vector<8x96xf32> to vector<1x8x96xf32>
    %8 = vector.extract_strided_slice %7 {offsets = [0, 0, 0], sizes = [1, 8, 8], strides = [1, 1, 1]} : vector<1x8x96xf32> to vector<1x8x8xf32>
    %9 = vector.extract_strided_slice %7 {offsets = [0, 0, 32], sizes = [1, 8, 8], strides = [1, 1, 1]} : vector<1x8x96xf32> to vector<1x8x8xf32>
    %10 = vector.extract_strided_slice %7 {offsets = [0, 0, 64], sizes = [1, 8, 8], strides = [1, 1, 1]} : vector<1x8x96xf32> to vector<1x8x8xf32>
    %11 = vector.extract_strided_slice %7 {offsets = [0, 0, 8], sizes = [1, 8, 8], strides = [1, 1, 1]} : vector<1x8x96xf32> to vector<1x8x8xf32>
    %12 = vector.extract_strided_slice %7 {offsets = [0, 0, 40], sizes = [1, 8, 8], strides = [1, 1, 1]} : vector<1x8x96xf32> to vector<1x8x8xf32>
    %13 = vector.extract_strided_slice %7 {offsets = [0, 0, 72], sizes = [1, 8, 8], strides = [1, 1, 1]} : vector<1x8x96xf32> to vector<1x8x8xf32>
    %14 = vector.extract_strided_slice %7 {offsets = [0, 0, 16], sizes = [1, 8, 8], strides = [1, 1, 1]} : vector<1x8x96xf32> to vector<1x8x8xf32>
    %15 = vector.extract_strided_slice %7 {offsets = [0, 0, 48], sizes = [1, 8, 8], strides = [1, 1, 1]} : vector<1x8x96xf32> to vector<1x8x8xf32>
    %16 = vector.extract_strided_slice %7 {offsets = [0, 0, 80], sizes = [1, 8, 8], strides = [1, 1, 1]} : vector<1x8x96xf32> to vector<1x8x8xf32>
    %17 = vector.extract_strided_slice %7 {offsets = [0, 0, 24], sizes = [1, 8, 8], strides = [1, 1, 1]} : vector<1x8x96xf32> to vector<1x8x8xf32>
    %18 = vector.extract_strided_slice %7 {offsets = [0, 0, 56], sizes = [1, 8, 8], strides = [1, 1, 1]} : vector<1x8x96xf32> to vector<1x8x8xf32>
    %19 = vector.extract_strided_slice %7 {offsets = [0, 0, 88], sizes = [1, 8, 8], strides = [1, 1, 1]} : vector<1x8x96xf32> to vector<1x8x8xf32>
    %20 = tpu.concatenate %8, %11, %14, %17 in 0 : vector<1x8x8xf32>, vector<1x8x8xf32>, vector<1x8x8xf32>, vector<1x8x8xf32> -> vector<4x8x8xf32>
    %21 = arith.truncf %20 : vector<4x8x8xf32> to vector<4x8x8xbf16>
    %22 = tpu.concatenate %9, %12, %15, %18 in 0 : vector<1x8x8xf32>, vector<1x8x8xf32>, vector<1x8x8xf32>, vector<1x8x8xf32> -> vector<4x8x8xf32>
    %23 = arith.truncf %22 : vector<4x8x8xf32> to vector<4x8x8xbf16>
    %24 = tpu.concatenate %10, %13, %16, %19 in 0 : vector<1x8x8xf32>, vector<1x8x8xf32>, vector<1x8x8xf32>, vector<1x8x8xf32> -> vector<4x8x8xf32>
    %25 = arith.truncf %24 : vector<4x8x8xf32> to vector<4x8x8xbf16>
    "tpu.trace_start"() <{level = 10 : i32, message = "btd,bsd->bts"}> : () -> ()
    %cst_5 = arith.constant dense<0.000000e+00> : vector<4x8x8xf32>
    %26 = tpu.matmul %21, %23, %cst_5 {dimension_numbers = #tpu.dot_dimension_numbers<[2], [2], [1], [1], [0, 0, 0, 1, 1, 1], [0], [0]>} : vector<4x8x8xbf16>, vector<4x8x8xbf16>, vector<4x8x8xf32> -> vector<4x8x8xf32>
    "tpu.trace_stop"() : () -> ()
    %cst_6 = arith.constant 0.353553385 : f32
    %27 = vector.broadcast %cst_6 : f32 to vector<4x8x8xf32>
    %28 = arith.mulf %26, %27 : vector<4x8x8xf32>
    %cst_7 = arith.constant dense<0xFF800000> : vector<4x8xf32>
    %29 = vector.multi_reduction <maximumf>, %28, %cst_7 [2] : vector<4x8x8xf32> to vector<4x8xf32>
    %30 = vector.shape_cast %29 : vector<4x8xf32> to vector<4x8x1xf32>
    %31 = vector.broadcast %30 : vector<4x8x1xf32> to vector<4x8x8xf32>
    %32 = arith.subf %28, %31 : vector<4x8x8xf32>
    %33 = math.exp %32 : vector<4x8x8xf32>
    %cst_8 = arith.constant dense<0.000000e+00> : vector<4x8xf32>
    %34 = vector.multi_reduction <add>, %33, %cst_8 [2] : vector<4x8x8xf32> to vector<4x8xf32>
    %35 = vector.shape_cast %34 : vector<4x8xf32> to vector<4x8x1xf32>
    %36 = tpu.reciprocal %35 {approx = true} : vector<4x8x1xf32> -> vector<4x8x1xf32>
    %37 = vector.broadcast %36 : vector<4x8x1xf32> to vector<4x8x8xf32>
    %38 = arith.mulf %33, %37 : vector<4x8x8xf32>
    %39 = arith.truncf %38 : vector<4x8x8xf32> to vector<4x8x8xbf16>
    "tpu.trace_start"() <{level = 10 : i32, message = "bts,bsd->btd"}> : () -> ()
    %cst_9 = arith.constant dense<0.000000e+00> : vector<4x8x8xf32>
    %40 = tpu.matmul %39, %25, %cst_9 {dimension_numbers = #tpu.dot_dimension_numbers<[2], [1], [1], [2], [0, 0, 0, 1, 1, 2], [0], [0]>} : vector<4x8x8xbf16>, vector<4x8x8xbf16>, vector<4x8x8xf32> -> vector<4x8x8xf32>
    "tpu.trace_stop"() : () -> ()
    %41 = vector.extract_strided_slice %40 {offsets = [0, 0, 0], sizes = [1, 8, 8], strides = [1, 1, 1]} : vector<4x8x8xf32> to vector<1x8x8xf32>
    %42 = vector.extract_strided_slice %40 {offsets = [1, 0, 0], sizes = [1, 8, 8], strides = [1, 1, 1]} : vector<4x8x8xf32> to vector<1x8x8xf32>
    %43 = vector.extract_strided_slice %40 {offsets = [2, 0, 0], sizes = [1, 8, 8], strides = [1, 1, 1]} : vector<4x8x8xf32> to vector<1x8x8xf32>
    %44 = vector.extract_strided_slice %40 {offsets = [3, 0, 0], sizes = [1, 8, 8], strides = [1, 1, 1]} : vector<4x8x8xf32> to vector<1x8x8xf32>
    %45 = tpu.concatenate %41, %42, %43, %44 in 2 : vector<1x8x8xf32>, vector<1x8x8xf32>, vector<1x8x8xf32>, vector<1x8x8xf32> -> vector<1x8x32xf32>
    %46 = vector.shape_cast %45 : vector<1x8x32xf32> to vector<8x32xf32>
    %47 = arith.truncf %46 : vector<8x32xf32> to vector<8x32xbf16>
    %c0_10 = arith.constant 0 : index
    %c0_11 = arith.constant 0 : index
    %48 = vector.load %arg4[%c0_10, %c0_11] : memref<32x32xbf16, #tpu.memory_space<vmem>>, vector<32x32xbf16>
    %cst_12 = arith.constant dense<0.000000e+00> : vector<8x32xf32>
    %49 = tpu.matmul %47, %48, %cst_12 {dimension_numbers = #tpu.dot_dimension_numbers<[1], [0], [0], [1], [0, 0, 1, 1], [], []>} : vector<8x32xbf16>, vector<32x32xbf16>, vector<8x32xf32> -> vector<8x32xf32>
    %c0_13 = arith.constant 0 : index
    %c0_14 = arith.constant 0 : index
    %50 = vector.load %arg5[%c0_13, %c0_14] : memref<1x32xf32, #tpu.memory_space<vmem>>, vector<1x32xf32>
    %51 = vector.broadcast %50 : vector<1x32xf32> to vector<8x32xf32>
    %52 = arith.addf %49, %51 : vector<8x32xf32>
    %53 = arith.addf %0, %52 : vector<8x32xf32>
    %c0_15 = arith.constant 0 : index
    %c0_16 = arith.constant 0 : index
    %54 = vector.load %arg6[%c0_15, %c0_16] : memref<1x32xf32, #tpu.memory_space<vmem>>, vector<1x32xf32>
    %c0_17 = arith.constant 0 : index
    %c0_18 = arith.constant 0 : index
    %55 = vector.load %arg7[%c0_17, %c0_18] : memref<1x32xf32, #tpu.memory_space<vmem>>, vector<1x32xf32>
    %cst_19 = arith.constant dense<0.000000e+00> : vector<8xf32>
    %56 = vector.multi_reduction <add>, %53, %cst_19 [1] : vector<8x32xf32> to vector<8xf32>
    %57 = vector.shape_cast %56 : vector<8xf32> to vector<8x1xf32>
    %cst_20 = arith.constant 3.200000e+01 : f32
    %58 = vector.broadcast %cst_20 : f32 to vector<8x1xf32>
    %59 = arith.divf %57, %58 : vector<8x1xf32>
    %60 = vector.broadcast %59 : vector<8x1xf32> to vector<8x32xf32>
    %61 = arith.subf %53, %60 : vector<8x32xf32>
    %62 = arith.mulf %61, %61 : vector<8x32xf32>
    %cst_21 = arith.constant dense<0.000000e+00> : vector<8xf32>
    %63 = vector.multi_reduction <add>, %62, %cst_21 [1] : vector<8x32xf32> to vector<8xf32>
    %64 = vector.shape_cast %63 : vector<8xf32> to vector<8x1xf32>
    %cst_22 = arith.constant 3.200000e+01 : f32
    %65 = vector.broadcast %cst_22 : f32 to vector<8x1xf32>
    %66 = arith.divf %64, %65 : vector<8x1xf32>
    %67 = vector.broadcast %59 : vector<8x1xf32> to vector<8x32xf32>
    %68 = arith.subf %53, %67 : vector<8x32xf32>
    %cst_23 = arith.constant 9.99999974E-6 : f32
    %69 = vector.broadcast %cst_23 : f32 to vector<8x1xf32>
    %70 = arith.addf %66, %69 : vector<8x1xf32>
    %71 = math.rsqrt %70 : vector<8x1xf32>
    %72 = vector.broadcast %71 : vector<8x1xf32> to vector<8x32xf32>
    %73 = arith.mulf %68, %72 : vector<8x32xf32>
    %74 = vector.broadcast %54 : vector<1x32xf32> to vector<8x32xf32>
    %75 = arith.mulf %73, %74 : vector<8x32xf32>
    %76 = vector.broadcast %55 : vector<1x32xf32> to vector<8x32xf32>
    %77 = arith.addf %75, %76 : vector<8x32xf32>
    %78 = arith.truncf %77 : vector<8x32xf32> to vector<8x32xbf16>
    %c0_24 = arith.constant 0 : index
    %c0_25 = arith.constant 0 : index
    %79 = vector.load %arg8[%c0_24, %c0_25] : memref<32x4xf32, #tpu.memory_space<vmem>>, vector<32x4xf32>
    %cst_26 = arith.constant dense<0.000000e+00> : vector<8x4xf32>
    %80 = tpu.matmul %77, %79, %cst_26 {dimension_numbers = #tpu.dot_dimension_numbers<[1], [0], [0], [1], [0, 0, 1, 1], [], []>} : vector<8x32xf32>, vector<32x4xf32>, vector<8x4xf32> -> vector<8x4xf32>
    %c0_27 = arith.constant 0 : index
    %c0_28 = arith.constant 0 : index
    %81 = vector.load %arg9[%c0_27, %c0_28] : memref<1x4xf32, #tpu.memory_space<vmem>>, vector<1x4xf32>
    %82 = vector.broadcast %81 : vector<1x4xf32> to vector<8x4xf32>
    %83 = arith.addf %80, %82 : vector<8x4xf32>
    %cst_29 = arith.constant dense<0xFF800000> : vector<8xf32>
    %84 = vector.multi_reduction <maximumf>, %83, %cst_29 [1] : vector<8x4xf32> to vector<8xf32>
    %85 = vector.shape_cast %84 : vector<8xf32> to vector<8x1xf32>
    %86 = vector.broadcast %85 : vector<8x1xf32> to vector<8x4xf32>
    %87 = arith.subf %83, %86 : vector<8x4xf32>
    %88 = math.exp %87 : vector<8x4xf32>
    %cst_30 = arith.constant dense<0.000000e+00> : vector<8xf32>
    %89 = vector.multi_reduction <add>, %88, %cst_30 [1] : vector<8x4xf32> to vector<8xf32>
    %90 = vector.shape_cast %89 : vector<8xf32> to vector<8x1xf32>
    %91 = tpu.reciprocal %90 {approx = true} : vector<8x1xf32> -> vector<8x1xf32>
    %92 = vector.broadcast %91 : vector<8x1xf32> to vector<8x4xf32>
    %93 = arith.mulf %88, %92 : vector<8x4xf32>
    %94 = tpu.iota {dimensions = array<i32: 1>} : vector<8x4xi32>
    %cst_31 = arith.constant dense<0xFF800000> : vector<8xf32>
    %95 = vector.multi_reduction <maximumf>, %93, %cst_31 [1] : vector<8x4xf32> to vector<8xf32>
    %96 = vector.shape_cast %95 : vector<8xf32> to vector<8x1xf32>
    %97 = vector.broadcast %96 : vector<8x1xf32> to vector<8x4xf32>
    %98 = arith.cmpf oeq, %93, %97 : vector<8x4xf32>
    %c4_i32 = arith.constant 4 : i32
    %99 = vector.broadcast %c4_i32 : i32 to vector<8x4xi32>
    %100 = arith.select %98, %94, %99 : vector<8x4xi1>, vector<8x4xi32>
    %cst_32 = arith.constant dense<2147483647> : vector<8xi32>
    %101 = vector.multi_reduction <minsi>, %100, %cst_32 [1] : vector<8x4xi32> to vector<8xi32>
    %102 = vector.shape_cast %101 : vector<8xi32> to vector<8x1xi32>
    %103 = vector.broadcast %102 : vector<8x1xi32> to vector<8x4xi32>
    %104 = arith.cmpi eq, %94, %103 : vector<8x4xi32>
    %cst_33 = arith.constant 0xFF800000 : f32
    %105 = vector.broadcast %cst_33 : f32 to vector<8x4xf32>
    %106 = arith.select %104, %105, %93 : vector<8x4xi1>, vector<8x4xf32>
    %cst_34 = arith.constant dense<0xFF800000> : vector<8xf32>
    %107 = vector.multi_reduction <maximumf>, %106, %cst_34 [1] : vector<8x4xf32> to vector<8xf32>
    %108 = vector.shape_cast %107 : vector<8xf32> to vector<8x1xf32>
    %109 = vector.broadcast %108 : vector<8x1xf32> to vector<8x4xf32>
    %110 = arith.cmpf oeq, %106, %109 : vector<8x4xf32>
    %c4_i32_35 = arith.constant 4 : i32
    %111 = vector.broadcast %c4_i32_35 : i32 to vector<8x4xi32>
    %112 = arith.select %110, %94, %111 : vector<8x4xi1>, vector<8x4xi32>
    %cst_36 = arith.constant dense<2147483647> : vector<8xi32>
    %113 = vector.multi_reduction <minsi>, %112, %cst_36 [1] : vector<8x4xi32> to vector<8xi32>
    %114 = vector.shape_cast %113 : vector<8xi32> to vector<8x1xi32>
    %115 = vector.broadcast %102 : vector<8x1xi32> to vector<8x4xi32>
    %116 = arith.cmpi eq, %94, %115 : vector<8x4xi32>
    %cst_37 = arith.constant 0.000000e+00 : f32
    %117 = vector.shape_cast %96 : vector<8x1xf32> to vector<8x1xf32>
    %118 = vector.broadcast %117 : vector<8x1xf32> to vector<8x4xf32>
    %119 = vector.broadcast %cst_37 : f32 to vector<8x4xf32>
    %120 = arith.select %116, %118, %119 : vector<8x4xi1>, vector<8x4xf32>
    %121 = vector.broadcast %114 : vector<8x1xi32> to vector<8x4xi32>
    %122 = arith.cmpi eq, %94, %121 : vector<8x4xi32>
    %cst_38 = arith.constant 0.000000e+00 : f32
    %123 = vector.shape_cast %108 : vector<8x1xf32> to vector<8x1xf32>
    %124 = vector.broadcast %123 : vector<8x1xf32> to vector<8x4xf32>
    %125 = vector.broadcast %cst_38 : f32 to vector<8x4xf32>
    %126 = arith.select %122, %124, %125 : vector<8x4xi1>, vector<8x4xf32>
    %127 = arith.addf %120, %126 : vector<8x4xf32>
    %cst_39 = arith.constant 0.000000e+00 : f32
    %128 = vector.broadcast %cst_39 : f32 to vector<8x32xf32>
    %c0_40 = arith.constant 0 : index
    %c0_41 = arith.constant 0 : index
    %129 = vector.load %arg17[%c0_40, %c0_41] : memref<8x32xf32, #tpu.memory_space<vmem>>, vector<8x32xf32>
    tpu.vector_store %arg17[%c0_40, %c0_41], %128 {strides = array<i32>} : memref<8x32xf32, #tpu.memory_space<vmem>>, vector<8x32xf32>,
    %130 = vector.extract_strided_slice %127 {offsets = [0, 0], sizes = [8, 1], strides = [1, 1]} : vector<8x4xf32> to vector<8x1xf32>
    %131 = vector.shape_cast %130 : vector<8x1xf32> to vector<1x8x1xf32>
    %cst_42 = arith.constant dense<0xFF800000> : vector<1xf32>
    %132 = vector.multi_reduction <maximumf>, %131, %cst_42 [1, 2] : vector<1x8x1xf32> to vector<1xf32>
    %133 = vector.shape_cast %132 : vector<1xf32> to vector<1x1x1xf32>
    %134 = vector.extract %133[0, 0, 0] : f32 from vector<1x1x1xf32>
    %cst_43 = arith.constant 0.000000e+00 : f32
    %135 = arith.cmpf ogt, %134, %cst_43 : f32
    %136 = arith.extui %135 : i1 to i32
    %c0_i32 = arith.constant 0 : i32
    %137 = arith.cmpi ne, %136, %c0_i32 : i32
    scf.if %137 {
      %c0_66 = arith.constant 0 : index
      %c0_67 = arith.constant 0 : index
      %c0_68 = arith.constant 0 : index
      %189 = vector.load %arg10[%c0_66, %c0_67, %c0_68] : memref<4x32x64xbf16, #tpu.memory_space<vmem>>, vector<1x32x64xbf16>
      %190 = vector.shape_cast %189 : vector<1x32x64xbf16> to vector<32x64xbf16>
      %cst_69 = arith.constant dense<0.000000e+00> : vector<8x64xf32>
      %191 = tpu.matmul %78, %190, %cst_69 {dimension_numbers = #tpu.dot_dimension_numbers<[1], [0], [0], [1], [0, 0, 1, 1], [], []>} : vector<8x32xbf16>, vector<32x64xbf16>, vector<8x64xf32> -> vector<8x64xf32>
      %c0_70 = arith.constant 0 : index
      %c0_71 = arith.constant 0 : index
      %c0_72 = arith.constant 0 : index
      %192 = vector.load %arg11[%c0_70, %c0_71, %c0_72] : memref<4x1x64xf32, #tpu.memory_space<vmem>>, vector<1x1x64xf32>
      %193 = vector.shape_cast %192 : vector<1x1x64xf32> to vector<1x64xf32>
      %194 = vector.broadcast %193 : vector<1x64xf32> to vector<8x64xf32>
      %195 = arith.addf %191, %194 : vector<8x64xf32>
      %cst_73 = arith.constant 0.000000e+00 : f32
      %196 = vector.broadcast %cst_73 : f32 to vector<8x64xf32>
      %197 = arith.maximumf %195, %196 : vector<8x64xf32>
      %198 = arith.truncf %197 : vector<8x64xf32> to vector<8x64xbf16>
      %c0_74 = arith.constant 0 : index
      %c0_75 = arith.constant 0 : index
      %c0_76 = arith.constant 0 : index
      %199 = vector.load %arg12[%c0_74, %c0_75, %c0_76] : memref<4x64x32xbf16, #tpu.memory_space<vmem>>, vector<1x64x32xbf16>
      %200 = vector.shape_cast %199 : vector<1x64x32xbf16> to vector<64x32xbf16>
      %cst_77 = arith.constant dense<0.000000e+00> : vector<8x32xf32>
      %201 = tpu.matmul %198, %200, %cst_77 {dimension_numbers = #tpu.dot_dimension_numbers<[1], [0], [0], [1], [0, 0, 1, 1], [], []>} : vector<8x64xbf16>, vector<64x32xbf16>, vector<8x32xf32> -> vector<8x32xf32>
      %c0_78 = arith.constant 0 : index
      %c0_79 = arith.constant 0 : index
      %c0_80 = arith.constant 0 : index
      %202 = vector.load %arg13[%c0_78, %c0_79, %c0_80] : memref<4x1x32xf32, #tpu.memory_space<vmem>>, vector<1x1x32xf32>
      %203 = vector.shape_cast %202 : vector<1x1x32xf32> to vector<1x32xf32>
      %204 = vector.broadcast %203 : vector<1x32xf32> to vector<8x32xf32>
      %205 = arith.addf %201, %204 : vector<8x32xf32>
      %c0_81 = arith.constant 0 : index
      %c0_82 = arith.constant 0 : index
      %206 = vector.load %arg17[%c0_81, %c0_82] : memref<8x32xf32, #tpu.memory_space<vmem>>, vector<8x32xf32>
      %207 = vector.broadcast %130 : vector<8x1xf32> to vector<8x32xf32>
      %208 = arith.mulf %207, %205 : vector<8x32xf32>
      %209 = arith.addf %206, %208 : vector<8x32xf32>
      %c0_83 = arith.constant 0 : index
      %c0_84 = arith.constant 0 : index
      %210 = vector.load %arg17[%c0_83, %c0_84] : memref<8x32xf32, #tpu.memory_space<vmem>>, vector<8x32xf32>
      tpu.vector_store %arg17[%c0_83, %c0_84], %209 {strides = array<i32>} : memref<8x32xf32, #tpu.memory_space<vmem>>, vector<8x32xf32>,
    } else {
    }
    %138 = vector.extract_strided_slice %127 {offsets = [0, 1], sizes = [8, 1], strides = [1, 1]} : vector<8x4xf32> to vector<8x1xf32>
    %139 = vector.shape_cast %138 : vector<8x1xf32> to vector<1x8x1xf32>
    %cst_44 = arith.constant dense<0xFF800000> : vector<1xf32>
    %140 = vector.multi_reduction <maximumf>, %139, %cst_44 [1, 2] : vector<1x8x1xf32> to vector<1xf32>
    %141 = vector.shape_cast %140 : vector<1xf32> to vector<1x1x1xf32>
    %142 = vector.extract %141[0, 0, 0] : f32 from vector<1x1x1xf32>
    %cst_45 = arith.constant 0.000000e+00 : f32
    %143 = arith.cmpf ogt, %142, %cst_45 : f32
    %144 = arith.extui %143 : i1 to i32
    %c0_i32_46 = arith.constant 0 : i32
    %145 = arith.cmpi ne, %144, %c0_i32_46 : i32
    scf.if %145 {
      %c1 = arith.constant 1 : index
      %c0_66 = arith.constant 0 : index
      %c0_67 = arith.constant 0 : index
      %189 = vector.load %arg10[%c1, %c0_66, %c0_67] : memref<4x32x64xbf16, #tpu.memory_space<vmem>>, vector<1x32x64xbf16>
      %190 = vector.shape_cast %189 : vector<1x32x64xbf16> to vector<32x64xbf16>
      %cst_68 = arith.constant dense<0.000000e+00> : vector<8x64xf32>
      %191 = tpu.matmul %78, %190, %cst_68 {dimension_numbers = #tpu.dot_dimension_numbers<[1], [0], [0], [1], [0, 0, 1, 1], [], []>} : vector<8x32xbf16>, vector<32x64xbf16>, vector<8x64xf32> -> vector<8x64xf32>
      %c1_69 = arith.constant 1 : index
      %c0_70 = arith.constant 0 : index
      %c0_71 = arith.constant 0 : index
      %192 = vector.load %arg11[%c1_69, %c0_70, %c0_71] : memref<4x1x64xf32, #tpu.memory_space<vmem>>, vector<1x1x64xf32>
      %193 = vector.shape_cast %192 : vector<1x1x64xf32> to vector<1x64xf32>
      %194 = vector.broadcast %193 : vector<1x64xf32> to vector<8x64xf32>
      %195 = arith.addf %191, %194 : vector<8x64xf32>
      %cst_72 = arith.constant 0.000000e+00 : f32
      %196 = vector.broadcast %cst_72 : f32 to vector<8x64xf32>
      %197 = arith.maximumf %195, %196 : vector<8x64xf32>
      %198 = arith.truncf %197 : vector<8x64xf32> to vector<8x64xbf16>
      %c1_73 = arith.constant 1 : index
      %c0_74 = arith.constant 0 : index
      %c0_75 = arith.constant 0 : index
      %199 = vector.load %arg12[%c1_73, %c0_74, %c0_75] : memref<4x64x32xbf16, #tpu.memory_space<vmem>>, vector<1x64x32xbf16>
      %200 = vector.shape_cast %199 : vector<1x64x32xbf16> to vector<64x32xbf16>
      %cst_76 = arith.constant dense<0.000000e+00> : vector<8x32xf32>
      %201 = tpu.matmul %198, %200, %cst_76 {dimension_numbers = #tpu.dot_dimension_numbers<[1], [0], [0], [1], [0, 0, 1, 1], [], []>} : vector<8x64xbf16>, vector<64x32xbf16>, vector<8x32xf32> -> vector<8x32xf32>
      %c1_77 = arith.constant 1 : index
      %c0_78 = arith.constant 0 : index
      %c0_79 = arith.constant 0 : index
      %202 = vector.load %arg13[%c1_77, %c0_78, %c0_79] : memref<4x1x32xf32, #tpu.memory_space<vmem>>, vector<1x1x32xf32>
      %203 = vector.shape_cast %202 : vector<1x1x32xf32> to vector<1x32xf32>
      %204 = vector.broadcast %203 : vector<1x32xf32> to vector<8x32xf32>
      %205 = arith.addf %201, %204 : vector<8x32xf32>
      %c0_80 = arith.constant 0 : index
      %c0_81 = arith.constant 0 : index
      %206 = vector.load %arg17[%c0_80, %c0_81] : memref<8x32xf32, #tpu.memory_space<vmem>>, vector<8x32xf32>
      %207 = vector.broadcast %138 : vector<8x1xf32> to vector<8x32xf32>
      %208 = arith.mulf %207, %205 : vector<8x32xf32>
      %209 = arith.addf %206, %208 : vector<8x32xf32>
      %c0_82 = arith.constant 0 : index
      %c0_83 = arith.constant 0 : index
      %210 = vector.load %arg17[%c0_82, %c0_83] : memref<8x32xf32, #tpu.memory_space<vmem>>, vector<8x32xf32>
      tpu.vector_store %arg17[%c0_82, %c0_83], %209 {strides = array<i32>} : memref<8x32xf32, #tpu.memory_space<vmem>>, vector<8x32xf32>,
    } else {
    }
    %146 = vector.extract_strided_slice %127 {offsets = [0, 2], sizes = [8, 1], strides = [1, 1]} : vector<8x4xf32> to vector<8x1xf32>
    %147 = vector.shape_cast %146 : vector<8x1xf32> to vector<1x8x1xf32>
    %cst_47 = arith.constant dense<0xFF800000> : vector<1xf32>
    %148 = vector.multi_reduction <maximumf>, %147, %cst_47 [1, 2] : vector<1x8x1xf32> to vector<1xf32>
    %149 = vector.shape_cast %148 : vector<1xf32> to vector<1x1x1xf32>
    %150 = vector.extract %149[0, 0, 0] : f32 from vector<1x1x1xf32>
    %cst_48 = arith.constant 0.000000e+00 : f32
    %151 = arith.cmpf ogt, %150, %cst_48 : f32
    %152 = arith.extui %151 : i1 to i32
    %c0_i32_49 = arith.constant 0 : i32
    %153 = arith.cmpi ne, %152, %c0_i32_49 : i32
    scf.if %153 {
      %c2 = arith.constant 2 : index
      %c0_66 = arith.constant 0 : index
      %c0_67 = arith.constant 0 : index
      %189 = vector.load %arg10[%c2, %c0_66, %c0_67] : memref<4x32x64xbf16, #tpu.memory_space<vmem>>, vector<1x32x64xbf16>
      %190 = vector.shape_cast %189 : vector<1x32x64xbf16> to vector<32x64xbf16>
      %cst_68 = arith.constant dense<0.000000e+00> : vector<8x64xf32>
      %191 = tpu.matmul %78, %190, %cst_68 {dimension_numbers = #tpu.dot_dimension_numbers<[1], [0], [0], [1], [0, 0, 1, 1], [], []>} : vector<8x32xbf16>, vector<32x64xbf16>, vector<8x64xf32> -> vector<8x64xf32>
      %c2_69 = arith.constant 2 : index
      %c0_70 = arith.constant 0 : index
      %c0_71 = arith.constant 0 : index
      %192 = vector.load %arg11[%c2_69, %c0_70, %c0_71] : memref<4x1x64xf32, #tpu.memory_space<vmem>>, vector<1x1x64xf32>
      %193 = vector.shape_cast %192 : vector<1x1x64xf32> to vector<1x64xf32>
      %194 = vector.broadcast %193 : vector<1x64xf32> to vector<8x64xf32>
      %195 = arith.addf %191, %194 : vector<8x64xf32>
      %cst_72 = arith.constant 0.000000e+00 : f32
      %196 = vector.broadcast %cst_72 : f32 to vector<8x64xf32>
      %197 = arith.maximumf %195, %196 : vector<8x64xf32>
      %198 = arith.truncf %197 : vector<8x64xf32> to vector<8x64xbf16>
      %c2_73 = arith.constant 2 : index
      %c0_74 = arith.constant 0 : index
      %c0_75 = arith.constant 0 : index
      %199 = vector.load %arg12[%c2_73, %c0_74, %c0_75] : memref<4x64x32xbf16, #tpu.memory_space<vmem>>, vector<1x64x32xbf16>
      %200 = vector.shape_cast %199 : vector<1x64x32xbf16> to vector<64x32xbf16>
      %cst_76 = arith.constant dense<0.000000e+00> : vector<8x32xf32>
      %201 = tpu.matmul %198, %200, %cst_76 {dimension_numbers = #tpu.dot_dimension_numbers<[1], [0], [0], [1], [0, 0, 1, 1], [], []>} : vector<8x64xbf16>, vector<64x32xbf16>, vector<8x32xf32> -> vector<8x32xf32>
      %c2_77 = arith.constant 2 : index
      %c0_78 = arith.constant 0 : index
      %c0_79 = arith.constant 0 : index
      %202 = vector.load %arg13[%c2_77, %c0_78, %c0_79] : memref<4x1x32xf32, #tpu.memory_space<vmem>>, vector<1x1x32xf32>
      %203 = vector.shape_cast %202 : vector<1x1x32xf32> to vector<1x32xf32>
      %204 = vector.broadcast %203 : vector<1x32xf32> to vector<8x32xf32>
      %205 = arith.addf %201, %204 : vector<8x32xf32>
      %c0_80 = arith.constant 0 : index
      %c0_81 = arith.constant 0 : index
      %206 = vector.load %arg17[%c0_80, %c0_81] : memref<8x32xf32, #tpu.memory_space<vmem>>, vector<8x32xf32>
      %207 = vector.broadcast %146 : vector<8x1xf32> to vector<8x32xf32>
      %208 = arith.mulf %207, %205 : vector<8x32xf32>
      %209 = arith.addf %206, %208 : vector<8x32xf32>
      %c0_82 = arith.constant 0 : index
      %c0_83 = arith.constant 0 : index
      %210 = vector.load %arg17[%c0_82, %c0_83] : memref<8x32xf32, #tpu.memory_space<vmem>>, vector<8x32xf32>
      tpu.vector_store %arg17[%c0_82, %c0_83], %209 {strides = array<i32>} : memref<8x32xf32, #tpu.memory_space<vmem>>, vector<8x32xf32>,
    } else {
    }
    %154 = vector.extract_strided_slice %127 {offsets = [0, 3], sizes = [8, 1], strides = [1, 1]} : vector<8x4xf32> to vector<8x1xf32>
    %155 = vector.shape_cast %154 : vector<8x1xf32> to vector<1x8x1xf32>
    %cst_50 = arith.constant dense<0xFF800000> : vector<1xf32>
    %156 = vector.multi_reduction <maximumf>, %155, %cst_50 [1, 2] : vector<1x8x1xf32> to vector<1xf32>
    %157 = vector.shape_cast %156 : vector<1xf32> to vector<1x1x1xf32>
    %158 = vector.extract %157[0, 0, 0] : f32 from vector<1x1x1xf32>
    %cst_51 = arith.constant 0.000000e+00 : f32
    %159 = arith.cmpf ogt, %158, %cst_51 : f32
    %160 = arith.extui %159 : i1 to i32
    %c0_i32_52 = arith.constant 0 : i32
    %161 = arith.cmpi ne, %160, %c0_i32_52 : i32
    scf.if %161 {
      %c3 = arith.constant 3 : index
      %c0_66 = arith.constant 0 : index
      %c0_67 = arith.constant 0 : index
      %189 = vector.load %arg10[%c3, %c0_66, %c0_67] : memref<4x32x64xbf16, #tpu.memory_space<vmem>>, vector<1x32x64xbf16>
      %190 = vector.shape_cast %189 : vector<1x32x64xbf16> to vector<32x64xbf16>
      %cst_68 = arith.constant dense<0.000000e+00> : vector<8x64xf32>
      %191 = tpu.matmul %78, %190, %cst_68 {dimension_numbers = #tpu.dot_dimension_numbers<[1], [0], [0], [1], [0, 0, 1, 1], [], []>} : vector<8x32xbf16>, vector<32x64xbf16>, vector<8x64xf32> -> vector<8x64xf32>
      %c3_69 = arith.constant 3 : index
      %c0_70 = arith.constant 0 : index
      %c0_71 = arith.constant 0 : index
      %192 = vector.load %arg11[%c3_69, %c0_70, %c0_71] : memref<4x1x64xf32, #tpu.memory_space<vmem>>, vector<1x1x64xf32>
      %193 = vector.shape_cast %192 : vector<1x1x64xf32> to vector<1x64xf32>
      %194 = vector.broadcast %193 : vector<1x64xf32> to vector<8x64xf32>
      %195 = arith.addf %191, %194 : vector<8x64xf32>
      %cst_72 = arith.constant 0.000000e+00 : f32
      %196 = vector.broadcast %cst_72 : f32 to vector<8x64xf32>
      %197 = arith.maximumf %195, %196 : vector<8x64xf32>
      %198 = arith.truncf %197 : vector<8x64xf32> to vector<8x64xbf16>
      %c3_73 = arith.constant 3 : index
      %c0_74 = arith.constant 0 : index
      %c0_75 = arith.constant 0 : index
      %199 = vector.load %arg12[%c3_73, %c0_74, %c0_75] : memref<4x64x32xbf16, #tpu.memory_space<vmem>>, vector<1x64x32xbf16>
      %200 = vector.shape_cast %199 : vector<1x64x32xbf16> to vector<64x32xbf16>
      %cst_76 = arith.constant dense<0.000000e+00> : vector<8x32xf32>
      %201 = tpu.matmul %198, %200, %cst_76 {dimension_numbers = #tpu.dot_dimension_numbers<[1], [0], [0], [1], [0, 0, 1, 1], [], []>} : vector<8x64xbf16>, vector<64x32xbf16>, vector<8x32xf32> -> vector<8x32xf32>
      %c3_77 = arith.constant 3 : index
      %c0_78 = arith.constant 0 : index
      %c0_79 = arith.constant 0 : index
      %202 = vector.load %arg13[%c3_77, %c0_78, %c0_79] : memref<4x1x32xf32, #tpu.memory_space<vmem>>, vector<1x1x32xf32>
      %203 = vector.shape_cast %202 : vector<1x1x32xf32> to vector<1x32xf32>
      %204 = vector.broadcast %203 : vector<1x32xf32> to vector<8x32xf32>
      %205 = arith.addf %201, %204 : vector<8x32xf32>
      %c0_80 = arith.constant 0 : index
      %c0_81 = arith.constant 0 : index
      %206 = vector.load %arg17[%c0_80, %c0_81] : memref<8x32xf32, #tpu.memory_space<vmem>>, vector<8x32xf32>
      %207 = vector.broadcast %154 : vector<8x1xf32> to vector<8x32xf32>
      %208 = arith.mulf %207, %205 : vector<8x32xf32>
      %209 = arith.addf %206, %208 : vector<8x32xf32>
      %c0_82 = arith.constant 0 : index
      %c0_83 = arith.constant 0 : index
      %210 = vector.load %arg17[%c0_82, %c0_83] : memref<8x32xf32, #tpu.memory_space<vmem>>, vector<8x32xf32>
      tpu.vector_store %arg17[%c0_82, %c0_83], %209 {strides = array<i32>} : memref<8x32xf32, #tpu.memory_space<vmem>>, vector<8x32xf32>,
    } else {
    }
    %c0_53 = arith.constant 0 : index
    %c0_54 = arith.constant 0 : index
    %162 = vector.load %arg17[%c0_53, %c0_54] : memref<8x32xf32, #tpu.memory_space<vmem>>, vector<8x32xf32>
    %163 = arith.addf %77, %162 : vector<8x32xf32>
    %c0_55 = arith.constant 0 : index
    %c0_56 = arith.constant 0 : index
    %164 = vector.load %arg14[%c0_55, %c0_56] : memref<1x32xf32, #tpu.memory_space<vmem>>, vector<1x32xf32>
    %c0_57 = arith.constant 0 : index
    %c0_58 = arith.constant 0 : index
    %165 = vector.load %arg15[%c0_57, %c0_58] : memref<1x32xf32, #tpu.memory_space<vmem>>, vector<1x32xf32>
    %cst_59 = arith.constant dense<0.000000e+00> : vector<8xf32>
    %166 = vector.multi_reduction <add>, %163, %cst_59 [1] : vector<8x32xf32> to vector<8xf32>
    %167 = vector.shape_cast %166 : vector<8xf32> to vector<8x1xf32>
    %cst_60 = arith.constant 3.200000e+01 : f32
    %168 = vector.broadcast %cst_60 : f32 to vector<8x1xf32>
    %169 = arith.divf %167, %168 : vector<8x1xf32>
    %170 = vector.broadcast %169 : vector<8x1xf32> to vector<8x32xf32>
    %171 = arith.subf %163, %170 : vector<8x32xf32>
    %172 = arith.mulf %171, %171 : vector<8x32xf32>
    %cst_61 = arith.constant dense<0.000000e+00> : vector<8xf32>
    %173 = vector.multi_reduction <add>, %172, %cst_61 [1] : vector<8x32xf32> to vector<8xf32>
    %174 = vector.shape_cast %173 : vector<8xf32> to vector<8x1xf32>
    %cst_62 = arith.constant 3.200000e+01 : f32
    %175 = vector.broadcast %cst_62 : f32 to vector<8x1xf32>
    %176 = arith.divf %174, %175 : vector<8x1xf32>
    %177 = vector.broadcast %169 : vector<8x1xf32> to vector<8x32xf32>
    %178 = arith.subf %163, %177 : vector<8x32xf32>
    %cst_63 = arith.constant 9.99999974E-6 : f32
    %179 = vector.broadcast %cst_63 : f32 to vector<8x1xf32>
    %180 = arith.addf %176, %179 : vector<8x1xf32>
    %181 = math.rsqrt %180 : vector<8x1xf32>
    %182 = vector.broadcast %181 : vector<8x1xf32> to vector<8x32xf32>
    %183 = arith.mulf %178, %182 : vector<8x32xf32>
    %184 = vector.broadcast %164 : vector<1x32xf32> to vector<8x32xf32>
    %185 = arith.mulf %183, %184 : vector<8x32xf32>
    %186 = vector.broadcast %165 : vector<1x32xf32> to vector<8x32xf32>
    %187 = arith.addf %185, %186 : vector<8x32xf32>
    %c0_64 = arith.constant 0 : index
    %c0_65 = arith.constant 0 : index
    %188 = vector.load %arg16[%c0_64, %c0_65] : memref<8x32xf32, #tpu.memory_space<vmem>>, vector<8x32xf32>
    tpu.vector_store %arg16[%c0_64, %c0_65], %187 {strides = array<i32>} : memref<8x32xf32, #tpu.memory_space<vmem>>, vector<8x32xf32>,
    return
  }
  func.func @transform_0(%arg0: i32) -> (i32, i32) {
    %c0_i32 = arith.constant 0 : i32
    %c0_i32_0 = arith.constant 0 : i32
    return %arg0, %c0_i32 : i32, i32
  }
  func.func @transform_1(%arg0: i32) -> (i32, i32) {
    %c0_i32 = arith.constant 0 : i32
    %c0_i32_0 = arith.constant 0 : i32
    %c0_i32_1 = arith.constant 0 : i32
    return %c0_i32, %c0_i32_0 : i32, i32
  }
  func.func @transform_2(%arg0: i32) -> (i32, i32) {
    %c0_i32 = arith.constant 0 : i32
    %c0_i32_0 = arith.constant 0 : i32
    %c0_i32_1 = arith.constant 0 : i32
    return %c0_i32, %c0_i32_0 : i32, i32
  }
  func.func @transform_3(%arg0: i32) -> (i32, i32) {
    %c0_i32 = arith.constant 0 : i32
    %c0_i32_0 = arith.constant 0 : i32
    %c0_i32_1 = arith.constant 0 : i32
    return %c0_i32, %c0_i32_0 : i32, i32
  }
  func.func @transform_4(%arg0: i32) -> (i32, i32) {
    %c0_i32 = arith.constant 0 : i32
    %c0_i32_0 = arith.constant 0 : i32
    %c0_i32_1 = arith.constant 0 : i32
    return %c0_i32, %c0_i32_0 : i32, i32
  }
  func.func @transform_5(%arg0: i32) -> (i32, i32) {
    %c0_i32 = arith.constant 0 : i32
    %c0_i32_0 = arith.constant 0 : i32
    %c0_i32_1 = arith.constant 0 : i32
    return %c0_i32, %c0_i32_0 : i32, i32
  }
  func.func @transform_6(%arg0: i32) -> (i32, i32) {
    %c0_i32 = arith.constant 0 : i32
    %c0_i32_0 = arith.constant 0 : i32
    %c0_i32_1 = arith.constant 0 : i32
    return %c0_i32, %c0_i32_0 : i32, i32
  }
  func.func @transform_7(%arg0: i32) -> (i32, i32) {
    %c0_i32 = arith.constant 0 : i32
    %c0_i32_0 = arith.constant 0 : i32
    %c0_i32_1 = arith.constant 0 : i32
    return %c0_i32, %c0_i32_0 : i32, i32
  }
  func.func @transform_8(%arg0: i32) -> (i32, i32) {
    %c0_i32 = arith.constant 0 : i32
    %c0_i32_0 = arith.constant 0 : i32
    %c0_i32_1 = arith.constant 0 : i32
    return %c0_i32, %c0_i32_0 : i32, i32
  }
  func.func @transform_9(%arg0: i32) -> (i32, i32, i32) {
    %c0_i32 = arith.constant 0 : i32
    %c0_i32_0 = arith.constant 0 : i32
    %c0_i32_1 = arith.constant 0 : i32
    %c0_i32_2 = arith.constant 0 : i32
    return %c0_i32, %c0_i32_0, %c0_i32_1 : i32, i32, i32
  }
  func.func @transform_10(%arg0: i32) -> (i32, i32, i32) {
    %c0_i32 = arith.constant 0 : i32
    %c0_i32_0 = arith.constant 0 : i32
    %c0_i32_1 = arith.constant 0 : i32
    %c0_i32_2 = arith.constant 0 : i32
    return %c0_i32, %c0_i32_0, %c0_i32_1 : i32, i32, i32
  }
  func.func @transform_11(%arg0: i32) -> (i32, i32, i32) {
    %c0_i32 = arith.constant 0 : i32
    %c0_i32_0 = arith.constant 0 : i32
    %c0_i32_1 = arith.constant 0 : i32
    %c0_i32_2 = arith.constant 0 : i32
    return %c0_i32, %c0_i32_0, %c0_i32_1 : i32, i32, i32
  }
  func.func @transform_12(%arg0: i32) -> (i32, i32, i32) {
    %c0_i32 = arith.constant 0 : i32
    %c0_i32_0 = arith.constant 0 : i32
    %c0_i32_1 = arith.constant 0 : i32
    %c0_i32_2 = arith.constant 0 : i32
    return %c0_i32, %c0_i32_0, %c0_i32_1 : i32, i32, i32
  }
  func.func @transform_13(%arg0: i32) -> (i32, i32) {
    %c0_i32 = arith.constant 0 : i32
    %c0_i32_0 = arith.constant 0 : i32
    %c0_i32_1 = arith.constant 0 : i32
    return %c0_i32, %c0_i32_0 : i32, i32
  }
  func.func @transform_14(%arg0: i32) -> (i32, i32) {
    %c0_i32 = arith.constant 0 : i32
    %c0_i32_0 = arith.constant 0 : i32
    %c0_i32_1 = arith.constant 0 : i32
    return %c0_i32, %c0_i32_0 : i32, i32
  }
  func.func @transform_15(%arg0: i32) -> (i32, i32) {
    %c0_i32 = arith.constant 0 : i32
    %c0_i32_0 = arith.constant 0 : i32
    return %arg0, %c0_i32 : i32, i32
  }
}

module attributes {stable_mosaic.version = 11 : i64} {
  func.func @fused_layer_kernel(%arg0: i32, %arg1: memref<8x32xf32, #tpu.memory_space<vmem>>, %arg2: memref<32x96xbf16, #tpu.memory_space<vmem>>, %arg3: memref<1x96xf32, #tpu.memory_space<vmem>>, %arg4: memref<32x32xbf16, #tpu.memory_space<vmem>>, %arg5: memref<1x32xf32, #tpu.memory_space<vmem>>, %arg6: memref<1x32xf32, #tpu.memory_space<vmem>>, %arg7: memref<1x32xf32, #tpu.memory_space<vmem>>, %arg8: memref<32x4xf32, #tpu.memory_space<vmem>>, %arg9: memref<1x4xf32, #tpu.memory_space<vmem>>, %arg10: memref<4x32x64xbf16, #tpu.memory_space<vmem>>, %arg11: memref<4x1x64xf32, #tpu.memory_space<vmem>>, %arg12: memref<4x64x32xbf16, #tpu.memory_space<vmem>>, %arg13: memref<4x1x32xf32, #tpu.memory_space<vmem>>, %arg14: memref<1x32xf32, #tpu.memory_space<vmem>>, %arg15: memref<1x32xf32, #tpu.memory_space<vmem>>, %arg16: memref<8x32xf32, #tpu.memory_space<vmem>>, %arg17: memref<8x32xf32, #tpu.memory_space<vmem>>) attributes {dimension_semantics = [#tpu.dimension_semantics<parallel>], iteration_bounds = array<i64: 2>, scalar_prefetch = 0 : i64, scratch_operands = 1 : i64, tpu.core_type = #tpu.core_type<tc>, window_params = [{transform_indices = @transform_0, window_bounds = array<i64: 8, 32>}, {pipeline_mode = #tpu.pipeline_mode<synchronous>, transform_indices = @transform_1, window_bounds = array<i64: 32, 96>}, {pipeline_mode = #tpu.pipeline_mode<synchronous>, transform_indices = @transform_2, window_bounds = array<i64: 1, 96>}, {pipeline_mode = #tpu.pipeline_mode<synchronous>, transform_indices = @transform_3, window_bounds = array<i64: 32, 32>}, {pipeline_mode = #tpu.pipeline_mode<synchronous>, transform_indices = @transform_4, window_bounds = array<i64: 1, 32>}, {pipeline_mode = #tpu.pipeline_mode<synchronous>, transform_indices = @transform_5, window_bounds = array<i64: 1, 32>}, {pipeline_mode = #tpu.pipeline_mode<synchronous>, transform_indices = @transform_6, window_bounds = array<i64: 1, 32>}, {pipeline_mode = #tpu.pipeline_mode<synchronous>, transform_indices = @transform_7, window_bounds = array<i64: 32, 4>}, {pipeline_mode = #tpu.pipeline_mode<synchronous>, transform_indices = @transform_8, window_bounds = array<i64: 1, 4>}, {pipeline_mode = #tpu.pipeline_mode<synchronous>, transform_indices = @transform_9, window_bounds = array<i64: 4, 32, 64>}, {pipeline_mode = #tpu.pipeline_mode<synchronous>, transform_indices = @transform_10, window_bounds = array<i64: 4, 1, 64>}, {pipeline_mode = #tpu.pipeline_mode<synchronous>, transform_indices = @transform_11, window_bounds = array<i64: 4, 64, 32>}, {pipeline_mode = #tpu.pipeline_mode<synchronous>, transform_indices = @transform_12, window_bounds = array<i64: 4, 1, 32>}, {pipeline_mode = #tpu.pipeline_mode<synchronous>, transform_indices = @transform_13, window_bounds = array<i64: 1, 32>}, {pipeline_mode = #tpu.pipeline_mode<synchronous>, transform_indices = @transform_14, window_bounds = array<i64: 1, 32>}, {transform_indices = @transform_15, window_bounds = array<i64: 8, 32>}]} {
    %c0 = arith.constant 0 : index
    %c0_0 = arith.constant 0 : index
    %0 = vector.load %arg1[%c0, %c0_0] : memref<8x32xf32, #tpu.memory_space<vmem>>, vector<8x32xf32>
    %1 = arith.truncf %0 : vector<8x32xf32> to vector<8x32xbf16>
    %c0_1 = arith.constant 0 : index
    %c0_2 = arith.constant 0 : index
    %2 = vector.load %arg2[%c0_1, %c0_2] : memref<32x96xbf16, #tpu.memory_space<vmem>>, vector<32x96xbf16>
    %cst = arith.constant dense<0.000000e+00> : vector<8x96xf32>
    %3 = tpu.matmul %1, %2, %cst {dimension_numbers = #tpu.dot_dimension_numbers<[1], [0], [0], [1], [0, 0, 1, 1], [], []>} : vector<8x32xbf16>, vector<32x96xbf16>, vector<8x96xf32> -> vector<8x96xf32>
    %c0_3 = arith.constant 0 : index
    %c0_4 = arith.constant 0 : index
    %4 = vector.load %arg3[%c0_3, %c0_4] : memref<1x96xf32, #tpu.memory_space<vmem>>, vector<1x96xf32>
    %5 = vector.broadcast %4 : vector<1x96xf32> to vector<8x96xf32>
    %6 = arith.addf %3, %5 : vector<8x96xf32>
    %7 = vector.shape_cast %6 : vector<8x96xf32> to vector<1x8x96xf32>
    %8 = vector.extract_strided_slice %7 {offsets = [0, 0, 0], sizes = [1, 8, 8], strides = [1, 1, 1]} : vector<1x8x96xf32> to vector<1x8x8xf32>
    %9 = vector.extract_strided_slice %7 {offsets = [0, 0, 32], sizes = [1, 8, 8], strides = [1, 1, 1]} : vector<1x8x96xf32> to vector<1x8x8xf32>
    %10 = vector.extract_strided_slice %7 {offsets = [0, 0, 64], sizes = [1, 8, 8], strides = [1, 1, 1]} : vector<1x8x96xf32> to vector<1x8x8xf32>
    %11 = vector.extract_strided_slice %7 {offsets = [0, 0, 8], sizes = [1, 8, 8], strides = [1, 1, 1]} : vector<1x8x96xf32> to vector<1x8x8xf32>
    %12 = vector.extract_strided_slice %7 {offsets = [0, 0, 40], sizes = [1, 8, 8], strides = [1, 1, 1]} : vector<1x8x96xf32> to vector<1x8x8xf32>
    %13 = vector.extract_strided_slice %7 {offsets = [0, 0, 72], sizes = [1, 8, 8], strides = [1, 1, 1]} : vector<1x8x96xf32> to vector<1x8x8xf32>
    %14 = vector.extract_strided_slice %7 {offsets = [0, 0, 16], sizes = [1, 8, 8], strides = [1, 1, 1]} : vector<1x8x96xf32> to vector<1x8x8xf32>
    %15 = vector.extract_strided_slice %7 {offsets = [0, 0, 48], sizes = [1, 8, 8], strides = [1, 1, 1]} : vector<1x8x96xf32> to vector<1x8x8xf32>
    %16 = vector.extract_strided_slice %7 {offsets = [0, 0, 80], sizes = [1, 8, 8], strides = [1, 1, 1]} : vector<1x8x96xf32> to vector<1x8x8xf32>
    %17 = vector.extract_strided_slice %7 {offsets = [0, 0, 24], sizes = [1, 8, 8], strides = [1, 1, 1]} : vector<1x8x96xf32> to vector<1x8x8xf32>
    %18 = vector.extract_strided_slice %7 {offsets = [0, 0, 56], sizes = [1, 8, 8], strides = [1, 1, 1]} : vector<1x8x96xf32> to vector<1x8x8xf32>
    %19 = vector.extract_strided_slice %7 {offsets = [0, 0, 88], sizes = [1, 8, 8], strides = [1, 1, 1]} : vector<1x8x96xf32> to vector<1x8x8xf32>
    %20 = tpu.concatenate %8, %11, %14, %17 in 0 : vector<1x8x8xf32>, vector<1x8x8xf32>, vector<1x8x8xf32>, vector<1x8x8xf32> -> vector<4x8x8xf32>
    %21 = arith.truncf %20 : vector<4x8x8xf32> to vector<4x8x8xbf16>
    %22 = tpu.concatenate %9, %12, %15, %18 in 0 : vector<1x8x8xf32>, vector<1x8x8xf32>, vector<1x8x8xf32>, vector<1x8x8xf32> -> vector<4x8x8xf32>
    %23 = arith.truncf %22 : vector<4x8x8xf32> to vector<4x8x8xbf16>
    %24 = tpu.concatenate %10, %13, %16, %19 in 0 : vector<1x8x8xf32>, vector<1x8x8xf32>, vector<1x8x8xf32>, vector<1x8x8xf32> -> vector<4x8x8xf32>
    %25 = arith.truncf %24 : vector<4x8x8xf32> to vector<4x8x8xbf16>
    "tpu.trace_start"() <{level = 10 : i32, message = "btd,bsd->bts"}> : () -> ()
    %cst_5 = arith.constant dense<0.000000e+00> : vector<4x8x8xf32>
    %26 = tpu.matmul %21, %23, %cst_5 {dimension_numbers = #tpu.dot_dimension_numbers<[2], [2], [1], [1], [0, 0, 0, 1, 1, 1], [0], [0]>} : vector<4x8x8xbf16>, vector<4x8x8xbf16>, vector<4x8x8xf32> -> vector<4x8x8xf32>
    "tpu.trace_stop"() : () -> ()
    %cst_6 = arith.constant 0.353553385 : f32
    %27 = vector.broadcast %cst_6 : f32 to vector<4x8x8xf32>
    %28 = arith.mulf %26, %27 : vector<4x8x8xf32>
    %cst_7 = arith.constant dense<0xFF800000> : vector<4x8xf32>
    %29 = vector.multi_reduction <maximumf>, %28, %cst_7 [2] : vector<4x8x8xf32> to vector<4x8xf32>
    %30 = vector.shape_cast %29 : vector<4x8xf32> to vector<4x8x1xf32>
    %31 = vector.broadcast %30 : vector<4x8x1xf32> to vector<4x8x8xf32>
    %32 = arith.subf %28, %31 : vector<4x8x8xf32>
    %33 = math.exp %32 : vector<4x8x8xf32>
    %cst_8 = arith.constant dense<0.000000e+00> : vector<4x8xf32>
    %34 = vector.multi_reduction <add>, %33, %cst_8 [2] : vector<4x8x8xf32> to vector<4x8xf32>
    %35 = vector.shape_cast %34 : vector<4x8xf32> to vector<4x8x1xf32>
    %36 = tpu.reciprocal %35 {approx = true} : vector<4x8x1xf32> -> vector<4x8x1xf32>
    %37 = vector.broadcast %36 : vector<4x8x1xf32> to vector<4x8x8xf32>
    %38 = arith.mulf %33, %37 : vector<4x8x8xf32>
    %39 = arith.truncf %38 : vector<4x8x8xf32> to vector<4x8x8xbf16>
    "tpu.trace_start"() <{level = 10 : i32, message = "bts,bsd->btd"}> : () -> ()
    %cst_9 = arith.constant dense<0.000000e+00> : vector<4x8x8xf32>
    %40 = tpu.matmul %39, %25, %cst_9 {dimension_numbers = #tpu.dot_dimension_numbers<[2], [1], [1], [2], [0, 0, 0, 1, 1, 2], [0], [0]>} : vector<4x8x8xbf16>, vector<4x8x8xbf16>, vector<4x8x8xf32> -> vector<4x8x8xf32>
    "tpu.trace_stop"() : () -> ()
    %41 = vector.extract_strided_slice %40 {offsets = [0, 0, 0], sizes = [1, 8, 8], strides = [1, 1, 1]} : vector<4x8x8xf32> to vector<1x8x8xf32>
    %42 = vector.extract_strided_slice %40 {offsets = [1, 0, 0], sizes = [1, 8, 8], strides = [1, 1, 1]} : vector<4x8x8xf32> to vector<1x8x8xf32>
    %43 = vector.extract_strided_slice %40 {offsets = [2, 0, 0], sizes = [1, 8, 8], strides = [1, 1, 1]} : vector<4x8x8xf32> to vector<1x8x8xf32>
    %44 = vector.extract_strided_slice %40 {offsets = [3, 0, 0], sizes = [1, 8, 8], strides = [1, 1, 1]} : vector<4x8x8xf32> to vector<1x8x8xf32>
    %45 = tpu.concatenate %41, %42, %43, %44 in 2 : vector<1x8x8xf32>, vector<1x8x8xf32>, vector<1x8x8xf32>, vector<1x8x8xf32> -> vector<1x8x32xf32>
    %46 = vector.shape_cast %45 : vector<1x8x32xf32> to vector<8x32xf32>
    %47 = arith.truncf %46 : vector<8x32xf32> to vector<8x32xbf16>
    %c0_10 = arith.constant 0 : index
    %c0_11 = arith.constant 0 : index
    %48 = vector.load %arg4[%c0_10, %c0_11] : memref<32x32xbf16, #tpu.memory_space<vmem>>, vector<32x32xbf16>
    %cst_12 = arith.constant dense<0.000000e+00> : vector<8x32xf32>
    %49 = tpu.matmul %47, %48, %cst_12 {dimension_numbers = #tpu.dot_dimension_numbers<[1], [0], [0], [1], [0, 0, 1, 1], [], []>} : vector<8x32xbf16>, vector<32x32xbf16>, vector<8x32xf32> -> vector<8x32xf32>
    %c0_13 = arith.constant 0 : index
    %c0_14 = arith.constant 0 : index
    %50 = vector.load %arg5[%c0_13, %c0_14] : memref<1x32xf32, #tpu.memory_space<vmem>>, vector<1x32xf32>
    %51 = vector.broadcast %50 : vector<1x32xf32> to vector<8x32xf32>
    %52 = arith.addf %49, %51 : vector<8x32xf32>
    %53 = arith.addf %0, %52 : vector<8x32xf32>
    %c0_15 = arith.constant 0 : index
    %c0_16 = arith.constant 0 : index
    %54 = vector.load %arg6[%c0_15, %c0_16] : memref<1x32xf32, #tpu.memory_space<vmem>>, vector<1x32xf32>
    %c0_17 = arith.constant 0 : index
    %c0_18 = arith.constant 0 : index
    %55 = vector.load %arg7[%c0_17, %c0_18] : memref<1x32xf32, #tpu.memory_space<vmem>>, vector<1x32xf32>
    %cst_19 = arith.constant dense<0.000000e+00> : vector<8xf32>
    %56 = vector.multi_reduction <add>, %53, %cst_19 [1] : vector<8x32xf32> to vector<8xf32>
    %57 = vector.shape_cast %56 : vector<8xf32> to vector<8x1xf32>
    %cst_20 = arith.constant 3.200000e+01 : f32
    %58 = vector.broadcast %cst_20 : f32 to vector<8x1xf32>
    %59 = arith.divf %57, %58 : vector<8x1xf32>
    %60 = vector.broadcast %59 : vector<8x1xf32> to vector<8x32xf32>
    %61 = arith.subf %53, %60 : vector<8x32xf32>
    %62 = arith.mulf %61, %61 : vector<8x32xf32>
    %cst_21 = arith.constant dense<0.000000e+00> : vector<8xf32>
    %63 = vector.multi_reduction <add>, %62, %cst_21 [1] : vector<8x32xf32> to vector<8xf32>
    %64 = vector.shape_cast %63 : vector<8xf32> to vector<8x1xf32>
    %cst_22 = arith.constant 3.200000e+01 : f32
    %65 = vector.broadcast %cst_22 : f32 to vector<8x1xf32>
    %66 = arith.divf %64, %65 : vector<8x1xf32>
    %67 = vector.broadcast %59 : vector<8x1xf32> to vector<8x32xf32>
    %68 = arith.subf %53, %67 : vector<8x32xf32>
    %cst_23 = arith.constant 9.99999974E-6 : f32
    %69 = vector.broadcast %cst_23 : f32 to vector<8x1xf32>
    %70 = arith.addf %66, %69 : vector<8x1xf32>
    %71 = math.rsqrt %70 : vector<8x1xf32>
    %72 = vector.broadcast %71 : vector<8x1xf32> to vector<8x32xf32>
    %73 = arith.mulf %68, %72 : vector<8x32xf32>
    %74 = vector.broadcast %54 : vector<1x32xf32> to vector<8x32xf32>
    %75 = arith.mulf %73, %74 : vector<8x32xf32>
    %76 = vector.broadcast %55 : vector<1x32xf32> to vector<8x32xf32>
    %77 = arith.addf %75, %76 : vector<8x32xf32>
    %78 = arith.truncf %77 : vector<8x32xf32> to vector<8x32xbf16>
    %c0_24 = arith.constant 0 : index
    %c0_25 = arith.constant 0 : index
    %79 = vector.load %arg8[%c0_24, %c0_25] : memref<32x4xf32, #tpu.memory_space<vmem>>, vector<32x4xf32>
    %cst_26 = arith.constant dense<0.000000e+00> : vector<8x4xf32>
    %80 = tpu.matmul %77, %79, %cst_26 {dimension_numbers = #tpu.dot_dimension_numbers<[1], [0], [0], [1], [0, 0, 1, 1], [], []>} : vector<8x32xf32>, vector<32x4xf32>, vector<8x4xf32> -> vector<8x4xf32>
    %c0_27 = arith.constant 0 : index
    %c0_28 = arith.constant 0 : index
    %81 = vector.load %arg9[%c0_27, %c0_28] : memref<1x4xf32, #tpu.memory_space<vmem>>, vector<1x4xf32>
    %82 = vector.broadcast %81 : vector<1x4xf32> to vector<8x4xf32>
    %83 = arith.addf %80, %82 : vector<8x4xf32>
    %cst_29 = arith.constant dense<0xFF800000> : vector<8xf32>
    %84 = vector.multi_reduction <maximumf>, %83, %cst_29 [1] : vector<8x4xf32> to vector<8xf32>
    %85 = vector.shape_cast %84 : vector<8xf32> to vector<8x1xf32>
    %86 = vector.broadcast %85 : vector<8x1xf32> to vector<8x4xf32>
    %87 = arith.subf %83, %86 : vector<8x4xf32>
    %88 = math.exp %87 : vector<8x4xf32>
    %cst_30 = arith.constant dense<0.000000e+00> : vector<8xf32>
    %89 = vector.multi_reduction <add>, %88, %cst_30 [1] : vector<8x4xf32> to vector<8xf32>
    %90 = vector.shape_cast %89 : vector<8xf32> to vector<8x1xf32>
    %91 = tpu.reciprocal %90 {approx = true} : vector<8x1xf32> -> vector<8x1xf32>
    %92 = vector.broadcast %91 : vector<8x1xf32> to vector<8x4xf32>
    %93 = arith.mulf %88, %92 : vector<8x4xf32>
    %94 = tpu.iota {dimensions = array<i32: 1>} : vector<8x4xi32>
    %cst_31 = arith.constant dense<0xFF800000> : vector<8xf32>
    %95 = vector.multi_reduction <maximumf>, %93, %cst_31 [1] : vector<8x4xf32> to vector<8xf32>
    %96 = vector.shape_cast %95 : vector<8xf32> to vector<8x1xf32>
    %97 = vector.broadcast %96 : vector<8x1xf32> to vector<8x4xf32>
    %98 = arith.cmpf oeq, %93, %97 : vector<8x4xf32>
    %c4_i32 = arith.constant 4 : i32
    %99 = vector.broadcast %c4_i32 : i32 to vector<8x4xi32>
    %100 = arith.select %98, %94, %99 : vector<8x4xi1>, vector<8x4xi32>
    %cst_32 = arith.constant dense<2147483647> : vector<8xi32>
    %101 = vector.multi_reduction <minsi>, %100, %cst_32 [1] : vector<8x4xi32> to vector<8xi32>
    %102 = vector.shape_cast %101 : vector<8xi32> to vector<8x1xi32>
    %103 = vector.broadcast %102 : vector<8x1xi32> to vector<8x4xi32>
    %104 = arith.cmpi eq, %94, %103 : vector<8x4xi32>
    %cst_33 = arith.constant 0xFF800000 : f32
    %105 = vector.broadcast %cst_33 : f32 to vector<8x4xf32>
    %106 = arith.select %104, %105, %93 : vector<8x4xi1>, vector<8x4xf32>
    %cst_34 = arith.constant dense<0xFF800000> : vector<8xf32>
    %107 = vector.multi_reduction <maximumf>, %106, %cst_34 [1] : vector<8x4xf32> to vector<8xf32>
    %108 = vector.shape_cast %107 : vector<8xf32> to vector<8x1xf32>
    %109 = vector.broadcast %108 : vector<8x1xf32> to vector<8x4xf32>
    %110 = arith.cmpf oeq, %106, %109 : vector<8x4xf32>
    %c4_i32_35 = arith.constant 4 : i32
    %111 = vector.broadcast %c4_i32_35 : i32 to vector<8x4xi32>
    %112 = arith.select %110, %94, %111 : vector<8x4xi1>, vector<8x4xi32>
    %cst_36 = arith.constant dense<2147483647> : vector<8xi32>
    %113 = vector.multi_reduction <minsi>, %112, %cst_36 [1] : vector<8x4xi32> to vector<8xi32>
    %114 = vector.shape_cast %113 : vector<8xi32> to vector<8x1xi32>
    %115 = vector.broadcast %102 : vector<8x1xi32> to vector<8x4xi32>
    %116 = arith.cmpi eq, %94, %115 : vector<8x4xi32>
    %cst_37 = arith.constant 0.000000e+00 : f32
    %117 = vector.shape_cast %96 : vector<8x1xf32> to vector<8x1xf32>
    %118 = vector.broadcast %117 : vector<8x1xf32> to vector<8x4xf32>
    %119 = vector.broadcast %cst_37 : f32 to vector<8x4xf32>
    %120 = arith.select %116, %118, %119 : vector<8x4xi1>, vector<8x4xf32>
    %121 = vector.broadcast %114 : vector<8x1xi32> to vector<8x4xi32>
    %122 = arith.cmpi eq, %94, %121 : vector<8x4xi32>
    %cst_38 = arith.constant 0.000000e+00 : f32
    %123 = vector.shape_cast %108 : vector<8x1xf32> to vector<8x1xf32>
    %124 = vector.broadcast %123 : vector<8x1xf32> to vector<8x4xf32>
    %125 = vector.broadcast %cst_38 : f32 to vector<8x4xf32>
    %126 = arith.select %122, %124, %125 : vector<8x4xi1>, vector<8x4xf32>
    %127 = arith.addf %120, %126 : vector<8x4xf32>
    %cst_39 = arith.constant 0.000000e+00 : f32
    %128 = vector.broadcast %cst_39 : f32 to vector<8x32xf32>
    %c0_40 = arith.constant 0 : index
    %c0_41 = arith.constant 0 : index
    %129 = vector.load %arg17[%c0_40, %c0_41] : memref<8x32xf32, #tpu.memory_space<vmem>>, vector<8x32xf32>
    tpu.vector_store %arg17[%c0_40, %c0_41], %128 {strides = array<i32>} : memref<8x32xf32, #tpu.memory_space<vmem>>, vector<8x32xf32>,
    %130 = vector.extract_strided_slice %127 {offsets = [0, 0], sizes = [8, 1], strides = [1, 1]} : vector<8x4xf32> to vector<8x1xf32>
    %131 = vector.shape_cast %130 : vector<8x1xf32> to vector<1x8x1xf32>
    %cst_42 = arith.constant dense<0xFF800000> : vector<1xf32>
    %132 = vector.multi_reduction <maximumf>, %131, %cst_42 [1, 2] : vector<1x8x1xf32> to vector<1xf32>
    %133 = vector.shape_cast %132 : vector<1xf32> to vector<1x1x1xf32>
    %134 = vector.extract %133[0, 0, 0] : f32 from vector<1x1x1xf32>
    %cst_43 = arith.constant 0.000000e+00 : f32
    %135 = arith.cmpf ogt, %134, %cst_43 : f32
    %136 = arith.extui %135 : i1 to i32
    %c0_i32 = arith.constant 0 : i32
    %137 = arith.cmpi ne, %136, %c0_i32 : i32
    scf.if %137 {
      %c0_66 = arith.constant 0 : index
      %c0_67 = arith.constant 0 : index
      %c0_68 = arith.constant 0 : index
      %189 = vector.load %arg10[%c0_66, %c0_67, %c0_68] : memref<4x32x64xbf16, #tpu.memory_space<vmem>>, vector<1x32x64xbf16>
      %190 = vector.shape_cast %189 : vector<1x32x64xbf16> to vector<32x64xbf16>
      %cst_69 = arith.constant dense<0.000000e+00> : vector<8x64xf32>
      %191 = tpu.matmul %78, %190, %cst_69 {dimension_numbers = #tpu.dot_dimension_numbers<[1], [0], [0], [1], [0, 0, 1, 1], [], []>} : vector<8x32xbf16>, vector<32x64xbf16>, vector<8x64xf32> -> vector<8x64xf32>
      %c0_70 = arith.constant 0 : index
      %c0_71 = arith.constant 0 : index
      %c0_72 = arith.constant 0 : index
      %192 = vector.load %arg11[%c0_70, %c0_71, %c0_72] : memref<4x1x64xf32, #tpu.memory_space<vmem>>, vector<1x1x64xf32>
      %193 = vector.shape_cast %192 : vector<1x1x64xf32> to vector<1x64xf32>
      %194 = vector.broadcast %193 : vector<1x64xf32> to vector<8x64xf32>
      %195 = arith.addf %191, %194 : vector<8x64xf32>
      %cst_73 = arith.constant 0.000000e+00 : f32
      %196 = vector.broadcast %cst_73 : f32 to vector<8x64xf32>
      %197 = arith.maximumf %195, %196 : vector<8x64xf32>
      %198 = arith.truncf %197 : vector<8x64xf32> to vector<8x64xbf16>
      %c0_74 = arith.constant 0 : index
      %c0_75 = arith.constant 0 : index
      %c0_76 = arith.constant 0 : index
      %199 = vector.load %arg12[%c0_74, %c0_75, %c0_76] : memref<4x64x32xbf16, #tpu.memory_space<vmem>>, vector<1x64x32xbf16>
      %200 = vector.shape_cast %199 : vector<1x64x32xbf16> to vector<64x32xbf16>
      %cst_77 = arith.constant dense<0.000000e+00> : vector<8x32xf32>
      %201 = tpu.matmul %198, %200, %cst_77 {dimension_numbers = #tpu.dot_dimension_numbers<[1], [0], [0], [1], [0, 0, 1, 1], [], []>} : vector<8x64xbf16>, vector<64x32xbf16>, vector<8x32xf32> -> vector<8x32xf32>
      %c0_78 = arith.constant 0 : index
      %c0_79 = arith.constant 0 : index
      %c0_80 = arith.constant 0 : index
      %202 = vector.load %arg13[%c0_78, %c0_79, %c0_80] : memref<4x1x32xf32, #tpu.memory_space<vmem>>, vector<1x1x32xf32>
      %203 = vector.shape_cast %202 : vector<1x1x32xf32> to vector<1x32xf32>
      %204 = vector.broadcast %203 : vector<1x32xf32> to vector<8x32xf32>
      %205 = arith.addf %201, %204 : vector<8x32xf32>
      %c0_81 = arith.constant 0 : index
      %c0_82 = arith.constant 0 : index
      %206 = vector.load %arg17[%c0_81, %c0_82] : memref<8x32xf32, #tpu.memory_space<vmem>>, vector<8x32xf32>
      %207 = vector.broadcast %130 : vector<8x1xf32> to vector<8x32xf32>
      %208 = arith.mulf %207, %205 : vector<8x32xf32>
      %209 = arith.addf %206, %208 : vector<8x32xf32>
      %c0_83 = arith.constant 0 : index
      %c0_84 = arith.constant 0 : index
      %210 = vector.load %arg17[%c0_83, %c0_84] : memref<8x32xf32, #tpu.memory_space<vmem>>, vector<8x32xf32>
      tpu.vector_store %arg17[%c0_83, %c0_84], %209 {strides = array<i32>} : memref<8x32xf32, #tpu.memory_space<vmem>>, vector<8x32xf32>,
    } else {
    }
    %138 = vector.extract_strided_slice %127 {offsets = [0, 1], sizes = [8, 1], strides = [1, 1]} : vector<8x4xf32> to vector<8x1xf32>
    %139 = vector.shape_cast %138 : vector<8x1xf32> to vector<1x8x1xf32>
    %cst_44 = arith.constant dense<0xFF800000> : vector<1xf32>
    %140 = vector.multi_reduction <maximumf>, %139, %cst_44 [1, 2] : vector<1x8x1xf32> to vector<1xf32>
    %141 = vector.shape_cast %140 : vector<1xf32> to vector<1x1x1xf32>
    %142 = vector.extract %141[0, 0, 0] : f32 from vector<1x1x1xf32>
    %cst_45 = arith.constant 0.000000e+00 : f32
    %143 = arith.cmpf ogt, %142, %cst_45 : f32
    %144 = arith.extui %143 : i1 to i32
    %c0_i32_46 = arith.constant 0 : i32
    %145 = arith.cmpi ne, %144, %c0_i32_46 : i32
    scf.if %145 {
      %c1 = arith.constant 1 : index
      %c0_66 = arith.constant 0 : index
      %c0_67 = arith.constant 0 : index
      %189 = vector.load %arg10[%c1, %c0_66, %c0_67] : memref<4x32x64xbf16, #tpu.memory_space<vmem>>, vector<1x32x64xbf16>
      %190 = vector.shape_cast %189 : vector<1x32x64xbf16> to vector<32x64xbf16>
      %cst_68 = arith.constant dense<0.000000e+00> : vector<8x64xf32>
      %191 = tpu.matmul %78, %190, %cst_68 {dimension_numbers = #tpu.dot_dimension_numbers<[1], [0], [0], [1], [0, 0, 1, 1], [], []>} : vector<8x32xbf16>, vector<32x64xbf16>, vector<8x64xf32> -> vector<8x64xf32>
      %c1_69 = arith.constant 1 : index
      %c0_70 = arith.constant 0 : index
      %c0_71 = arith.constant 0 : index
      %192 = vector.load %arg11[%c1_69, %c0_70, %c0_71] : memref<4x1x64xf32, #tpu.memory_space<vmem>>, vector<1x1x64xf32>
      %193 = vector.shape_cast %192 : vector<1x1x64xf32> to vector<1x64xf32>
      %194 = vector.broadcast %193 : vector<1x64xf32> to vector<8x64xf32>
      %195 = arith.addf %191, %194 : vector<8x64xf32>
      %cst_72 = arith.constant 0.000000e+00 : f32
      %196 = vector.broadcast %cst_72 : f32 to vector<8x64xf32>
      %197 = arith.maximumf %195, %196 : vector<8x64xf32>
      %198 = arith.truncf %197 : vector<8x64xf32> to vector<8x64xbf16>
      %c1_73 = arith.constant 1 : index
      %c0_74 = arith.constant 0 : index
      %c0_75 = arith.constant 0 : index
      %199 = vector.load %arg12[%c1_73, %c0_74, %c0_75] : memref<4x64x32xbf16, #tpu.memory_space<vmem>>, vector<1x64x32xbf16>
      %200 = vector.shape_cast %199 : vector<1x64x32xbf16> to vector<64x32xbf16>
      %cst_76 = arith.constant dense<0.000000e+00> : vector<8x32xf32>
      %201 = tpu.matmul %198, %200, %cst_76 {dimension_numbers = #tpu.dot_dimension_numbers<[1], [0], [0], [1], [0, 0, 1, 1], [], []>} : vector<8x64xbf16>, vector<64x32xbf16>, vector<8x32xf32> -> vector<8x32xf32>
      %c1_77 = arith.constant 1 : index
      %c0_78 = arith.constant 0 : index
      %c0_79 = arith.constant 0 : index
      %202 = vector.load %arg13[%c1_77, %c0_78, %c0_79] : memref<4x1x32xf32, #tpu.memory_space<vmem>>, vector<1x1x32xf32>
      %203 = vector.shape_cast %202 : vector<1x1x32xf32> to vector<1x32xf32>
      %204 = vector.broadcast %203 : vector<1x32xf32> to vector<8x32xf32>
      %205 = arith.addf %201, %204 : vector<8x32xf32>
      %c0_80 = arith.constant 0 : index
      %c0_81 = arith.constant 0 : index
      %206 = vector.load %arg17[%c0_80, %c0_81] : memref<8x32xf32, #tpu.memory_space<vmem>>, vector<8x32xf32>
      %207 = vector.broadcast %138 : vector<8x1xf32> to vector<8x32xf32>
      %208 = arith.mulf %207, %205 : vector<8x32xf32>
      %209 = arith.addf %206, %208 : vector<8x32xf32>
      %c0_82 = arith.constant 0 : index
      %c0_83 = arith.constant 0 : index
      %210 = vector.load %arg17[%c0_82, %c0_83] : memref<8x32xf32, #tpu.memory_space<vmem>>, vector<8x32xf32>
      tpu.vector_store %arg17[%c0_82, %c0_83], %209 {strides = array<i32>} : memref<8x32xf32, #tpu.memory_space<vmem>>, vector<8x32xf32>,
    } else {
    }
    %146 = vector.extract_strided_slice %127 {offsets = [0, 2], sizes = [8, 1], strides = [1, 1]} : vector<8x4xf32> to vector<8x1xf32>
    %147 = vector.shape_cast %146 : vector<8x1xf32> to vector<1x8x1xf32>
    %cst_47 = arith.constant dense<0xFF800000> : vector<1xf32>
    %148 = vector.multi_reduction <maximumf>, %147, %cst_47 [1, 2] : vector<1x8x1xf32> to vector<1xf32>
    %149 = vector.shape_cast %148 : vector<1xf32> to vector<1x1x1xf32>
    %150 = vector.extract %149[0, 0, 0] : f32 from vector<1x1x1xf32>
    %cst_48 = arith.constant 0.000000e+00 : f32
    %151 = arith.cmpf ogt, %150, %cst_48 : f32
    %152 = arith.extui %151 : i1 to i32
    %c0_i32_49 = arith.constant 0 : i32
    %153 = arith.cmpi ne, %152, %c0_i32_49 : i32
    scf.if %153 {
      %c2 = arith.constant 2 : index
      %c0_66 = arith.constant 0 : index
      %c0_67 = arith.constant 0 : index
      %189 = vector.load %arg10[%c2, %c0_66, %c0_67] : memref<4x32x64xbf16, #tpu.memory_space<vmem>>, vector<1x32x64xbf16>
      %190 = vector.shape_cast %189 : vector<1x32x64xbf16> to vector<32x64xbf16>
      %cst_68 = arith.constant dense<0.000000e+00> : vector<8x64xf32>
      %191 = tpu.matmul %78, %190, %cst_68 {dimension_numbers = #tpu.dot_dimension_numbers<[1], [0], [0], [1], [0, 0, 1, 1], [], []>} : vector<8x32xbf16>, vector<32x64xbf16>, vector<8x64xf32> -> vector<8x64xf32>
      %c2_69 = arith.constant 2 : index
      %c0_70 = arith.constant 0 : index
      %c0_71 = arith.constant 0 : index
      %192 = vector.load %arg11[%c2_69, %c0_70, %c0_71] : memref<4x1x64xf32, #tpu.memory_space<vmem>>, vector<1x1x64xf32>
      %193 = vector.shape_cast %192 : vector<1x1x64xf32> to vector<1x64xf32>
      %194 = vector.broadcast %193 : vector<1x64xf32> to vector<8x64xf32>
      %195 = arith.addf %191, %194 : vector<8x64xf32>
      %cst_72 = arith.constant 0.000000e+00 : f32
      %196 = vector.broadcast %cst_72 : f32 to vector<8x64xf32>
      %197 = arith.maximumf %195, %196 : vector<8x64xf32>
      %198 = arith.truncf %197 : vector<8x64xf32> to vector<8x64xbf16>
      %c2_73 = arith.constant 2 : index
      %c0_74 = arith.constant 0 : index
      %c0_75 = arith.constant 0 : index
      %199 = vector.load %arg12[%c2_73, %c0_74, %c0_75] : memref<4x64x32xbf16, #tpu.memory_space<vmem>>, vector<1x64x32xbf16>
      %200 = vector.shape_cast %199 : vector<1x64x32xbf16> to vector<64x32xbf16>
      %cst_76 = arith.constant dense<0.000000e+00> : vector<8x32xf32>
      %201 = tpu.matmul %198, %200, %cst_76 {dimension_numbers = #tpu.dot_dimension_numbers<[1], [0], [0], [1], [0, 0, 1, 1], [], []>} : vector<8x64xbf16>, vector<64x32xbf16>, vector<8x32xf32> -> vector<8x32xf32>
      %c2_77 = arith.constant 2 : index
      %c0_78 = arith.constant 0 : index
      %c0_79 = arith.constant 0 : index
      %202 = vector.load %arg13[%c2_77, %c0_78, %c0_79] : memref<4x1x32xf32, #tpu.memory_space<vmem>>, vector<1x1x32xf32>
      %203 = vector.shape_cast %202 : vector<1x1x32xf32> to vector<1x32xf32>
      %204 = vector.broadcast %203 : vector<1x32xf32> to vector<8x32xf32>
      %205 = arith.addf %201, %204 : vector<8x32xf32>
      %c0_80 = arith.constant 0 : index
      %c0_81 = arith.constant 0 : index
      %206 = vector.load %arg17[%c0_80, %c0_81] : memref<8x32xf32, #tpu.memory_space<vmem>>, vector<8x32xf32>
      %207 = vector.broadcast %146 : vector<8x1xf32> to vector<8x32xf32>
      %208 = arith.mulf %207, %205 : vector<8x32xf32>
      %209 = arith.addf %206, %208 : vector<8x32xf32>
      %c0_82 = arith.constant 0 : index
      %c0_83 = arith.constant 0 : index
      %210 = vector.load %arg17[%c0_82, %c0_83] : memref<8x32xf32, #tpu.memory_space<vmem>>, vector<8x32xf32>
      tpu.vector_store %arg17[%c0_82, %c0_83], %209 {strides = array<i32>} : memref<8x32xf32, #tpu.memory_space<vmem>>, vector<8x32xf32>,
    } else {
    }
    %154 = vector.extract_strided_slice %127 {offsets = [0, 3], sizes = [8, 1], strides = [1, 1]} : vector<8x4xf32> to vector<8x1xf32>
    %155 = vector.shape_cast %154 : vector<8x1xf32> to vector<1x8x1xf32>
    %cst_50 = arith.constant dense<0xFF800000> : vector<1xf32>
    %156 = vector.multi_reduction <maximumf>, %155, %cst_50 [1, 2] : vector<1x8x1xf32> to vector<1xf32>
    %157 = vector.shape_cast %156 : vector<1xf32> to vector<1x1x1xf32>
    %158 = vector.extract %157[0, 0, 0] : f32 from vector<1x1x1xf32>
    %cst_51 = arith.constant 0.000000e+00 : f32
    %159 = arith.cmpf ogt, %158, %cst_51 : f32
    %160 = arith.extui %159 : i1 to i32
    %c0_i32_52 = arith.constant 0 : i32
    %161 = arith.cmpi ne, %160, %c0_i32_52 : i32
    scf.if %161 {
      %c3 = arith.constant 3 : index
      %c0_66 = arith.constant 0 : index
      %c0_67 = arith.constant 0 : index
      %189 = vector.load %arg10[%c3, %c0_66, %c0_67] : memref<4x32x64xbf16, #tpu.memory_space<vmem>>, vector<1x32x64xbf16>
      %190 = vector.shape_cast %189 : vector<1x32x64xbf16> to vector<32x64xbf16>
      %cst_68 = arith.constant dense<0.000000e+00> : vector<8x64xf32>
      %191 = tpu.matmul %78, %190, %cst_68 {dimension_numbers = #tpu.dot_dimension_numbers<[1], [0], [0], [1], [0, 0, 1, 1], [], []>} : vector<8x32xbf16>, vector<32x64xbf16>, vector<8x64xf32> -> vector<8x64xf32>
      %c3_69 = arith.constant 3 : index
      %c0_70 = arith.constant 0 : index
      %c0_71 = arith.constant 0 : index
      %192 = vector.load %arg11[%c3_69, %c0_70, %c0_71] : memref<4x1x64xf32, #tpu.memory_space<vmem>>, vector<1x1x64xf32>
      %193 = vector.shape_cast %192 : vector<1x1x64xf32> to vector<1x64xf32>
      %194 = vector.broadcast %193 : vector<1x64xf32> to vector<8x64xf32>
      %195 = arith.addf %191, %194 : vector<8x64xf32>
      %cst_72 = arith.constant 0.000000e+00 : f32
      %196 = vector.broadcast %cst_72 : f32 to vector<8x64xf32>
      %197 = arith.maximumf %195, %196 : vector<8x64xf32>
      %198 = arith.truncf %197 : vector<8x64xf32> to vector<8x64xbf16>
      %c3_73 = arith.constant 3 : index
      %c0_74 = arith.constant 0 : index
      %c0_75 = arith.constant 0 : index
      %199 = vector.load %arg12[%c3_73, %c0_74, %c0_75] : memref<4x64x32xbf16, #tpu.memory_space<vmem>>, vector<1x64x32xbf16>
      %200 = vector.shape_cast %199 : vector<1x64x32xbf16> to vector<64x32xbf16>
      %cst_76 = arith.constant dense<0.000000e+00> : vector<8x32xf32>
      %201 = tpu.matmul %198, %200, %cst_76 {dimension_numbers = #tpu.dot_dimension_numbers<[1], [0], [0], [1], [0, 0, 1, 1], [], []>} : vector<8x64xbf16>, vector<64x32xbf16>, vector<8x32xf32> -> vector<8x32xf32>
      %c3_77 = arith.constant 3 : index
      %c0_78 = arith.constant 0 : index
      %c0_79 = arith.constant 0 : index
      %202 = vector.load %arg13[%c3_77, %c0_78, %c0_79] : memref<4x1x32xf32, #tpu.memory_space<vmem>>, vector<1x1x32xf32>
      %203 = vector.shape_cast %202 : vector<1x1x32xf32> to vector<1x32xf32>
      %204 = vector.broadcast %203 : vector<1x32xf32> to vector<8x32xf32>
      %205 = arith.addf %201, %204 : vector<8x32xf32>
      %c0_80 = arith.constant 0 : index
      %c0_81 = arith.constant 0 : index
      %206 = vector.load %arg17[%c0_80, %c0_81] : memref<8x32xf32, #tpu.memory_space<vmem>>, vector<8x32xf32>
      %207 = vector.broadcast %154 : vector<8x1xf32> to vector<8x32xf32>
      %208 = arith.mulf %207, %205 : vector<8x32xf32>
      %209 = arith.addf %206, %208 : vector<8x32xf32>
      %c0_82 = arith.constant 0 : index
      %c0_83 = arith.constant 0 : index
      %210 = vector.load %arg17[%c0_82, %c0_83] : memref<8x32xf32, #tpu.memory_space<vmem>>, vector<8x32xf32>
      tpu.vector_store %arg17[%c0_82, %c0_83], %209 {strides = array<i32>} : memref<8x32xf32, #tpu.memory_space<vmem>>, vector<8x32xf32>,
    } else {
    }
    %c0_53 = arith.constant 0 : index
    %c0_54 = arith.constant 0 : index
    %162 = vector.load %arg17[%c0_53, %c0_54] : memref<8x32xf32, #tpu.memory_space<vmem>>, vector<8x32xf32>
    %163 = arith.addf %77, %162 : vector<8x32xf32>
    %c0_55 = arith.constant 0 : index
    %c0_56 = arith.constant 0 : index
    %164 = vector.load %arg14[%c0_55, %c0_56] : memref<1x32xf32, #tpu.memory_space<vmem>>, vector<1x32xf32>
    %c0_57 = arith.constant 0 : index
    %c0_58 = arith.constant 0 : index
    %165 = vector.load %arg15[%c0_57, %c0_58] : memref<1x32xf32, #tpu.memory_space<vmem>>, vector<1x32xf32>
    %cst_59 = arith.constant dense<0.000000e+00> : vector<8xf32>
    %166 = vector.multi_reduction <add>, %163, %cst_59 [1] : vector<8x32xf32> to vector<8xf32>
    %167 = vector.shape_cast %166 : vector<8xf32> to vector<8x1xf32>
    %cst_60 = arith.constant 3.200000e+01 : f32
    %168 = vector.broadcast %cst_60 : f32 to vector<8x1xf32>
    %169 = arith.divf %167, %168 : vector<8x1xf32>
    %170 = vector.broadcast %169 : vector<8x1xf32> to vector<8x32xf32>
    %171 = arith.subf %163, %170 : vector<8x32xf32>
    %172 = arith.mulf %171, %171 : vector<8x32xf32>
    %cst_61 = arith.constant dense<0.000000e+00> : vector<8xf32>
    %173 = vector.multi_reduction <add>, %172, %cst_61 [1] : vector<8x32xf32> to vector<8xf32>
    %174 = vector.shape_cast %173 : vector<8xf32> to vector<8x1xf32>
    %cst_62 = arith.constant 3.200000e+01 : f32
    %175 = vector.broadcast %cst_62 : f32 to vector<8x1xf32>
    %176 = arith.divf %174, %175 : vector<8x1xf32>
    %177 = vector.broadcast %169 : vector<8x1xf32> to vector<8x32xf32>
    %178 = arith.subf %163, %177 : vector<8x32xf32>
    %cst_63 = arith.constant 9.99999974E-6 : f32
    %179 = vector.broadcast %cst_63 : f32 to vector<8x1xf32>
    %180 = arith.addf %176, %179 : vector<8x1xf32>
    %181 = math.rsqrt %180 : vector<8x1xf32>
    %182 = vector.broadcast %181 : vector<8x1xf32> to vector<8x32xf32>
    %183 = arith.mulf %178, %182 : vector<8x32xf32>
    %184 = vector.broadcast %164 : vector<1x32xf32> to vector<8x32xf32>
    %185 = arith.mulf %183, %184 : vector<8x32xf32>
    %186 = vector.broadcast %165 : vector<1x32xf32> to vector<8x32xf32>
    %187 = arith.addf %185, %186 : vector<8x32xf32>
    %c0_64 = arith.constant 0 : index
    %c0_65 = arith.constant 0 : index
    %188 = vector.load %arg16[%c0_64, %c0_65] : memref<8x32xf32, #tpu.memory_space<vmem>>, vector<8x32xf32>
    tpu.vector_store %arg16[%c0_64, %c0_65], %187 {strides = array<i32>} : memref<8x32xf32, #tpu.memory_space<vmem>>, vector<8x32xf32>,
    return
  }
  func.func @transform_0(%arg0: i32) -> (i32, i32) {
    %c0_i32 = arith.constant 0 : i32
    %c0_i32_0 = arith.constant 0 : i32
    return %arg0, %c0_i32 : i32, i32
  }
  func.func @transform_1(%arg0: i32) -> (i32, i32) {
    %c0_i32 = arith.constant 0 : i32
    %c0_i32_0 = arith.constant 0 : i32
    %c0_i32_1 = arith.constant 0 : i32
    return %c0_i32, %c0_i32_0 : i32, i32
  }
  func.func @transform_2(%arg0: i32) -> (i32, i32) {
    %c0_i32 = arith.constant 0 : i32
    %c0_i32_0 = arith.constant 0 : i32
    %c0_i32_1 = arith.constant 0 : i32
    return %c0_i32, %c0_i32_0 : i32, i32
  }
  func.func @transform_3(%arg0: i32) -> (i32, i32) {
    %c0_i32 = arith.constant 0 : i32
    %c0_i32_0 = arith.constant 0 : i32
    %c0_i32_1 = arith.constant 0 : i32
    return %c0_i32, %c0_i32_0 : i32, i32
  }
  func.func @transform_4(%arg0: i32) -> (i32, i32) {
    %c0_i32 = arith.constant 0 : i32
    %c0_i32_0 = arith.constant 0 : i32
    %c0_i32_1 = arith.constant 0 : i32
    return %c0_i32, %c0_i32_0 : i32, i32
  }
  func.func @transform_5(%arg0: i32) -> (i32, i32) {
    %c0_i32 = arith.constant 0 : i32
    %c0_i32_0 = arith.constant 0 : i32
    %c0_i32_1 = arith.constant 0 : i32
    return %c0_i32, %c0_i32_0 : i32, i32
  }
  func.func @transform_6(%arg0: i32) -> (i32, i32) {
    %c0_i32 = arith.constant 0 : i32
    %c0_i32_0 = arith.constant 0 : i32
    %c0_i32_1 = arith.constant 0 : i32
    return %c0_i32, %c0_i32_0 : i32, i32
  }
  func.func @transform_7(%arg0: i32) -> (i32, i32) {
    %c0_i32 = arith.constant 0 : i32
    %c0_i32_0 = arith.constant 0 : i32
    %c0_i32_1 = arith.constant 0 : i32
    return %c0_i32, %c0_i32_0 : i32, i32
  }
  func.func @transform_8(%arg0: i32) -> (i32, i32) {
    %c0_i32 = arith.constant 0 : i32
    %c0_i32_0 = arith.constant 0 : i32
    %c0_i32_1 = arith.constant 0 : i32
    return %c0_i32, %c0_i32_0 : i32, i32
  }
  func.func @transform_9(%arg0: i32) -> (i32, i32, i32) {
    %c0_i32 = arith.constant 0 : i32
    %c0_i32_0 = arith.constant 0 : i32
    %c0_i32_1 = arith.constant 0 : i32
    %c0_i32_2 = arith.constant 0 : i32
    return %c0_i32, %c0_i32_0, %c0_i32_1 : i32, i32, i32
  }
  func.func @transform_10(%arg0: i32) -> (i32, i32, i32) {
    %c0_i32 = arith.constant 0 : i32
    %c0_i32_0 = arith.constant 0 : i32
    %c0_i32_1 = arith.constant 0 : i32
    %c0_i32_2 = arith.constant 0 : i32
    return %c0_i32, %c0_i32_0, %c0_i32_1 : i32, i32, i32
  }
  func.func @transform_11(%arg0: i32) -> (i32, i32, i32) {
    %c0_i32 = arith.constant 0 : i32
    %c0_i32_0 = arith.constant 0 : i32
    %c0_i32_1 = arith.constant 0 : i32
    %c0_i32_2 = arith.constant 0 : i32
    return %c0_i32, %c0_i32_0, %c0_i32_1 : i32, i32, i32
  }
  func.func @transform_12(%arg0: i32) -> (i32, i32, i32) {
    %c0_i32 = arith.constant 0 : i32
    %c0_i32_0 = arith.constant 0 : i32
    %c0_i32_1 = arith.constant 0 : i32
    %c0_i32_2 = arith.constant 0 : i32
    return %c0_i32, %c0_i32_0, %c0_i32_1 : i32, i32, i32
  }
  func.func @transform_13(%arg0: i32) -> (i32, i32) {
    %c0_i32 = arith.constant 0 : i32
    %c0_i32_0 = arith.constant 0 : i32
    %c0_i32_1 = arith.constant 0 : i32
    return %c0_i32, %c0_i32_0 : i32, i32
  }
  func.func @transform_14(%arg0: i32) -> (i32, i32) {
    %c0_i32 = arith.constant 0 : i32
    %c0_i32_0 = arith.constant 0 : i32
    %c0_i32_1 = arith.constant 0 : i32
    return %c0_i32, %c0_i32_0 : i32, i32
  }
  func.func @transform_15(%arg0: i32) -> (i32, i32) {
    %c0_i32 = arith.constant 0 : i32
    %c0_i32_0 = arith.constant 0 : i32
    return %arg0, %c0_i32 : i32, i32
  }
}

</mosaic_0001>

<llo_original>
// kernel: tpu_custom_call.1
$region0: #{tpu_custom_call.1}
  #allocation0 [shape = 'u32[]', space=smem, size = 0x4, offset = 0x4, fixed_abs, tag = 'smem constant byte address 0x4 - core index']
  #allocation1 [shape = 'u32[144,128]{1,0:T(1,128)}', space=vmem, size = 0x12000, scoped, tag = 'internal scratch']
  #allocation2 [shape = 'f32[8,32]{1,0:T(8,128)}', space=vmem, size = 0x1000, scoped, tag = 'scratch operand']
  %s0 = inlined_call_operand.vmem [shape: f32[16,32], index: 0, kind: input, shape index: {}]
  %s1 = inlined_call_operand.vmem [shape: bf16[32,96], index: 1, kind: input, shape index: {}]
  %s2 = inlined_call_operand.vmem [shape: f32[1,96], index: 2, kind: input, shape index: {}]
  %s3 = inlined_call_operand.vmem [shape: bf16[32,32], index: 3, kind: input, shape index: {}]
  %s4 = inlined_call_operand.vmem [shape: f32[1,32], index: 4, kind: input, shape index: {}]
  %s5 = inlined_call_operand.vmem [shape: f32[1,32], index: 5, kind: input, shape index: {}]
  %s6 = inlined_call_operand.vmem [shape: f32[1,32], index: 6, kind: input, shape index: {}]
  %s7 = inlined_call_operand.vmem [shape: f32[32,4], index: 7, kind: input, shape index: {}]
  %s8 = inlined_call_operand.vmem [shape: f32[1,4], index: 8, kind: input, shape index: {}]
  %s9 = inlined_call_operand.vmem [shape: bf16[4,32,64], index: 9, kind: input, shape index: {}]
  %s10 = inlined_call_operand.vmem [shape: f32[4,1,64], index: 10, kind: input, shape index: {}]
  %s11 = inlined_call_operand.vmem [shape: bf16[4,64,32], index: 11, kind: input, shape index: {}]
  %s12 = inlined_call_operand.vmem [shape: f32[4,1,32], index: 12, kind: input, shape index: {}]
  %s13 = inlined_call_operand.vmem [shape: f32[1,32], index: 13, kind: input, shape index: {}]
  %s14 = inlined_call_operand.vmem [shape: f32[1,32], index: 14, kind: input, shape index: {}]
  %s15 = inlined_call_operand.hbm [shape: f32[16,32], index: 15, kind: output, shape index: {}]
  %s16 = sld [smem:[#allocation0]]
  $region109: #{tpu_custom_call.1} parent=0
    _
  %s18 = ssub.s32 1, %s16
  %s19 = scalar_select 0, %s18, %s16
  $region1: #{tpu_custom_call.1} parent=0
    #allocation3 [shape = 'u8[8192]{0}', space=vmem, size = 0x2000, scoped, tag = 'output window, operand 0']
    #allocation4 [shape = 's32[2]{0}', space=sflag, size = 0x8, scoped, tag = 'scoped memory for tpu_custom_call.1']
    %20 = vsyncpa [#allocation4], 0
    %s21 = scalar_lea.sflag [#allocation4], 1
    %22 = vsyncpa %s21, 0
    loop: start=0, step=1, limit=4
    $region2: #{tpu_custom_call.1} parent=1 // loop_pre_header
      _
    $region3: #{tpu_custom_call.1} parent=1 // loop_header
      %s24 = sphi 0, %s28
      %p25 = scmp.ge.s32.totalorder %s24, 4
      %s34 = sphi 0, %s36
      %s37 = sphi 0, %s34
      %s38 = sphi 0, %s37
      %s54 = sphi 0, %s38
      %s58 = sphi 0, %s58
      %s60 = sphi 0, %s58
      %s61 = sphi 0, %s60
      %s75 = sphi 0, %s61
      %s79 = sphi 0, %s79
      %s81 = sphi 0, %s79
      %s82 = sphi 0, %s81
      %s96 = sphi 0, %s82
      %s100 = sphi 0, %s100
      %s102 = sphi 0, %s100
      %s103 = sphi 0, %s102
      %s117 = sphi 0, %s103
      %s121 = sphi 0, %s121
      %s123 = sphi 0, %s121
      %s124 = sphi 0, %s123
      %s138 = sphi 0, %s124
      %s142 = sphi 0, %s142
      %s144 = sphi 0, %s142
      %s145 = sphi 0, %s144
      %s159 = sphi 0, %s145
      %s163 = sphi 0, %s163
      %s165 = sphi 0, %s163
      %s166 = sphi 0, %s165
      %s180 = sphi 0, %s166
      %s184 = sphi 0, %s184
      %s186 = sphi 0, %s184
      %s187 = sphi 0, %s186
      %s201 = sphi 0, %s187
      %s205 = sphi 0, %s205
      %s207 = sphi 0, %s205
      %s208 = sphi 0, %s207
      %s222 = sphi 0, %s208
      %s226 = sphi 0, %s226
      %s228 = sphi 0, %s226
      %s229 = sphi 0, %s228
      %s243 = sphi 0, %s229
      %s247 = sphi 0, %s247
      %s249 = sphi 0, %s247
      %s250 = sphi 0, %s249
      %s264 = sphi 0, %s250
      %s268 = sphi 0, %s268
      %s270 = sphi 0, %s268
      %s271 = sphi 0, %s270
      %s285 = sphi 0, %s271
      %s289 = sphi 0, %s289
      %s291 = sphi 0, %s289
      %s292 = sphi 0, %s291
      %s306 = sphi 0, %s292
      %s310 = sphi 0, %s310
      %s312 = sphi 0, %s310
      %s313 = sphi 0, %s312
      %s327 = sphi 0, %s313
      %s331 = sphi 0, %s331
      %s333 = sphi 0, %s331
      %s334 = sphi 0, %s333
      %s348 = sphi 0, %s334
      %s354 = sphi 0, %s356
      %s357 = sphi 0, %s354
      %s358 = sphi 0, %s357
      %s374 = sphi 0, %s358
    $region4: #{tpu_custom_call.1} parent=1 // loop_header_branch
      %27 = sbr.rel (%p25) target = $region8
    $region5: #{tpu_custom_call.1} parent=1 // loop_body
      %s29 = ssub.s32 %s24, 1
      %s30 = ssub.s32 %s24, 2
      %s31 = sadd.s32 %s24, 1
      %s32 = ssub.s32 %s24, %s31
      %p33 = scmp.eq.s32.totalorder %s32, 0
      %s35 = sadd.s32 %s34, 1
      %s36 = scalar_select %p33, %s34, %s35
      %p39 = pneg %p33
      %p40 = scmp.eq.s32.totalorder %s24, 1
      %p41 = por %p39, %p40
      %p42 = scmp.ne.s32.totalorder %s34, %s37
      %p43 = scmp.eq.s32.totalorder %s24, 0
      %p44 = por %p42, %p43
      %p45 = scmp.ne.s32.totalorder %s34, %s37
      %p46 = scmp.eq.s32.totalorder %s29, 1
      %p47 = por %p45, %p46
      %p48 = scmp.ne.s32.totalorder %s37, %s38
      %p49 = scmp.eq.s32.totalorder %s29, 0
      %p50 = por %p48, %p49
      %p51 = scmp.ne.s32.totalorder %s37, %s38
      %p52 = scmp.eq.s32.totalorder %s30, 1
      %p53 = por %p51, %p52
      %p55 = scmp.ne.s32.totalorder %s38, %s54
      %p56 = scmp.eq.s32.totalorder %s30, 0
      %p57 = por %p55, %p56
      %s59 = sadd.s32 %s58, 1
      %p62 = scmp.eq.s32.totalorder %s24, 1
      %p63 = scmp.ne.s32.totalorder %s58, %s60
      %p64 = scmp.eq.s32.totalorder %s24, 0
      %p65 = por %p63, %p64
      %p66 = scmp.ne.s32.totalorder %s58, %s60
      %p67 = scmp.eq.s32.totalorder %s29, 1
      %p68 = por %p66, %p67
      %p69 = scmp.ne.s32.totalorder %s60, %s61
      %p70 = scmp.eq.s32.totalorder %s29, 0
      %p71 = por %p69, %p70
      %p72 = scmp.ne.s32.totalorder %s60, %s61
      %p73 = scmp.eq.s32.totalorder %s30, 1
      %p74 = por %p72, %p73
      %p76 = scmp.ne.s32.totalorder %s61, %s75
      %p77 = scmp.eq.s32.totalorder %s30, 0
      %p78 = por %p76, %p77
      %s80 = sadd.s32 %s79, 1
      %p83 = scmp.eq.s32.totalorder %s24, 1
      %p84 = scmp.ne.s32.totalorder %s79, %s81
      %p85 = scmp.eq.s32.totalorder %s24, 0
      %p86 = por %p84, %p85
      %p87 = scmp.ne.s32.totalorder %s79, %s81
      %p88 = scmp.eq.s32.totalorder %s29, 1
      %p89 = por %p87, %p88
      %p90 = scmp.ne.s32.totalorder %s81, %s82
      %p91 = scmp.eq.s32.totalorder %s29, 0
      %p92 = por %p90, %p91
      %p93 = scmp.ne.s32.totalorder %s81, %s82
      %p94 = scmp.eq.s32.totalorder %s30, 1
      %p95 = por %p93, %p94
      %p97 = scmp.ne.s32.totalorder %s82, %s96
      %p98 = scmp.eq.s32.totalorder %s30, 0
      %p99 = por %p97, %p98
      %s101 = sadd.s32 %s100, 1
      %p104 = scmp.eq.s32.totalorder %s24, 1
      %p105 = scmp.ne.s32.totalorder %s100, %s102
      %p106 = scmp.eq.s32.totalorder %s24, 0
      %p107 = por %p105, %p106
      %p108 = scmp.ne.s32.totalorder %s100, %s102
      %p109 = scmp.eq.s32.totalorder %s29, 1
      %p110 = por %p108, %p109
      %p111 = scmp.ne.s32.totalorder %s102, %s103
      %p112 = scmp.eq.s32.totalorder %s29, 0
      %p113 = por %p111, %p112
      %p114 = scmp.ne.s32.totalorder %s102, %s103
      %p115 = scmp.eq.s32.totalorder %s30, 1
      %p116 = por %p114, %p115
      %p118 = scmp.ne.s32.totalorder %s103, %s117
      %p119 = scmp.eq.s32.totalorder %s30, 0
      %p120 = por %p118, %p119
      %s122 = sadd.s32 %s121, 1
      %p125 = scmp.eq.s32.totalorder %s24, 1
      %p126 = scmp.ne.s32.totalorder %s121, %s123
      %p127 = scmp.eq.s32.totalorder %s24, 0
      %p128 = por %p126, %p127
      %p129 = scmp.ne.s32.totalorder %s121, %s123
      %p130 = scmp.eq.s32.totalorder %s29, 1
      %p131 = por %p129, %p130
      %p132 = scmp.ne.s32.totalorder %s123, %s124
      %p133 = scmp.eq.s32.totalorder %s29, 0
      %p134 = por %p132, %p133
      %p135 = scmp.ne.s32.totalorder %s123, %s124
      %p136 = scmp.eq.s32.totalorder %s30, 1
      %p137 = por %p135, %p136
      %p139 = scmp.ne.s32.totalorder %s124, %s138
      %p140 = scmp.eq.s32.totalorder %s30, 0
      %p141 = por %p139, %p140
      %s143 = sadd.s32 %s142, 1
      %p146 = scmp.eq.s32.totalorder %s24, 1
      %p147 = scmp.ne.s32.totalorder %s142, %s144
      %p148 = scmp.eq.s32.totalorder %s24, 0
      %p149 = por %p147, %p148
      %p150 = scmp.ne.s32.totalorder %s142, %s144
      %p151 = scmp.eq.s32.totalorder %s29, 1
      %p152 = por %p150, %p151
      %p153 = scmp.ne.s32.totalorder %s144, %s145
      %p154 = scmp.eq.s32.totalorder %s29, 0
      %p155 = por %p153, %p154
      %p156 = scmp.ne.s32.totalorder %s144, %s145
      %p157 = scmp.eq.s32.totalorder %s30, 1
      %p158 = por %p156, %p157
      %p160 = scmp.ne.s32.totalorder %s145, %s159
      %p161 = scmp.eq.s32.totalorder %s30, 0
      %p162 = por %p160, %p161
      %s164 = sadd.s32 %s163, 1
      %p167 = scmp.eq.s32.totalorder %s24, 1
      %p168 = scmp.ne.s32.totalorder %s163, %s165
      %p169 = scmp.eq.s32.totalorder %s24, 0
      %p170 = por %p168, %p169
      %p171 = scmp.ne.s32.totalorder %s163, %s165
      %p172 = scmp.eq.s32.totalorder %s29, 1
      %p173 = por %p171, %p172
      %p174 = scmp.ne.s32.totalorder %s165, %s166
      %p175 = scmp.eq.s32.totalorder %s29, 0
      %p176 = por %p174, %p175
      %p177 = scmp.ne.s32.totalorder %s165, %s166
      %p178 = scmp.eq.s32.totalorder %s30, 1
      %p179 = por %p177, %p178
      %p181 = scmp.ne.s32.totalorder %s166, %s180
      %p182 = scmp.eq.s32.totalorder %s30, 0
      %p183 = por %p181, %p182
      %s185 = sadd.s32 %s184, 1
      %p188 = scmp.eq.s32.totalorder %s24, 1
      %p189 = scmp.ne.s32.totalorder %s184, %s186
      %p190 = scmp.eq.s32.totalorder %s24, 0
      %p191 = por %p189, %p190
      %p192 = scmp.ne.s32.totalorder %s184, %s186
      %p193 = scmp.eq.s32.totalorder %s29, 1
      %p194 = por %p192, %p193
      %p195 = scmp.ne.s32.totalorder %s186, %s187
      %p196 = scmp.eq.s32.totalorder %s29, 0
      %p197 = por %p195, %p196
      %p198 = scmp.ne.s32.totalorder %s186, %s187
      %p199 = scmp.eq.s32.totalorder %s30, 1
      %p200 = por %p198, %p199
      %p202 = scmp.ne.s32.totalorder %s187, %s201
      %p203 = scmp.eq.s32.totalorder %s30, 0
      %p204 = por %p202, %p203
      %s206 = sadd.s32 %s205, 1
      %p209 = scmp.eq.s32.totalorder %s24, 1
      %p210 = scmp.ne.s32.totalorder %s205, %s207
      %p211 = scmp.eq.s32.totalorder %s24, 0
      %p212 = por %p210, %p211
      %p213 = scmp.ne.s32.totalorder %s205, %s207
      %p214 = scmp.eq.s32.totalorder %s29, 1
      %p215 = por %p213, %p214
      %p216 = scmp.ne.s32.totalorder %s207, %s208
      %p217 = scmp.eq.s32.totalorder %s29, 0
      %p218 = por %p216, %p217
      %p219 = scmp.ne.s32.totalorder %s207, %s208
      %p220 = scmp.eq.s32.totalorder %s30, 1
      %p221 = por %p219, %p220
      %p223 = scmp.ne.s32.totalorder %s208, %s222
      %p224 = scmp.eq.s32.totalorder %s30, 0
      %p225 = por %p223, %p224
      %s227 = sadd.s32 %s226, 1
      %p230 = scmp.eq.s32.totalorder %s24, 1
      %p231 = scmp.ne.s32.totalorder %s226, %s228
      %p232 = scmp.eq.s32.totalorder %s24, 0
      %p233 = por %p231, %p232
      %p234 = scmp.ne.s32.totalorder %s226, %s228
      %p235 = scmp.eq.s32.totalorder %s29, 1
      %p236 = por %p234, %p235
      %p237 = scmp.ne.s32.totalorder %s228, %s229
      %p238 = scmp.eq.s32.totalorder %s29, 0
      %p239 = por %p237, %p238
      %p240 = scmp.ne.s32.totalorder %s228, %s229
      %p241 = scmp.eq.s32.totalorder %s30, 1
      %p242 = por %p240, %p241
      %p244 = scmp.ne.s32.totalorder %s229, %s243
      %p245 = scmp.eq.s32.totalorder %s30, 0
      %p246 = por %p244, %p245
      %s248 = sadd.s32 %s247, 1
      %p251 = scmp.eq.s32.totalorder %s24, 1
      %p252 = scmp.ne.s32.totalorder %s247, %s249
      %p253 = scmp.eq.s32.totalorder %s24, 0
      %p254 = por %p252, %p253
      %p255 = scmp.ne.s32.totalorder %s247, %s249
      %p256 = scmp.eq.s32.totalorder %s29, 1
      %p257 = por %p255, %p256
      %p258 = scmp.ne.s32.totalorder %s249, %s250
      %p259 = scmp.eq.s32.totalorder %s29, 0
      %p260 = por %p258, %p259
      %p261 = scmp.ne.s32.totalorder %s249, %s250
      %p262 = scmp.eq.s32.totalorder %s30, 1
      %p263 = por %p261, %p262
      %p265 = scmp.ne.s32.totalorder %s250, %s264
      %p266 = scmp.eq.s32.totalorder %s30, 0
      %p267 = por %p265, %p266
      %s269 = sadd.s32 %s268, 1
      %p272 = scmp.eq.s32.totalorder %s24, 1
      %p273 = scmp.ne.s32.totalorder %s268, %s270
      %p274 = scmp.eq.s32.totalorder %s24, 0
      %p275 = por %p273, %p274
      %p276 = scmp.ne.s32.totalorder %s268, %s270
      %p277 = scmp.eq.s32.totalorder %s29, 1
      %p278 = por %p276, %p277
      %p279 = scmp.ne.s32.totalorder %s270, %s271
      %p280 = scmp.eq.s32.totalorder %s29, 0
      %p281 = por %p279, %p280
      %p282 = scmp.ne.s32.totalorder %s270, %s271
      %p283 = scmp.eq.s32.totalorder %s30, 1
      %p284 = por %p282, %p283
      %p286 = scmp.ne.s32.totalorder %s271, %s285
      %p287 = scmp.eq.s32.totalorder %s30, 0
      %p288 = por %p286, %p287
      %s290 = sadd.s32 %s289, 1
      %p293 = scmp.eq.s32.totalorder %s24, 1
      %p294 = scmp.ne.s32.totalorder %s289, %s291
      %p295 = scmp.eq.s32.totalorder %s24, 0
      %p296 = por %p294, %p295
      %p297 = scmp.ne.s32.totalorder %s289, %s291
      %p298 = scmp.eq.s32.totalorder %s29, 1
      %p299 = por %p297, %p298
      %p300 = scmp.ne.s32.totalorder %s291, %s292
      %p301 = scmp.eq.s32.totalorder %s29, 0
      %p302 = por %p300, %p301
      %p303 = scmp.ne.s32.totalorder %s291, %s292
      %p304 = scmp.eq.s32.totalorder %s30, 1
      %p305 = por %p303, %p304
      %p307 = scmp.ne.s32.totalorder %s292, %s306
      %p308 = scmp.eq.s32.totalorder %s30, 0
      %p309 = por %p307, %p308
      %s311 = sadd.s32 %s310, 1
      %p314 = scmp.eq.s32.totalorder %s24, 1
      %p315 = scmp.ne.s32.totalorder %s310, %s312
      %p316 = scmp.eq.s32.totalorder %s24, 0
      %p317 = por %p315, %p316
      %p318 = scmp.ne.s32.totalorder %s310, %s312
      %p319 = scmp.eq.s32.totalorder %s29, 1
      %p320 = por %p318, %p319
      %p321 = scmp.ne.s32.totalorder %s312, %s313
      %p322 = scmp.eq.s32.totalorder %s29, 0
      %p323 = por %p321, %p322
      %p324 = scmp.ne.s32.totalorder %s312, %s313
      %p325 = scmp.eq.s32.totalorder %s30, 1
      %p326 = por %p324, %p325
      %p328 = scmp.ne.s32.totalorder %s313, %s327
      %p329 = scmp.eq.s32.totalorder %s30, 0
      %p330 = por %p328, %p329
      %s332 = sadd.s32 %s331, 1
      %p335 = scmp.eq.s32.totalorder %s24, 1
      %p336 = scmp.ne.s32.totalorder %s331, %s333
      %p337 = scmp.eq.s32.totalorder %s24, 0
      %p338 = por %p336, %p337
      %p339 = scmp.ne.s32.totalorder %s331, %s333
      %p340 = scmp.eq.s32.totalorder %s29, 1
      %p341 = por %p339, %p340
      %p342 = scmp.ne.s32.totalorder %s333, %s334
      %p343 = scmp.eq.s32.totalorder %s29, 0
      %p344 = por %p342, %p343
      %p345 = scmp.ne.s32.totalorder %s333, %s334
      %p346 = scmp.eq.s32.totalorder %s30, 1
      %p347 = por %p345, %p346
      %p349 = scmp.ne.s32.totalorder %s334, %s348
      %p350 = scmp.eq.s32.totalorder %s30, 0
      %p351 = por %p349, %p350
      %s352 = ssub.s32 %s24, %s31
      %p353 = scmp.eq.s32.totalorder %s352, 0
      %s355 = sadd.s32 %s354, 1
      %s356 = scalar_select %p353, %s354, %s355
      %p359 = pneg %p353
      %p360 = scmp.eq.s32.totalorder %s24, 1
      %p361 = por %p359, %p360
      %p362 = scmp.ne.s32.totalorder %s354, %s357
      %p363 = scmp.eq.s32.totalorder %s24, 0
      %p364 = por %p362, %p363
      %p365 = scmp.ne.s32.totalorder %s354, %s357
      %p366 = scmp.eq.s32.totalorder %s29, 1
      %p367 = por %p365, %p366
      %p368 = scmp.ne.s32.totalorder %s357, %s358
      %p369 = scmp.eq.s32.totalorder %s29, 0
      %p370 = por %p368, %p369
      %p371 = scmp.ne.s32.totalorder %s357, %s358
      %p372 = scmp.eq.s32.totalorder %s30, 1
      %p373 = por %p371, %p372
      %p375 = scmp.ne.s32.totalorder %s358, %s374
      %p376 = scmp.eq.s32.totalorder %s30, 0
      %p377 = por %p375, %p376
      %p378 = scmp.le.s32.totalorder 1, %s24
      %p379 = scmp.lt.s32.totalorder %s24, 3
      %p380 = pnand %p378, %p379
      %p381 = pneg %p380
      // Predicated region
      $region9: #{tpu_custom_call.1} parent=5 // pred_check
        _
      $region10: #{tpu_custom_call.1} parent=5 // pred_check_branch
        %383 = sbr.rel (%p380) target = $region12
      $region11: #{tpu_custom_call.1} parent=5 // pred_region
        %s384 = ssub.s32 %s24, 1
        // Predicated region
        $region13: #{tpu_custom_call.1} parent=11 // pred_check
          %p385 = pneg %p71
        $region14: #{tpu_custom_call.1} parent=11 // pred_check_branch
          %387 = sbr.rel (%p385) target = $region16
        $region15: #{tpu_custom_call.1} parent=11 // pred_region
          _
        $region16: #{tpu_custom_call.1} parent=11 // pred_fallthru
          _
        // Predicated region
        $region17: #{tpu_custom_call.1} parent=11 // pred_check
          %p388 = pneg %p92
        $region18: #{tpu_custom_call.1} parent=11 // pred_check_branch
          %390 = sbr.rel (%p388) target = $region20
        $region19: #{tpu_custom_call.1} parent=11 // pred_region
          _
        $region20: #{tpu_custom_call.1} parent=11 // pred_fallthru
          _
        // Predicated region
        $region21: #{tpu_custom_call.1} parent=11 // pred_check
          %p391 = pneg %p113
        $region22: #{tpu_custom_call.1} parent=11 // pred_check_branch
          %393 = sbr.rel (%p391) target = $region24
        $region23: #{tpu_custom_call.1} parent=11 // pred_region
          _
        $region24: #{tpu_custom_call.1} parent=11 // pred_fallthru
          _
        // Predicated region
        $region25: #{tpu_custom_call.1} parent=11 // pred_check
          %p394 = pneg %p134
        $region26: #{tpu_custom_call.1} parent=11 // pred_check_branch
          %396 = sbr.rel (%p394) target = $region28
        $region27: #{tpu_custom_call.1} parent=11 // pred_region
          _
        $region28: #{tpu_custom_call.1} parent=11 // pred_fallthru
          _
        // Predicated region
        $region29: #{tpu_custom_call.1} parent=11 // pred_check
          %p397 = pneg %p155
        $region30: #{tpu_custom_call.1} parent=11 // pred_check_branch
          %399 = sbr.rel (%p397) target = $region32
        $region31: #{tpu_custom_call.1} parent=11 // pred_region
          _
        $region32: #{tpu_custom_call.1} parent=11 // pred_fallthru
          _
        // Predicated region
        $region33: #{tpu_custom_call.1} parent=11 // pred_check
          %p400 = pneg %p176
        $region34: #{tpu_custom_call.1} parent=11 // pred_check_branch
          %402 = sbr.rel (%p400) target = $region36
        $region35: #{tpu_custom_call.1} parent=11 // pred_region
          _
        $region36: #{tpu_custom_call.1} parent=11 // pred_fallthru
          _
        // Predicated region
        $region37: #{tpu_custom_call.1} parent=11 // pred_check
          %p403 = pneg %p197
        $region38: #{tpu_custom_call.1} parent=11 // pred_check_branch
          %405 = sbr.rel (%p403) target = $region40
        $region39: #{tpu_custom_call.1} parent=11 // pred_region
          _
        $region40: #{tpu_custom_call.1} parent=11 // pred_fallthru
          _
        // Predicated region
        $region41: #{tpu_custom_call.1} parent=11 // pred_check
          %p406 = pneg %p218
        $region42: #{tpu_custom_call.1} parent=11 // pred_check_branch
          %408 = sbr.rel (%p406) target = $region44
        $region43: #{tpu_custom_call.1} parent=11 // pred_region
          _
        $region44: #{tpu_custom_call.1} parent=11 // pred_fallthru
          _
        // Predicated region
        $region45: #{tpu_custom_call.1} parent=11 // pred_check
          %p409 = pneg %p239
        $region46: #{tpu_custom_call.1} parent=11 // pred_check_branch
          %411 = sbr.rel (%p409) target = $region48
        $region47: #{tpu_custom_call.1} parent=11 // pred_region
          _
        $region48: #{tpu_custom_call.1} parent=11 // pred_fallthru
          _
        // Predicated region
        $region49: #{tpu_custom_call.1} parent=11 // pred_check
          %p412 = pneg %p260
        $region50: #{tpu_custom_call.1} parent=11 // pred_check_branch
          %414 = sbr.rel (%p412) target = $region52
        $region51: #{tpu_custom_call.1} parent=11 // pred_region
          _
        $region52: #{tpu_custom_call.1} parent=11 // pred_fallthru
          _
        // Predicated region
        $region53: #{tpu_custom_call.1} parent=11 // pred_check
          %p415 = pneg %p281
        $region54: #{tpu_custom_call.1} parent=11 // pred_check_branch
          %417 = sbr.rel (%p415) target = $region56
        $region55: #{tpu_custom_call.1} parent=11 // pred_region
          _
        $region56: #{tpu_custom_call.1} parent=11 // pred_fallthru
          _
        // Predicated region
        $region57: #{tpu_custom_call.1} parent=11 // pred_check
          %p418 = pneg %p302
        $region58: #{tpu_custom_call.1} parent=11 // pred_check_branch
          %420 = sbr.rel (%p418) target = $region60
        $region59: #{tpu_custom_call.1} parent=11 // pred_region
          _
        $region60: #{tpu_custom_call.1} parent=11 // pred_fallthru
          _
        // Predicated region
        $region61: #{tpu_custom_call.1} parent=11 // pred_check
          %p421 = pneg %p323
        $region62: #{tpu_custom_call.1} parent=11 // pred_check_branch
          %423 = sbr.rel (%p421) target = $region64
        $region63: #{tpu_custom_call.1} parent=11 // pred_region
          _
        $region64: #{tpu_custom_call.1} parent=11 // pred_fallthru
          _
        // Predicated region
        $region65: #{tpu_custom_call.1} parent=11 // pred_check
          %p424 = pneg %p344
        $region66: #{tpu_custom_call.1} parent=11 // pred_check_branch
          %426 = sbr.rel (%p424) target = $region68
        $region67: #{tpu_custom_call.1} parent=11 // pred_region
          _
        $region68: #{tpu_custom_call.1} parent=11 // pred_fallthru
          _
      $region12: #{tpu_custom_call.1} parent=5 // pred_fallthru
        _
      %p427 = scmp.lt.s32.totalorder %s24, 2
      // Predicated region
      $region69: #{tpu_custom_call.1} parent=5 // pred_check
        %p428 = pneg %p427
      $region70: #{tpu_custom_call.1} parent=5 // pred_check_branch
        %430 = sbr.rel (%p428) target = $region72
      $region71: #{tpu_custom_call.1} parent=5 // pred_region
        // Predicated region
        $region73: #{tpu_custom_call.1} parent=71 // pred_check
          %p431 = pneg %p44
        $region74: #{tpu_custom_call.1} parent=71 // pred_check_branch
          %433 = sbr.rel (%p431) target = $region76
        $region75: #{tpu_custom_call.1} parent=71 // pred_region
          %p434 = scmp.lt.s32.totalorder %s24, 1
          %s435 = scalar_select %p434, %s24, 1
          %s436 = smul.addr %s435, 8
          %s437 = scalar_lea.vmem %s0, %s436
        $region76: #{tpu_custom_call.1} parent=71 // pred_fallthru
          _
      $region72: #{tpu_custom_call.1} parent=5 // pred_fallthru
        _
      %p438 = scmp.le.s32.totalorder 1, %s24
      %p439 = scmp.lt.s32.totalorder %s24, 3
      %p440 = pnand %p438, %p439
      %p441 = pneg %p440
      // Predicated region
      $region77: #{tpu_custom_call.1} parent=5 // pred_check
        _
      $region78: #{tpu_custom_call.1} parent=5 // pred_check_branch
        %443 = sbr.rel (%p440) target = $region80
      $region79: #{tpu_custom_call.1} parent=5 // pred_region
        %s444 = ssub.s32 %s24, 1
        %p445 = scmp.lt.s32.totalorder %s29, 1
        %s446 = scalar_select %p445, %s29, 1
        %s447 = smul.addr %s446, 8
        %s448 = scalar_lea.vmem %s0, %s447
        %p449 = pneg %p50
        %p450 = pneg %p47
        %p451 = pneg %p71
        %p452 = pneg %p68
        %p453 = pneg %p92
        %p454 = pneg %p89
        %p455 = pneg %p113
        %p456 = pneg %p110
        %p457 = pneg %p134
        %p458 = pneg %p131
        %p459 = pneg %p155
        %p460 = pneg %p152
        %p461 = pneg %p176
        %p462 = pneg %p173
        %p463 = pneg %p197
        %p464 = pneg %p194
        %p465 = pneg %p218
        %p466 = pneg %p215
        %p467 = pneg %p239
        %p468 = pneg %p236
        %p469 = pneg %p260
        %p470 = pneg %p257
        %p471 = pneg %p281
        %p472 = pneg %p278
        %p473 = pneg %p302
        %p474 = pneg %p299
        %p475 = pneg %p323
        %p476 = pneg %p320
        %p477 = pneg %p344
        %p478 = pneg %p341
        %p479 = pneg %p370
        %p480 = pneg %p367
        %s481 = sand.u32 %s357, 1
        %s482 = scalar_lea.sflag [#allocation4], %s481
        %s483 = sand.u32 %s357, 1
        %s484 = smul.addr %s483, 8
        %s485 = scalar_lea.vmem [#allocation3], %s484
        %p486 = scmp.lt.s32.totalorder %s29, 1
        %s487 = scalar_select %p486, %s29, 1
        %s488 = smul.addr %s487, 8
        %s489 = scalar_lea.vmem %s0, %s488
        %v491 = vld [vmem:[%s489] sm:$0xff]
        %v492 = vpack.c.bf16 %v491, %v491
        %v493 = vld [vmem:[%s1] sm:$0xf]
        %v494 = vld [vmem:[%s1 + $0x4] sm:$0xf]
        %v495 = vld [vmem:[%s1 + $0x8] sm:$0xf]
        %v496 = vld [vmem:[%s1 + $0xc] sm:$0xf]
        %v497 = vld [vmem:[%s2] sm:$0x1]
        %v499 = vlaneseq
        %v500 = vshrl.u32 %v499, 7
        %v501 = vsub.s32 0, %v500
        %v502 = vrot.slane %v497, %v501
        %v508 = vunpack.c.l.b16 %v493
        %v509 = vunpack.c.l.b16 %v494
        %v510 = vunpack.c.l.b16 %v495
        %v511 = vunpack.c.l.b16 %v496
        %v512 = vpack.c.b16 %v509, %v508
        %v513 = vpack.c.b16 %v511, %v510
        %vm516 = vcmask 261120
        %v518 = vsel %vm516, %v492, 0
        %520 = vmatprep.subr.bf16.mxu0 0
        %521 = vmatpush1.bf16.msra.mxu0 %v512
        %522 = vmatprep.subr.bf16.mxu0 0
        %523 = vmatpush1.bf16.msra.mxu0 %v513
        %524 = vmatprep.subr.bf16.mxu0 0
        %525 = vmatpush1.bf16.msra.mxu0 0
        %526 = vmatprep.subr.bf16.mxu0 0
        %527 = vmatpush1.bf16.msra.mxu0 0
        %528 = vmatprep.subr.bf16.mxu0 0
        %529 = vmatpush1.bf16.msra.mxu0 0
        %530 = vmatprep.subr.bf16.mxu0 0
        %531 = vmatpush1.bf16.msra.mxu0 0
        %532 = vmatprep.subr.bf16.mxu0 0
        %533 = vmatpush1.bf16.msra.mxu0 0
        %534 = vmatprep.subr.bf16.mxu0 0
        %535 = vmatpush1.bf16.msra.mxu0 0
        %536 = vmatprep.subr.bf16.mxu0 0
        %537 = vmatpush1.bf16.msra.mxu0 0
        %538 = vmatprep.subr.bf16.mxu0 0
        %539 = vmatpush1.bf16.msra.mxu0 0
        %540 = vmatprep.subr.bf16.mxu0 0
        %541 = vmatpush1.bf16.msra.mxu0 0
        %542 = vmatprep.subr.bf16.mxu0 0
        %543 = vmatpush1.bf16.msra.mxu0 0
        %544 = vmatprep.subr.bf16.mxu0 0
        %545 = vmatpush1.bf16.msra.mxu0 0
        %546 = vmatprep.subr.bf16.mxu0 0
        %547 = vmatpush1.bf16.msra.mxu0 0
        %548 = vmatprep.subr.bf16.mxu0 0
        %549 = vmatpush1.bf16.msra.mxu0 0
        %550 = vmatprep.subr.bf16.mxu0 0
        %551 = vmatpush1.bf16.msra.mxu0 0
        %552 = vmatprep.mubr.bf16.mxu0 0
        %553 = vmatmul.mubr.bf16.gmra.mrb[0].mxu0 %v518
        %v554 = vpop.f32.mrb[0].mxu0
        %v555 = vadd.f32 %v502, %v554
        %v556 = vpop.f32.mrb[0].mxu0
        %v557 = vpop.f32.mrb[0].mxu0
        %v558 = vpop.f32.mrb[0].mxu0
        %559 = vdwg.mxu0
        %561 = vrot.lane.b32.xlu0 %v555, 120
        %v562 = vpop.permute.xlu0 %561
        %564 = vrot.lane.b32.xlu0 %v555, 112
        %v565 = vpop.permute.xlu0 %564
        %567 = vrot.lane.b32.xlu0 %v555, 104
        %v568 = vpop.permute.xlu0 %567
        %v570 = vpack.c.bf16 %v555, %v555
        %v571 = vpack.c.bf16 %v562, %v562
        %v572 = vpack.c.bf16 %v565, %v565
        %v573 = vpack.c.bf16 %v568, %v568
        %575 = vrot.lane.b32.xlu0 %v570, 96
        %v576 = vpop.permute.xlu0 %575
        %vm577 = vcmask 64512
        %v579 = vsel %vm577, %v570, 0
        %v582 = vsel %vm577, %v576, 0
        %584 = vmatprep.subr.bf16.mxu0 0
        %585 = vmatpush1.bf16.xpose.msra.mxu0 %v582
        %586 = vmatprep.subr.bf16.mxu0 0
        %587 = vmatpush1.bf16.xpose.msra.mxu0 0
        %588 = vmatprep.subr.bf16.mxu0 0
        %589 = vmatpush1.bf16.xpose.msra.mxu0 0
        %590 = vmatprep.subr.bf16.mxu0 0
        %591 = vmatpush1.bf16.xpose.msra.mxu0 0
        %592 = vmatprep.subr.bf16.mxu0 0
        %593 = vmatpush1.bf16.xpose.msra.mxu0 0
        %594 = vmatprep.subr.bf16.mxu0 0
        %595 = vmatpush1.bf16.xpose.msra.mxu0 0
        %596 = vmatprep.subr.bf16.mxu0 0
        %597 = vmatpush1.bf16.xpose.msra.mxu0 0
        %598 = vmatprep.subr.bf16.mxu0 0
        %599 = vmatpush1.bf16.xpose.msra.mxu0 0
        %600 = vmatprep.subr.bf16.mxu0 0
        %601 = vmatpush1.bf16.xpose.msra.mxu0 0
        %602 = vmatprep.subr.bf16.mxu0 0
        %603 = vmatpush1.bf16.xpose.msra.mxu0 0
        %604 = vmatprep.subr.bf16.mxu0 0
        %605 = vmatpush1.bf16.xpose.msra.mxu0 0
        %606 = vmatprep.subr.bf16.mxu0 0
        %607 = vmatpush1.bf16.xpose.msra.mxu0 0
        %608 = vmatprep.subr.bf16.mxu0 0
        %609 = vmatpush1.bf16.xpose.msra.mxu0 0
        %610 = vmatprep.subr.bf16.mxu0 0
        %611 = vmatpush1.bf16.xpose.msra.mxu0 0
        %612 = vmatprep.subr.bf16.mxu0 0
        %613 = vmatpush1.bf16.xpose.msra.mxu0 0
        %614 = vmatprep.subr.bf16.mxu0 0
        %615 = vmatpush1.bf16.xpose.msra.mxu0 0
        %616 = vmatprep.mubr.bf16.mxu0 0
        %617 = vmatmul.mubr.bf16.gmra.mrb[0].mxu0 %v579
        %v618 = vpop.f32.mrb[0].mxu0
        %v619 = vadd.f32 0.0, %v618
        %v620 = vpop.f32.mrb[0].mxu0
        %v621 = vpop.f32.mrb[0].mxu0
        %v622 = vpop.f32.mrb[0].mxu0
        %623 = vdwg.mxu0
        %625 = vrot.lane.b32.xlu0 %v571, 96
        %v626 = vpop.permute.xlu0 %625
        %v628 = vsel %vm577, %v571, 0
        %v631 = vsel %vm577, %v626, 0
        %633 = vmatprep.subr.bf16.mxu0 0
        %634 = vmatpush1.bf16.xpose.msra.mxu0 %v631
        %635 = vmatprep.subr.bf16.mxu0 0
        %636 = vmatpush1.bf16.xpose.msra.mxu0 0
        %637 = vmatprep.subr.bf16.mxu0 0
        %638 = vmatpush1.bf16.xpose.msra.mxu0 0
        %639 = vmatprep.subr.bf16.mxu0 0
        %640 = vmatpush1.bf16.xpose.msra.mxu0 0
        %641 = vmatprep.subr.bf16.mxu0 0
        %642 = vmatpush1.bf16.xpose.msra.mxu0 0
        %643 = vmatprep.subr.bf16.mxu0 0
        %644 = vmatpush1.bf16.xpose.msra.mxu0 0
        %645 = vmatprep.subr.bf16.mxu0 0
        %646 = vmatpush1.bf16.xpose.msra.mxu0 0
        %647 = vmatprep.subr.bf16.mxu0 0
        %648 = vmatpush1.bf16.xpose.msra.mxu0 0
        %649 = vmatprep.subr.bf16.mxu0 0
        %650 = vmatpush1.bf16.xpose.msra.mxu0 0
        %651 = vmatprep.subr.bf16.mxu0 0
        %652 = vmatpush1.bf16.xpose.msra.mxu0 0
        %653 = vmatprep.subr.bf16.mxu0 0
        %654 = vmatpush1.bf16.xpose.msra.mxu0 0
        %655 = vmatprep.subr.bf16.mxu0 0
        %656 = vmatpush1.bf16.xpose.msra.mxu0 0
        %657 = vmatprep.subr.bf16.mxu0 0
        %658 = vmatpush1.bf16.xpose.msra.mxu0 0
        %659 = vmatprep.subr.bf16.mxu0 0
        %660 = vmatpush1.bf16.xpose.msra.mxu0 0
        %661 = vmatprep.subr.bf16.mxu0 0
        %662 = vmatpush1.bf16.xpose.msra.mxu0 0
        %663 = vmatprep.subr.bf16.mxu0 0
        %664 = vmatpush1.bf16.xpose.msra.mxu0 0
        %665 = vmatprep.mubr.bf16.mxu0 0
        %666 = vmatmul.mubr.bf16.gmra.mrb[0].mxu0 %v628
        %v667 = vpop.f32.mrb[0].mxu0
        %v668 = vadd.f32 0.0, %v667
        %v669 = vpop.f32.mrb[0].mxu0
        %v670 = vpop.f32.mrb[0].mxu0
        %v671 = vpop.f32.mrb[0].mxu0
        %672 = vdwg.mxu0
        %674 = vrot.lane.b32.xlu0 %v572, 96
        %v675 = vpop.permute.xlu0 %674
        %v677 = vsel %vm577, %v572, 0
        %v680 = vsel %vm577, %v675, 0
        %682 = vmatprep.subr.bf16.mxu0 0
        %683 = vmatpush1.bf16.xpose.msra.mxu0 %v680
        %684 = vmatprep.subr.bf16.mxu0 0
        %685 = vmatpush1.bf16.xpose.msra.mxu0 0
        %686 = vmatprep.subr.bf16.mxu0 0
        %687 = vmatpush1.bf16.xpose.msra.mxu0 0
        %688 = vmatprep.subr.bf16.mxu0 0
        %689 = vmatpush1.bf16.xpose.msra.mxu0 0
        %690 = vmatprep.subr.bf16.mxu0 0
        %691 = vmatpush1.bf16.xpose.msra.mxu0 0
        %692 = vmatprep.subr.bf16.mxu0 0
        %693 = vmatpush1.bf16.xpose.msra.mxu0 0
        %694 = vmatprep.subr.bf16.mxu0 0
        %695 = vmatpush1.bf16.xpose.msra.mxu0 0
        %696 = vmatprep.subr.bf16.mxu0 0
        %697 = vmatpush1.bf16.xpose.msra.mxu0 0
        %698 = vmatprep.subr.bf16.mxu0 0
        %699 = vmatpush1.bf16.xpose.msra.mxu0 0
        %700 = vmatprep.subr.bf16.mxu0 0
        %701 = vmatpush1.bf16.xpose.msra.mxu0 0
        %702 = vmatprep.subr.bf16.mxu0 0
        %703 = vmatpush1.bf16.xpose.msra.mxu0 0
        %704 = vmatprep.subr.bf16.mxu0 0
        %705 = vmatpush1.bf16.xpose.msra.mxu0 0
        %706 = vmatprep.subr.bf16.mxu0 0
        %707 = vmatpush1.bf16.xpose.msra.mxu0 0
        %708 = vmatprep.subr.bf16.mxu0 0
        %709 = vmatpush1.bf16.xpose.msra.mxu0 0
        %710 = vmatprep.subr.bf16.mxu0 0
        %711 = vmatpush1.bf16.xpose.msra.mxu0 0
        %712 = vmatprep.subr.bf16.mxu0 0
        %713 = vmatpush1.bf16.xpose.msra.mxu0 0
        %714 = vmatprep.mubr.bf16.mxu0 0
        %715 = vmatmul.mubr.bf16.gmra.mrb[0].mxu0 %v677
        %v716 = vpop.f32.mrb[0].mxu0
        %v717 = vadd.f32 0.0, %v716
        %v718 = vpop.f32.mrb[0].mxu0
        %v719 = vpop.f32.mrb[0].mxu0
        %v720 = vpop.f32.mrb[0].mxu0
        %721 = vdwg.mxu0
        %723 = vrot.lane.b32.xlu0 %v573, 96
        %v724 = vpop.permute.xlu0 %723
        %v726 = vsel %vm577, %v573, 0
        %v729 = vsel %vm577, %v724, 0
        %731 = vmatprep.subr.bf16.mxu0 0
        %732 = vmatpush1.bf16.xpose.msra.mxu0 %v729
        %733 = vmatprep.subr.bf16.mxu0 0
        %734 = vmatpush1.bf16.xpose.msra.mxu0 0
        %735 = vmatprep.subr.bf16.mxu0 0
        %736 = vmatpush1.bf16.xpose.msra.mxu0 0
        %737 = vmatprep.subr.bf16.mxu0 0
        %738 = vmatpush1.bf16.xpose.msra.mxu0 0
        %739 = vmatprep.subr.bf16.mxu0 0
        %740 = vmatpush1.bf16.xpose.msra.mxu0 0
        %741 = vmatprep.subr.bf16.mxu0 0
        %742 = vmatpush1.bf16.xpose.msra.mxu0 0
        %743 = vmatprep.subr.bf16.mxu0 0
        %744 = vmatpush1.bf16.xpose.msra.mxu0 0
        %745 = vmatprep.subr.bf16.mxu0 0
        %746 = vmatpush1.bf16.xpose.msra.mxu0 0
        %747 = vmatprep.subr.bf16.mxu0 0
        %748 = vmatpush1.bf16.xpose.msra.mxu0 0
        %749 = vmatprep.subr.bf16.mxu0 0
        %750 = vmatpush1.bf16.xpose.msra.mxu0 0
        %751 = vmatprep.subr.bf16.mxu0 0
        %752 = vmatpush1.bf16.xpose.msra.mxu0 0
        %753 = vmatprep.subr.bf16.mxu0 0
        %754 = vmatpush1.bf16.xpose.msra.mxu0 0
        %755 = vmatprep.subr.bf16.mxu0 0
        %756 = vmatpush1.bf16.xpose.msra.mxu0 0
        %757 = vmatprep.subr.bf16.mxu0 0
        %758 = vmatpush1.bf16.xpose.msra.mxu0 0
        %759 = vmatprep.subr.bf16.mxu0 0
        %760 = vmatpush1.bf16.xpose.msra.mxu0 0
        %761 = vmatprep.subr.bf16.mxu0 0
        %762 = vmatpush1.bf16.xpose.msra.mxu0 0
        %763 = vmatprep.mubr.bf16.mxu0 0
        %764 = vmatmul.mubr.bf16.gmra.mrb[0].mxu0 %v726
        %v765 = vpop.f32.mrb[0].mxu0
        %v766 = vadd.f32 0.0, %v765
        %v767 = vpop.f32.mrb[0].mxu0
        %v768 = vpop.f32.mrb[0].mxu0
        %v769 = vpop.f32.mrb[0].mxu0
        %770 = vdwg.mxu0
        %v771 = vmul.f32 %v619, 0.35355338
        %v772 = vmul.f32 %v668, 0.35355338
        %v773 = vmul.f32 %v717, 0.35355338
        %v774 = vmul.f32 %v766, 0.35355338
        %v775 = vsel %vm577, %v771, -inf
        %776 = vmax.xlane.f32.xlu0 %v775
        %v777 = vpop.xlane.xlu0 %776
        %v778 = vsel %vm577, %v772, -inf
        %779 = vmax.xlane.f32.xlu0 %v778
        %v780 = vpop.xlane.xlu0 %779
        %v781 = vsel %vm577, %v773, -inf
        %782 = vmax.xlane.f32.xlu0 %v781
        %v783 = vpop.xlane.xlu0 %782
        %v784 = vsel %vm577, %v774, -inf
        %785 = vmax.xlane.f32.xlu0 %v784
        %v786 = vpop.xlane.xlu0 %785
        %v787 = vsub.f32 %v771, %v777
        %v788 = vsub.f32 %v772, %v780
        %v789 = vsub.f32 %v773, %v783
        %v790 = vsub.f32 %v774, %v786
        %v791 = vmul.f32 %v787, 1.442695
        %v792 = vpow.pop %v791
        %v793 = vmul.f32 %v788, 1.442695
        %v794 = vpow.pop %v793
        %v795 = vmul.f32 %v789, 1.442695
        %v796 = vpow.pop %v795
        %v797 = vmul.f32 %v790, 1.442695
        %v798 = vpow.pop %v797
        %v799 = vsel %vm577, %v792, 0.0
        %800 = vadd.xlane.f32.xlu0 %v799
        %v801 = vpop.xlane.xlu0 %800
        %v802 = vsel %vm577, %v794, 0.0
        %803 = vadd.xlane.f32.xlu0 %v802
        %v804 = vpop.xlane.xlu0 %803
        %v805 = vsel %vm577, %v796, 0.0
        %806 = vadd.xlane.f32.xlu0 %v805
        %v807 = vpop.xlane.xlu0 %806
        %v808 = vsel %vm577, %v798, 0.0
        %809 = vadd.xlane.f32.xlu0 %v808
        %v810 = vpop.xlane.xlu0 %809
        %v811 = vrcp.pop %v801
        %v812 = vrcp.pop %v804
        %v813 = vrcp.pop %v807
        %v814 = vrcp.pop %v810
        %v815 = vmul.f32 %v792, %v811
        %v816 = vmul.f32 %v794, %v812
        %v817 = vmul.f32 %v796, %v813
        %v818 = vmul.f32 %v798, %v814
        %v819 = vpack.c.bf16 %v815, %v815
        %v820 = vpack.c.bf16 %v816, %v816
        %v821 = vpack.c.bf16 %v817, %v817
        %v822 = vpack.c.bf16 %v818, %v818
        %823 = vrot.lane.b32.xlu0 %v570, 64
        %v824 = vpop.permute.xlu0 %823
        %v826 = vsel %vm577, %v819, 0
        %vm828 = vcmask 1043456
        %v830 = vsel %vm828, %v824, 0
        %832 = vmatprep.subr.bf16.mxu0 0
        %833 = vmatpush1.bf16.msra.mxu0 %v830
        %834 = vmatprep.subr.bf16.mxu0 0
        %835 = vmatpush1.bf16.msra.mxu0 0
        %836 = vmatprep.subr.bf16.mxu0 0
        %837 = vmatpush1.bf16.msra.mxu0 0
        %838 = vmatprep.subr.bf16.mxu0 0
        %839 = vmatpush1.bf16.msra.mxu0 0
        %840 = vmatprep.subr.bf16.mxu0 0
        %841 = vmatpush1.bf16.msra.mxu0 0
        %842 = vmatprep.subr.bf16.mxu0 0
        %843 = vmatpush1.bf16.msra.mxu0 0
        %844 = vmatprep.subr.bf16.mxu0 0
        %845 = vmatpush1.bf16.msra.mxu0 0
        %846 = vmatprep.subr.bf16.mxu0 0
        %847 = vmatpush1.bf16.msra.mxu0 0
        %848 = vmatprep.subr.bf16.mxu0 0
        %849 = vmatpush1.bf16.msra.mxu0 0
        %850 = vmatprep.subr.bf16.mxu0 0
        %851 = vmatpush1.bf16.msra.mxu0 0
        %852 = vmatprep.subr.bf16.mxu0 0
        %853 = vmatpush1.bf16.msra.mxu0 0
        %854 = vmatprep.subr.bf16.mxu0 0
        %855 = vmatpush1.bf16.msra.mxu0 0
        %856 = vmatprep.subr.bf16.mxu0 0
        %857 = vmatpush1.bf16.msra.mxu0 0
        %858 = vmatprep.subr.bf16.mxu0 0
        %859 = vmatpush1.bf16.msra.mxu0 0
        %860 = vmatprep.subr.bf16.mxu0 0
        %861 = vmatpush1.bf16.msra.mxu0 0
        %862 = vmatprep.subr.bf16.mxu0 0
        %863 = vmatpush1.bf16.msra.mxu0 0
        %864 = vmatprep.mubr.bf16.mxu0 0
        %865 = vmatmul.mubr.bf16.gmra.mrb[0].mxu0 %v826
        %v866 = vpop.f32.mrb[0].mxu0
        %v867 = vadd.f32 0.0, %v866
        %v868 = vpop.f32.mrb[0].mxu0
        %v869 = vpop.f32.mrb[0].mxu0
        %v870 = vpop.f32.mrb[0].mxu0
        %871 = vdwg.mxu0
        %872 = vrot.lane.b32.xlu0 %v571, 64
        %v873 = vpop.permute.xlu0 %872
        %v875 = vsel %vm577, %v820, 0
        %v878 = vsel %vm828, %v873, 0
        %880 = vmatprep.subr.bf16.mxu0 0
        %881 = vmatpush1.bf16.msra.mxu0 %v878
        %882 = vmatprep.subr.bf16.mxu0 0
        %883 = vmatpush1.bf16.msra.mxu0 0
        %884 = vmatprep.subr.bf16.mxu0 0
        %885 = vmatpush1.bf16.msra.mxu0 0
        %886 = vmatprep.subr.bf16.mxu0 0
        %887 = vmatpush1.bf16.msra.mxu0 0
        %888 = vmatprep.subr.bf16.mxu0 0
        %889 = vmatpush1.bf16.msra.mxu0 0
        %890 = vmatprep.subr.bf16.mxu0 0
        %891 = vmatpush1.bf16.msra.mxu0 0
        %892 = vmatprep.subr.bf16.mxu0 0
        %893 = vmatpush1.bf16.msra.mxu0 0
        %894 = vmatprep.subr.bf16.mxu0 0
        %895 = vmatpush1.bf16.msra.mxu0 0
        %896 = vmatprep.subr.bf16.mxu0 0
        %897 = vmatpush1.bf16.msra.mxu0 0
        %898 = vmatprep.subr.bf16.mxu0 0
        %899 = vmatpush1.bf16.msra.mxu0 0
        %900 = vmatprep.subr.bf16.mxu0 0
        %901 = vmatpush1.bf16.msra.mxu0 0
        %902 = vmatprep.subr.bf16.mxu0 0
        %903 = vmatpush1.bf16.msra.mxu0 0
        %904 = vmatprep.subr.bf16.mxu0 0
        %905 = vmatpush1.bf16.msra.mxu0 0
        %906 = vmatprep.subr.bf16.mxu0 0
        %907 = vmatpush1.bf16.msra.mxu0 0
        %908 = vmatprep.subr.bf16.mxu0 0
        %909 = vmatpush1.bf16.msra.mxu0 0
        %910 = vmatprep.subr.bf16.mxu0 0
        %911 = vmatpush1.bf16.msra.mxu0 0
        %912 = vmatprep.mubr.bf16.mxu0 0
        %913 = vmatmul.mubr.bf16.gmra.mrb[0].mxu0 %v875
        %v914 = vpop.f32.mrb[0].mxu0
        %v915 = vadd.f32 0.0, %v914
        %v916 = vpop.f32.mrb[0].mxu0
        %v917 = vpop.f32.mrb[0].mxu0
        %v918 = vpop.f32.mrb[0].mxu0
        %919 = vdwg.mxu0
        %920 = vrot.lane.b32.xlu0 %v572, 64
        %v921 = vpop.permute.xlu0 %920
        %v923 = vsel %vm577, %v821, 0
        %v926 = vsel %vm828, %v921, 0
        %928 = vmatprep.subr.bf16.mxu0 0
        %929 = vmatpush1.bf16.msra.mxu0 %v926
        %930 = vmatprep.subr.bf16.mxu0 0
        %931 = vmatpush1.bf16.msra.mxu0 0
        %932 = vmatprep.subr.bf16.mxu0 0
        %933 = vmatpush1.bf16.msra.mxu0 0
        %934 = vmatprep.subr.bf16.mxu0 0
        %935 = vmatpush1.bf16.msra.mxu0 0
        %936 = vmatprep.subr.bf16.mxu0 0
        %937 = vmatpush1.bf16.msra.mxu0 0
        %938 = vmatprep.subr.bf16.mxu0 0
        %939 = vmatpush1.bf16.msra.mxu0 0
        %940 = vmatprep.subr.bf16.mxu0 0
        %941 = vmatpush1.bf16.msra.mxu0 0
        %942 = vmatprep.subr.bf16.mxu0 0
        %943 = vmatpush1.bf16.msra.mxu0 0
        %944 = vmatprep.subr.bf16.mxu0 0
        %945 = vmatpush1.bf16.msra.mxu0 0
        %946 = vmatprep.subr.bf16.mxu0 0
        %947 = vmatpush1.bf16.msra.mxu0 0
        %948 = vmatprep.subr.bf16.mxu0 0
        %949 = vmatpush1.bf16.msra.mxu0 0
        %950 = vmatprep.subr.bf16.mxu0 0
        %951 = vmatpush1.bf16.msra.mxu0 0
        %952 = vmatprep.subr.bf16.mxu0 0
        %953 = vmatpush1.bf16.msra.mxu0 0
        %954 = vmatprep.subr.bf16.mxu0 0
        %955 = vmatpush1.bf16.msra.mxu0 0
        %956 = vmatprep.subr.bf16.mxu0 0
        %957 = vmatpush1.bf16.msra.mxu0 0
        %958 = vmatprep.subr.bf16.mxu0 0
        %959 = vmatpush1.bf16.msra.mxu0 0
        %960 = vmatprep.mubr.bf16.mxu0 0
        %961 = vmatmul.mubr.bf16.gmra.mrb[0].mxu0 %v923
        %v962 = vpop.f32.mrb[0].mxu0
        %v963 = vadd.f32 0.0, %v962
        %v964 = vpop.f32.mrb[0].mxu0
        %v965 = vpop.f32.mrb[0].mxu0
        %v966 = vpop.f32.mrb[0].mxu0
        %967 = vdwg.mxu0
        %968 = vrot.lane.b32.xlu0 %v573, 64
        %v969 = vpop.permute.xlu0 %968
        %v971 = vsel %vm577, %v822, 0
        %v974 = vsel %vm828, %v969, 0
        %976 = vmatprep.subr.bf16.mxu0 0
        %977 = vmatpush1.bf16.msra.mxu0 %v974
        %978 = vmatprep.subr.bf16.mxu0 0
        %979 = vmatpush1.bf16.msra.mxu0 0
        %980 = vmatprep.subr.bf16.mxu0 0
        %981 = vmatpush1.bf16.msra.mxu0 0
        %982 = vmatprep.subr.bf16.mxu0 0
        %983 = vmatpush1.bf16.msra.mxu0 0
        %984 = vmatprep.subr.bf16.mxu0 0
        %985 = vmatpush1.bf16.msra.mxu0 0
        %986 = vmatprep.subr.bf16.mxu0 0
        %987 = vmatpush1.bf16.msra.mxu0 0
        %988 = vmatprep.subr.bf16.mxu0 0
        %989 = vmatpush1.bf16.msra.mxu0 0
        %990 = vmatprep.subr.bf16.mxu0 0
        %991 = vmatpush1.bf16.msra.mxu0 0
        %992 = vmatprep.subr.bf16.mxu0 0
        %993 = vmatpush1.bf16.msra.mxu0 0
        %994 = vmatprep.subr.bf16.mxu0 0
        %995 = vmatpush1.bf16.msra.mxu0 0
        %996 = vmatprep.subr.bf16.mxu0 0
        %997 = vmatpush1.bf16.msra.mxu0 0
        %998 = vmatprep.subr.bf16.mxu0 0
        %999 = vmatpush1.bf16.msra.mxu0 0
        %1000 = vmatprep.subr.bf16.mxu0 0
        %1001 = vmatpush1.bf16.msra.mxu0 0
        %1002 = vmatprep.subr.bf16.mxu0 0
        %1003 = vmatpush1.bf16.msra.mxu0 0
        %1004 = vmatprep.subr.bf16.mxu0 0
        %1005 = vmatpush1.bf16.msra.mxu0 0
        %1006 = vmatprep.subr.bf16.mxu0 0
        %1007 = vmatpush1.bf16.msra.mxu0 0
        %1008 = vmatprep.mubr.bf16.mxu0 0
        %1009 = vmatmul.mubr.bf16.gmra.mrb[0].mxu0 %v971
        %v1010 = vpop.f32.mrb[0].mxu0
        %v1011 = vadd.f32 0.0, %v1010
        %v1012 = vpop.f32.mrb[0].mxu0
        %v1013 = vpop.f32.mrb[0].mxu0
        %v1014 = vpop.f32.mrb[0].mxu0
        %1015 = vdwg.mxu0
        %1017 = vrot.lane.b32.xlu0 %v915, 8
        %v1018 = vpop.permute.xlu0 %1017
        %1021 = vrot.lane.b32.xlu0 %v963, 16
        %v1022 = vpop.permute.xlu0 %1021
        %1025 = vrot.lane.b32.xlu0 %v1011, 24
        %v1026 = vpop.permute.xlu0 %1025
        %v1028 = vsel %vm577, %v867, %v1018
        %vm1029 = vcmask 130048
        %v1030 = vsel %vm1029, %v1028, %v1022
        %vm1031 = vcmask 195584
        %v1032 = vsel %vm1031, %v1030, %v1026
        %v1033 = vpack.c.bf16 %v1032, %v1032
        %v1034 = vld [vmem:[%s3] sm:$0xf]
        %v1035 = vld [vmem:[%s3 + $0x4] sm:$0xf]
        %v1036 = vld [vmem:[%s3 + $0x8] sm:$0xf]
        %v1037 = vld [vmem:[%s3 + $0xc] sm:$0xf]
        %v1038 = vld [vmem:[%s4] sm:$0x1]
        %v1040 = vlaneseq
        %v1041 = vshrl.u32 %v1040, 7
        %v1042 = vsub.s32 0, %v1041
        %v1043 = vrot.slane %v1038, %v1042
        %v1049 = vunpack.c.l.b16 %v1034
        %v1050 = vunpack.c.l.b16 %v1035
        %v1051 = vunpack.c.l.b16 %v1036
        %v1052 = vunpack.c.l.b16 %v1037
        %v1053 = vpack.c.b16 %v1050, %v1049
        %v1054 = vpack.c.b16 %v1052, %v1051
        %v1058 = vsel %vm516, %v1033, 0
        %1060 = vmatprep.subr.bf16.mxu0 0
        %1061 = vmatpush1.bf16.msra.mxu0 %v1053
        %1062 = vmatprep.subr.bf16.mxu0 0
        %1063 = vmatpush1.bf16.msra.mxu0 %v1054
        %1064 = vmatprep.subr.bf16.mxu0 0
        %1065 = vmatpush1.bf16.msra.mxu0 0
        %1066 = vmatprep.subr.bf16.mxu0 0
        %1067 = vmatpush1.bf16.msra.mxu0 0
        %1068 = vmatprep.subr.bf16.mxu0 0
        %1069 = vmatpush1.bf16.msra.mxu0 0
        %1070 = vmatprep.subr.bf16.mxu0 0
        %1071 = vmatpush1.bf16.msra.mxu0 0
        %1072 = vmatprep.subr.bf16.mxu0 0
        %1073 = vmatpush1.bf16.msra.mxu0 0
        %1074 = vmatprep.subr.bf16.mxu0 0
        %1075 = vmatpush1.bf16.msra.mxu0 0
        %1076 = vmatprep.subr.bf16.mxu0 0
        %1077 = vmatpush1.bf16.msra.mxu0 0
        %1078 = vmatprep.subr.bf16.mxu0 0
        %1079 = vmatpush1.bf16.msra.mxu0 0
        %1080 = vmatprep.subr.bf16.mxu0 0
        %1081 = vmatpush1.bf16.msra.mxu0 0
        %1082 = vmatprep.subr.bf16.mxu0 0
        %1083 = vmatpush1.bf16.msra.mxu0 0
        %1084 = vmatprep.subr.bf16.mxu0 0
        %1085 = vmatpush1.bf16.msra.mxu0 0
        %1086 = vmatprep.subr.bf16.mxu0 0
        %1087 = vmatpush1.bf16.msra.mxu0 0
        %1088 = vmatprep.subr.bf16.mxu0 0
        %1089 = vmatpush1.bf16.msra.mxu0 0
        %1090 = vmatprep.subr.bf16.mxu0 0
        %1091 = vmatpush1.bf16.msra.mxu0 0
        %1092 = vmatprep.mubr.bf16.mxu0 0
        %1093 = vmatmul.mubr.bf16.gmra.mrb[0].mxu0 %v1058
        %v1094 = vpop.f32.mrb[0].mxu0
        %v1095 = vadd.f32 %v1043, %v1094
        %v1096 = vpop.f32.mrb[0].mxu0
        %v1097 = vpop.f32.mrb[0].mxu0
        %v1098 = vpop.f32.mrb[0].mxu0
        %1099 = vdwg.mxu0
        %v1100 = vadd.f32 %v491, %v1095
        %v1101 = vld [vmem:[%s5] sm:$0x1]
        %v1102 = vld [vmem:[%s6] sm:$0x1]
        %v1103 = vsel %vm516, %v1100, 0.0
        %1104 = vadd.xlane.f32.xlu0 %v1103
        %v1105 = vpop.xlane.xlu0 %1104
        %v1106 = vrcp.pop 32.0
        %v1107 = vmul.f32 %v1105, %v1106
        %v1108 = vsub.f32 %v1100, %v1107
        %v1109 = vmul.f32 %v1108, %v1108
        %v1110 = vsel %vm516, %v1109, 0.0
        %1111 = vadd.xlane.f32.xlu0 %v1110
        %v1112 = vpop.xlane.xlu0 %1111
        %v1113 = vmul.f32 %v1112, %v1106
        %v1114 = vadd.f32 %v1113, 1e-05
        %v1115 = vrsqrt.pop %v1114
        %v1116 = vmul.f32 %v1108, %v1115
        %v1118 = vlaneseq
        %v1119 = vshrl.u32 %v1118, 7
        %v1120 = vsub.s32 0, %v1119
        %v1121 = vrot.slane %v1101, %v1120
        %v1123 = vmul.f32 %v1116, %v1121
        %v1125 = vlaneseq
        %v1126 = vshrl.u32 %v1125, 7
        %v1127 = vsub.s32 0, %v1126
        %v1128 = vrot.slane %v1102, %v1127
        %v1130 = vadd.f32 %v1123, %v1128
        %v1131 = vpack.c.bf16 %v1130, %v1130
        %v1132 = vld [vmem:[%s7] sm:$0xff]
        %v1133 = vld [vmem:[%s7 + $0x8] sm:$0xff]
        %v1134 = vld [vmem:[%s7 + $0x10] sm:$0xff]
        %v1135 = vld [vmem:[%s7 + $0x18] sm:$0xff]
        %v1136 = vld [vmem:[%s8] sm:$0x1]
        %v1138 = vlaneseq
        %v1139 = vshrl.u32 %v1138, 7
        %v1140 = vsub.s32 0, %v1139
        %v1141 = vrot.slane %v1136, %v1140
        %v1144 = vsel %vm516, %v1130, 0
        %1146 = vmatprep.subr.mxu0 0.0
        %1147 = vmatpush1.msra.mxu0 %v1132
        %1148 = vmatprep.subr.mxu0 0.0
        %1149 = vmatpush1.msra.mxu0 %v1133
        %1150 = vmatprep.subr.mxu0 0.0
        %1151 = vmatpush1.msra.mxu0 %v1134
        %1152 = vmatprep.subr.mxu0 0.0
        %1153 = vmatpush1.msra.mxu0 %v1135
        %1154 = vmatprep.subr.mxu0 0.0
        %1155 = vmatpush1.msra.mxu0 0.0
        %1156 = vmatprep.subr.mxu0 0.0
        %1157 = vmatpush1.msra.mxu0 0.0
        %1158 = vmatprep.subr.mxu0 0.0
        %1159 = vmatpush1.msra.mxu0 0.0
        %1160 = vmatprep.subr.mxu0 0.0
        %1161 = vmatpush1.msra.mxu0 0.0
        %1162 = vmatprep.subr.mxu0 0.0
        %1163 = vmatpush1.msra.mxu0 0.0
        %1164 = vmatprep.subr.mxu0 0.0
        %1165 = vmatpush1.msra.mxu0 0.0
        %1166 = vmatprep.subr.mxu0 0.0
        %1167 = vmatpush1.msra.mxu0 0.0
        %1168 = vmatprep.subr.mxu0 0.0
        %1169 = vmatpush1.msra.mxu0 0.0
        %1170 = vmatprep.subr.mxu0 0.0
        %1171 = vmatpush1.msra.mxu0 0.0
        %1172 = vmatprep.subr.mxu0 0.0
        %1173 = vmatpush1.msra.mxu0 0.0
        %1174 = vmatprep.subr.mxu0 0.0
        %1175 = vmatpush1.msra.mxu0 0.0
        %1176 = vmatprep.subr.mxu0 0.0
        %1177 = vmatpush1.msra.mxu0 0.0
        %1178 = vmatprep.subr.mxu0 0.0
        %1179 = vmatpush1.msra.mxu0 0.0
        %1180 = vmatprep.subr.mxu0 0.0
        %1181 = vmatpush1.msra.mxu0 0.0
        %1182 = vmatprep.subr.mxu0 0.0
        %1183 = vmatpush1.msra.mxu0 0.0
        %1184 = vmatprep.subr.mxu0 0.0
        %1185 = vmatpush1.msra.mxu0 0.0
        %1186 = vmatprep.subr.mxu0 0.0
        %1187 = vmatpush1.msra.mxu0 0.0
        %1188 = vmatprep.subr.mxu0 0.0
        %1189 = vmatpush1.msra.mxu0 0.0
        %1190 = vmatprep.subr.mxu0 0.0
        %1191 = vmatpush1.msra.mxu0 0.0
        %1192 = vmatprep.subr.mxu0 0.0
        %1193 = vmatpush1.msra.mxu0 0.0
        %1194 = vmatprep.subr.mxu0 0.0
        %1195 = vmatpush1.msra.mxu0 0.0
        %1196 = vmatprep.subr.mxu0 0.0
        %1197 = vmatpush1.msra.mxu0 0.0
        %1198 = vmatprep.subr.mxu0 0.0
        %1199 = vmatpush1.msra.mxu0 0.0
        %1200 = vmatprep.subr.mxu0 0.0
        %1201 = vmatpush1.msra.mxu0 0.0
        %1202 = vmatprep.subr.mxu0 0.0
        %1203 = vmatpush1.msra.mxu0 0.0
        %1204 = vmatprep.subr.mxu0 0.0
        %1205 = vmatpush1.msra.mxu0 0.0
        %1206 = vmatprep.subr.mxu0 0.0
        %1207 = vmatpush1.msra.mxu0 0.0
        %1208 = vmatprep.subr.mxu0 0.0
        %1209 = vmatpush1.msra.mxu0 0.0
        %1210 = vmatprep.mubr.f32.mxu0 0.0
        %1211 = vmatmul.mubr.f32.gmra.mrb[0].mxu0 %v1144
        %v1212 = vpop.f32.mrb[0].mxu0
        %v1213 = vadd.f32 %v1141, %v1212
        %v1214 = vpop.f32.mrb[0].mxu0
        %1215 = vdwg.mxu0
        %vm1216 = vcmask 31744
        %v1217 = vsel %vm1216, %v1213, -inf
        %1218 = vmax.xlane.f32.xlu0 %v1217
        %v1219 = vpop.xlane.xlu0 %1218
        %v1220 = vsub.f32 %v1213, %v1219
        %v1221 = vmul.f32 %v1220, 1.442695
        %v1222 = vpow.pop %v1221
        %v1223 = vsel %vm1216, %v1222, 0.0
        %1224 = vadd.xlane.f32.xlu0 %v1223
        %v1225 = vpop.xlane.xlu0 %1224
        %v1226 = vrcp.pop %v1225
        %v1227 = vmul.f32 %v1222, %v1226
        %v1228 = vlaneseq
        %v1229 = vand.u32 %v1228, 127
        %v1230 = vsel %vm1216, %v1227, -inf
        %1231 = vmax.xlane.f32.xlu0 %v1230
        %v1232 = vpop.xlane.xlu0 %1231
        %vm1233 = vcmp.eq.f32.partialorder %v1227, %v1232
        %v1234 = vsel %vm1233, %v1229, 4
        %v1235 = vsel %vm1216, %v1234, 2147483647
        %v1236 = vand.u32 %v1235, 65535
        %v1237 = vshra.s32 %v1235, 16
        %v1238 = vcvt.s32.f32 %v1236
        %v1239 = vcvt.s32.f32 %v1237
        %1240 = vmin.xlane.f32.xlu0 %v1239
        %v1241 = vpop.xlane.xlu0 %1240
        %vm1242 = vcmp.eq.f32.partialorder %v1239, %v1241
        %v1243 = vsel %vm1242, %v1238, inf
        %1244 = vmin.xlane.f32.xlu0 %v1243
        %v1245 = vpop.xlane.xlu0 %1244
        %v1246 = vcvt.f32.s32 %v1245
        %v1247 = vcvt.f32.s32 %v1241
        %v1248 = vshll.u32 %v1247, 16
        %v1249 = vadd.s32 %v1248, %v1246
        %vm1250 = vcmp.eq.s32.totalorder %v1229, %v1249
        %v1251 = vsel %vm1250, -inf, %v1227
        %v1252 = vsel %vm1216, %v1251, -inf
        %1253 = vmax.xlane.f32.xlu0 %v1252
        %v1254 = vpop.xlane.xlu0 %1253
        %vm1255 = vcmp.eq.f32.partialorder %v1251, %v1254
        %v1256 = vsel %vm1255, %v1229, 4
        %v1257 = vsel %vm1216, %v1256, 2147483647
        %v1258 = vand.u32 %v1257, 65535
        %v1259 = vshra.s32 %v1257, 16
        %v1260 = vcvt.s32.f32 %v1258
        %v1261 = vcvt.s32.f32 %v1259
        %1262 = vmin.xlane.f32.xlu0 %v1261
        %v1263 = vpop.xlane.xlu0 %1262
        %vm1264 = vcmp.eq.f32.partialorder %v1261, %v1263
        %v1265 = vsel %vm1264, %v1260, inf
        %1266 = vmin.xlane.f32.xlu0 %v1265
        %v1267 = vpop.xlane.xlu0 %1266
        %v1268 = vcvt.f32.s32 %v1267
        %v1269 = vcvt.f32.s32 %v1263
        %v1270 = vshll.u32 %v1269, 16
        %v1271 = vadd.s32 %v1270, %v1268
        %v1272 = vsel %vm1250, %v1232, 0.0
        %vm1273 = vcmp.eq.s32.totalorder %v1229, %v1271
        %v1274 = vsel %vm1273, %v1254, 0.0
        %v1275 = vadd.f32 %v1272, %v1274
        %1276 = vst.msk [vmem:[#allocation2] sm:$0xff] %vm516, 0.0
        %vm1277 = vcmask 7168
        %v1278 = vsel %vm1277, %v1275, -inf
        %1279 = vmax.xlane.f32.xlu0 %v1278
        %v1280 = vpop.xlane.xlu0 %1279
        %v1281 = vrot.slane %v1280, 4
        %v1282 = vmax.f32 %v1280, %v1281
        %v1283 = vrot.slane %v1282, 2
        %v1284 = vmax.f32 %v1282, %v1283
        %v1285 = vrot.slane %v1284, 1
        %v1286 = vmax.f32 %v1284, %v1285
        %s1287 = vtos %v1286
        %p1288 = scmp.gt.f32.partialorder %s1287, 0.0
        // Predicated region
        $region81: #{tpu_custom_call.1} parent=79 // pred_check
          %p1289 = pneg %p1288
        $region82: #{tpu_custom_call.1} parent=79 // pred_check_branch
          %1291 = sbr.rel (%p1289) target = $region84
        $region83: #{tpu_custom_call.1} parent=79 // pred_region
          %v1292 = vld [vmem:[%s9] sm:$0xf]
          %v1293 = vld [vmem:[%s9 + $0x4] sm:$0xf]
          %v1294 = vld [vmem:[%s9 + $0x8] sm:$0xf]
          %v1295 = vld [vmem:[%s9 + $0xc] sm:$0xf]
          %v1296 = vld [vmem:[%s10] sm:$0x1]
          %v1298 = vlaneseq
          %v1299 = vshrl.u32 %v1298, 7
          %v1300 = vsub.s32 0, %v1299
          %v1301 = vrot.slane %v1296, %v1300
          %v1307 = vunpack.c.l.b16 %v1292
          %v1308 = vunpack.c.l.b16 %v1293
          %v1309 = vunpack.c.l.b16 %v1294
          %v1310 = vunpack.c.l.b16 %v1295
          %v1311 = vpack.c.b16 %v1308, %v1307
          %v1312 = vpack.c.b16 %v1310, %v1309
          %v1316 = vsel %vm516, %v1131, 0
          %1318 = vmatprep.subr.bf16.mxu0 0
          %1319 = vmatpush1.bf16.msra.mxu0 %v1311
          %1320 = vmatprep.subr.bf16.mxu0 0
          %1321 = vmatpush1.bf16.msra.mxu0 %v1312
          %1322 = vmatprep.subr.bf16.mxu0 0
          %1323 = vmatpush1.bf16.msra.mxu0 0
          %1324 = vmatprep.subr.bf16.mxu0 0
          %1325 = vmatpush1.bf16.msra.mxu0 0
          %1326 = vmatprep.subr.bf16.mxu0 0
          %1327 = vmatpush1.bf16.msra.mxu0 0
          %1328 = vmatprep.subr.bf16.mxu0 0
          %1329 = vmatpush1.bf16.msra.mxu0 0
          %1330 = vmatprep.subr.bf16.mxu0 0
          %1331 = vmatpush1.bf16.msra.mxu0 0
          %1332 = vmatprep.subr.bf16.mxu0 0
          %1333 = vmatpush1.bf16.msra.mxu0 0
          %1334 = vmatprep.subr.bf16.mxu0 0
          %1335 = vmatpush1.bf16.msra.mxu0 0
          %1336 = vmatprep.subr.bf16.mxu0 0
          %1337 = vmatpush1.bf16.msra.mxu0 0
          %1338 = vmatprep.subr.bf16.mxu0 0
          %1339 = vmatpush1.bf16.msra.mxu0 0
          %1340 = vmatprep.subr.bf16.mxu0 0
          %1341 = vmatpush1.bf16.msra.mxu0 0
          %1342 = vmatprep.subr.bf16.mxu0 0
          %1343 = vmatpush1.bf16.msra.mxu0 0
          %1344 = vmatprep.subr.bf16.mxu0 0
          %1345 = vmatpush1.bf16.msra.mxu0 0
          %1346 = vmatprep.subr.bf16.mxu0 0
          %1347 = vmatpush1.bf16.msra.mxu0 0
          %1348 = vmatprep.subr.bf16.mxu0 0
          %1349 = vmatpush1.bf16.msra.mxu0 0
          %1350 = vmatprep.mubr.bf16.mxu0 0
          %1351 = vmatmul.mubr.bf16.gmra.mrb[0].mxu0 %v1316
          %v1352 = vpop.f32.mrb[0].mxu0
          %v1353 = vadd.f32 %v1301, %v1352
          %v1354 = vpop.f32.mrb[0].mxu0
          %v1355 = vpop.f32.mrb[0].mxu0
          %v1356 = vpop.f32.mrb[0].mxu0
          %1357 = vdwg.mxu0
          %v1358 = vmax.f32 %v1353, 0.0
          %v1359 = vpack.c.bf16 %v1358, %v1358
          %v1360 = vld [vmem:[%s11] sm:$0xf]
          %v1361 = vld [vmem:[%s11 + $0x4] sm:$0xf]
          %v1362 = vld [vmem:[%s11 + $0x8] sm:$0xf]
          %v1363 = vld [vmem:[%s11 + $0xc] sm:$0xf]
          %v1364 = vld [vmem:[%s11 + $0x10] sm:$0xf]
          %v1365 = vld [vmem:[%s11 + $0x14] sm:$0xf]
          %v1366 = vld [vmem:[%s11 + $0x18] sm:$0xf]
          %v1367 = vld [vmem:[%s11 + $0x1c] sm:$0xf]
          %v1368 = vld [vmem:[%s12] sm:$0x1]
          %v1370 = vlaneseq
          %v1371 = vshrl.u32 %v1370, 7
          %v1372 = vsub.s32 0, %v1371
          %v1373 = vrot.slane %v1368, %v1372
          %v1383 = vunpack.c.l.b16 %v1360
          %v1384 = vunpack.c.l.b16 %v1361
          %v1385 = vunpack.c.l.b16 %v1362
          %v1386 = vunpack.c.l.b16 %v1363
          %v1387 = vunpack.c.l.b16 %v1364
          %v1388 = vunpack.c.l.b16 %v1365
          %v1389 = vunpack.c.l.b16 %v1366
          %v1390 = vunpack.c.l.b16 %v1367
          %v1391 = vpack.c.b16 %v1384, %v1383
          %v1392 = vpack.c.b16 %v1386, %v1385
          %v1393 = vpack.c.b16 %v1388, %v1387
          %v1394 = vpack.c.b16 %v1390, %v1389
          %vm1399 = vcmask 523264
          %v1401 = vsel %vm1399, %v1359, 0
          %1403 = vmatprep.subr.bf16.mxu0 0
          %1404 = vmatpush1.bf16.msra.mxu0 %v1391
          %1405 = vmatprep.subr.bf16.mxu0 0
          %1406 = vmatpush1.bf16.msra.mxu0 %v1392
          %1407 = vmatprep.subr.bf16.mxu0 0
          %1408 = vmatpush1.bf16.msra.mxu0 %v1393
          %1409 = vmatprep.subr.bf16.mxu0 0
          %1410 = vmatpush1.bf16.msra.mxu0 %v1394
          %1411 = vmatprep.subr.bf16.mxu0 0
          %1412 = vmatpush1.bf16.msra.mxu0 0
          %1413 = vmatprep.subr.bf16.mxu0 0
          %1414 = vmatpush1.bf16.msra.mxu0 0
          %1415 = vmatprep.subr.bf16.mxu0 0
          %1416 = vmatpush1.bf16.msra.mxu0 0
          %1417 = vmatprep.subr.bf16.mxu0 0
          %1418 = vmatpush1.bf16.msra.mxu0 0
          %1419 = vmatprep.subr.bf16.mxu0 0
          %1420 = vmatpush1.bf16.msra.mxu0 0
          %1421 = vmatprep.subr.bf16.mxu0 0
          %1422 = vmatpush1.bf16.msra.mxu0 0
          %1423 = vmatprep.subr.bf16.mxu0 0
          %1424 = vmatpush1.bf16.msra.mxu0 0
          %1425 = vmatprep.subr.bf16.mxu0 0
          %1426 = vmatpush1.bf16.msra.mxu0 0
          %1427 = vmatprep.subr.bf16.mxu0 0
          %1428 = vmatpush1.bf16.msra.mxu0 0
          %1429 = vmatprep.subr.bf16.mxu0 0
          %1430 = vmatpush1.bf16.msra.mxu0 0
          %1431 = vmatprep.subr.bf16.mxu0 0
          %1432 = vmatpush1.bf16.msra.mxu0 0
          %1433 = vmatprep.subr.bf16.mxu0 0
          %1434 = vmatpush1.bf16.msra.mxu0 0
          %1435 = vmatprep.mubr.bf16.mxu0 0
          %1436 = vmatmul.mubr.bf16.gmra.mrb[0].mxu0 %v1401
          %v1437 = vpop.f32.mrb[0].mxu0
          %v1438 = vadd.f32 %v1373, %v1437
          %v1439 = vpop.f32.mrb[0].mxu0
          %v1440 = vpop.f32.mrb[0].mxu0
          %v1441 = vpop.f32.mrb[0].mxu0
          %1442 = vdwg.mxu0
          %v1443 = vld [vmem:[#allocation2] sm:$0xff]
          %1445 = vset.pattern.permute.xlu0 0
          %1446 = vperm.xlu0 %1445, %v1275
          %v1447 = vpop.permute.xlu0 %1446
          %v1449 = vmul.f32 %v1447, %v1438
          %v1450 = vadd.f32 %v1443, %v1449
          %1451 = vst.msk [vmem:[#allocation2] sm:$0xff] %vm516, %v1450
        $region84: #{tpu_custom_call.1} parent=79 // pred_fallthru
          _
        %vm1452 = vcmask 15368
        %v1453 = vsel %vm1452, %v1275, -inf
        %1454 = vmax.xlane.f32.xlu0 %v1453
        %v1455 = vpop.xlane.xlu0 %1454
        %v1456 = vrot.slane %v1455, 4
        %v1457 = vmax.f32 %v1455, %v1456
        %v1458 = vrot.slane %v1457, 2
        %v1459 = vmax.f32 %v1457, %v1458
        %v1460 = vrot.slane %v1459, 1
        %v1461 = vmax.f32 %v1459, %v1460
        %s1462 = vtos %v1461
        %p1463 = scmp.gt.f32.partialorder %s1462, 0.0
        // Predicated region
        $region85: #{tpu_custom_call.1} parent=79 // pred_check
          %p1464 = pneg %p1463
        $region86: #{tpu_custom_call.1} parent=79 // pred_check_branch
          %1466 = sbr.rel (%p1464) target = $region88
        $region87: #{tpu_custom_call.1} parent=79 // pred_region
          %s1467 = scalar_lea.vmem %s9, 16
          %v1468 = vld [vmem:[%s1467] sm:$0xf]
          %v1469 = vld [vmem:[%s1467 + $0x4] sm:$0xf]
          %v1470 = vld [vmem:[%s1467 + $0x8] sm:$0xf]
          %v1471 = vld [vmem:[%s1467 + $0xc] sm:$0xf]
          %s1472 = scalar_lea.vmem %s10, 1
          %v1473 = vld [vmem:[%s1472] sm:$0x1]
          %v1475 = vlaneseq
          %v1476 = vshrl.u32 %v1475, 7
          %v1477 = vsub.s32 0, %v1476
          %v1478 = vrot.slane %v1473, %v1477
          %v1484 = vunpack.c.l.b16 %v1468
          %v1485 = vunpack.c.l.b16 %v1469
          %v1486 = vunpack.c.l.b16 %v1470
          %v1487 = vunpack.c.l.b16 %v1471
          %v1488 = vpack.c.b16 %v1485, %v1484
          %v1489 = vpack.c.b16 %v1487, %v1486
          %v1493 = vsel %vm516, %v1131, 0
          %1495 = vmatprep.subr.bf16.mxu0 0
          %1496 = vmatpush1.bf16.msra.mxu0 %v1488
          %1497 = vmatprep.subr.bf16.mxu0 0
          %1498 = vmatpush1.bf16.msra.mxu0 %v1489
          %1499 = vmatprep.subr.bf16.mxu0 0
          %1500 = vmatpush1.bf16.msra.mxu0 0
          %1501 = vmatprep.subr.bf16.mxu0 0
          %1502 = vmatpush1.bf16.msra.mxu0 0
          %1503 = vmatprep.subr.bf16.mxu0 0
          %1504 = vmatpush1.bf16.msra.mxu0 0
          %1505 = vmatprep.subr.bf16.mxu0 0
          %1506 = vmatpush1.bf16.msra.mxu0 0
          %1507 = vmatprep.subr.bf16.mxu0 0
          %1508 = vmatpush1.bf16.msra.mxu0 0
          %1509 = vmatprep.subr.bf16.mxu0 0
          %1510 = vmatpush1.bf16.msra.mxu0 0
          %1511 = vmatprep.subr.bf16.mxu0 0
          %1512 = vmatpush1.bf16.msra.mxu0 0
          %1513 = vmatprep.subr.bf16.mxu0 0
          %1514 = vmatpush1.bf16.msra.mxu0 0
          %1515 = vmatprep.subr.bf16.mxu0 0
          %1516 = vmatpush1.bf16.msra.mxu0 0
          %1517 = vmatprep.subr.bf16.mxu0 0
          %1518 = vmatpush1.bf16.msra.mxu0 0
          %1519 = vmatprep.subr.bf16.mxu0 0
          %1520 = vmatpush1.bf16.msra.mxu0 0
          %1521 = vmatprep.subr.bf16.mxu0 0
          %1522 = vmatpush1.bf16.msra.mxu0 0
          %1523 = vmatprep.subr.bf16.mxu0 0
          %1524 = vmatpush1.bf16.msra.mxu0 0
          %1525 = vmatprep.subr.bf16.mxu0 0
          %1526 = vmatpush1.bf16.msra.mxu0 0
          %1527 = vmatprep.mubr.bf16.mxu0 0
          %1528 = vmatmul.mubr.bf16.gmra.mrb[0].mxu0 %v1493
          %v1529 = vpop.f32.mrb[0].mxu0
          %v1530 = vadd.f32 %v1478, %v1529
          %v1531 = vpop.f32.mrb[0].mxu0
          %v1532 = vpop.f32.mrb[0].mxu0
          %v1533 = vpop.f32.mrb[0].mxu0
          %1534 = vdwg.mxu0
          %v1535 = vmax.f32 %v1530, 0.0
          %v1536 = vpack.c.bf16 %v1535, %v1535
          %s1537 = scalar_lea.vmem %s11, 32
          %v1538 = vld [vmem:[%s1537] sm:$0xf]
          %v1539 = vld [vmem:[%s1537 + $0x4] sm:$0xf]
          %v1540 = vld [vmem:[%s1537 + $0x8] sm:$0xf]
          %v1541 = vld [vmem:[%s1537 + $0xc] sm:$0xf]
          %v1542 = vld [vmem:[%s1537 + $0x10] sm:$0xf]
          %v1543 = vld [vmem:[%s1537 + $0x14] sm:$0xf]
          %v1544 = vld [vmem:[%s1537 + $0x18] sm:$0xf]
          %v1545 = vld [vmem:[%s1537 + $0x1c] sm:$0xf]
          %s1546 = scalar_lea.vmem %s12, 1
          %v1547 = vld [vmem:[%s1546] sm:$0x1]
          %v1549 = vlaneseq
          %v1550 = vshrl.u32 %v1549, 7
          %v1551 = vsub.s32 0, %v1550
          %v1552 = vrot.slane %v1547, %v1551
          %v1562 = vunpack.c.l.b16 %v1538
          %v1563 = vunpack.c.l.b16 %v1539
          %v1564 = vunpack.c.l.b16 %v1540
          %v1565 = vunpack.c.l.b16 %v1541
          %v1566 = vunpack.c.l.b16 %v1542
          %v1567 = vunpack.c.l.b16 %v1543
          %v1568 = vunpack.c.l.b16 %v1544
          %v1569 = vunpack.c.l.b16 %v1545
          %v1570 = vpack.c.b16 %v1563, %v1562
          %v1571 = vpack.c.b16 %v1565, %v1564
          %v1572 = vpack.c.b16 %v1567, %v1566
          %v1573 = vpack.c.b16 %v1569, %v1568
          %vm1578 = vcmask 523264
          %v1580 = vsel %vm1578, %v1536, 0
          %1582 = vmatprep.subr.bf16.mxu0 0
          %1583 = vmatpush1.bf16.msra.mxu0 %v1570
          %1584 = vmatprep.subr.bf16.mxu0 0
          %1585 = vmatpush1.bf16.msra.mxu0 %v1571
          %1586 = vmatprep.subr.bf16.mxu0 0
          %1587 = vmatpush1.bf16.msra.mxu0 %v1572
          %1588 = vmatprep.subr.bf16.mxu0 0
          %1589 = vmatpush1.bf16.msra.mxu0 %v1573
          %1590 = vmatprep.subr.bf16.mxu0 0
          %1591 = vmatpush1.bf16.msra.mxu0 0
          %1592 = vmatprep.subr.bf16.mxu0 0
          %1593 = vmatpush1.bf16.msra.mxu0 0
          %1594 = vmatprep.subr.bf16.mxu0 0
          %1595 = vmatpush1.bf16.msra.mxu0 0
          %1596 = vmatprep.subr.bf16.mxu0 0
          %1597 = vmatpush1.bf16.msra.mxu0 0
          %1598 = vmatprep.subr.bf16.mxu0 0
          %1599 = vmatpush1.bf16.msra.mxu0 0
          %1600 = vmatprep.subr.bf16.mxu0 0
          %1601 = vmatpush1.bf16.msra.mxu0 0
          %1602 = vmatprep.subr.bf16.mxu0 0
          %1603 = vmatpush1.bf16.msra.mxu0 0
          %1604 = vmatprep.subr.bf16.mxu0 0
          %1605 = vmatpush1.bf16.msra.mxu0 0
          %1606 = vmatprep.subr.bf16.mxu0 0
          %1607 = vmatpush1.bf16.msra.mxu0 0
          %1608 = vmatprep.subr.bf16.mxu0 0
          %1609 = vmatpush1.bf16.msra.mxu0 0
          %1610 = vmatprep.subr.bf16.mxu0 0
          %1611 = vmatpush1.bf16.msra.mxu0 0
          %1612 = vmatprep.subr.bf16.mxu0 0
          %1613 = vmatpush1.bf16.msra.mxu0 0
          %1614 = vmatprep.mubr.bf16.mxu0 0
          %1615 = vmatmul.mubr.bf16.gmra.mrb[0].mxu0 %v1580
          %v1616 = vpop.f32.mrb[0].mxu0
          %v1617 = vadd.f32 %v1552, %v1616
          %v1618 = vpop.f32.mrb[0].mxu0
          %v1619 = vpop.f32.mrb[0].mxu0
          %v1620 = vpop.f32.mrb[0].mxu0
          %1621 = vdwg.mxu0
          %v1622 = vld [vmem:[#allocation2] sm:$0xff]
          %1624 = vset.pattern.permute.xlu0 1
          %1625 = vperm.xlu0 %1624, %v1275
          %v1626 = vpop.permute.xlu0 %1625
          %v1628 = vmul.f32 %v1626, %v1617
          %v1629 = vadd.f32 %v1622, %v1628
          %1630 = vst.msk [vmem:[#allocation2] sm:$0xff] %vm516, %v1629
        $region88: #{tpu_custom_call.1} parent=79 // pred_fallthru
          _
        %vm1631 = vcmask 23568
        %v1632 = vsel %vm1631, %v1275, -inf
        %1633 = vmax.xlane.f32.xlu0 %v1632
        %v1634 = vpop.xlane.xlu0 %1633
        %v1635 = vrot.slane %v1634, 4
        %v1636 = vmax.f32 %v1634, %v1635
        %v1637 = vrot.slane %v1636, 2
        %v1638 = vmax.f32 %v1636, %v1637
        %v1639 = vrot.slane %v1638, 1
        %v1640 = vmax.f32 %v1638, %v1639
        %s1641 = vtos %v1640
        %p1642 = scmp.gt.f32.partialorder %s1641, 0.0
        // Predicated region
        $region89: #{tpu_custom_call.1} parent=79 // pred_check
          %p1643 = pneg %p1642
        $region90: #{tpu_custom_call.1} parent=79 // pred_check_branch
          %1645 = sbr.rel (%p1643) target = $region92
        $region91: #{tpu_custom_call.1} parent=79 // pred_region
          %s1646 = scalar_lea.vmem %s9, 32
          %v1647 = vld [vmem:[%s1646] sm:$0xf]
          %v1648 = vld [vmem:[%s1646 + $0x4] sm:$0xf]
          %v1649 = vld [vmem:[%s1646 + $0x8] sm:$0xf]
          %v1650 = vld [vmem:[%s1646 + $0xc] sm:$0xf]
          %s1651 = scalar_lea.vmem %s10, 2
          %v1652 = vld [vmem:[%s1651] sm:$0x1]
          %v1654 = vlaneseq
          %v1655 = vshrl.u32 %v1654, 7
          %v1656 = vsub.s32 0, %v1655
          %v1657 = vrot.slane %v1652, %v1656
          %v1663 = vunpack.c.l.b16 %v1647
          %v1664 = vunpack.c.l.b16 %v1648
          %v1665 = vunpack.c.l.b16 %v1649
          %v1666 = vunpack.c.l.b16 %v1650
          %v1667 = vpack.c.b16 %v1664, %v1663
          %v1668 = vpack.c.b16 %v1666, %v1665
          %v1672 = vsel %vm516, %v1131, 0
          %1674 = vmatprep.subr.bf16.mxu0 0
          %1675 = vmatpush1.bf16.msra.mxu0 %v1667
          %1676 = vmatprep.subr.bf16.mxu0 0
          %1677 = vmatpush1.bf16.msra.mxu0 %v1668
          %1678 = vmatprep.subr.bf16.mxu0 0
          %1679 = vmatpush1.bf16.msra.mxu0 0
          %1680 = vmatprep.subr.bf16.mxu0 0
          %1681 = vmatpush1.bf16.msra.mxu0 0
          %1682 = vmatprep.subr.bf16.mxu0 0
          %1683 = vmatpush1.bf16.msra.mxu0 0
          %1684 = vmatprep.subr.bf16.mxu0 0
          %1685 = vmatpush1.bf16.msra.mxu0 0
          %1686 = vmatprep.subr.bf16.mxu0 0
          %1687 = vmatpush1.bf16.msra.mxu0 0
          %1688 = vmatprep.subr.bf16.mxu0 0
          %1689 = vmatpush1.bf16.msra.mxu0 0
          %1690 = vmatprep.subr.bf16.mxu0 0
          %1691 = vmatpush1.bf16.msra.mxu0 0
          %1692 = vmatprep.subr.bf16.mxu0 0
          %1693 = vmatpush1.bf16.msra.mxu0 0
          %1694 = vmatprep.subr.bf16.mxu0 0
          %1695 = vmatpush1.bf16.msra.mxu0 0
          %1696 = vmatprep.subr.bf16.mxu0 0
          %1697 = vmatpush1.bf16.msra.mxu0 0
          %1698 = vmatprep.subr.bf16.mxu0 0
          %1699 = vmatpush1.bf16.msra.mxu0 0
          %1700 = vmatprep.subr.bf16.mxu0 0
          %1701 = vmatpush1.bf16.msra.mxu0 0
          %1702 = vmatprep.subr.bf16.mxu0 0
          %1703 = vmatpush1.bf16.msra.mxu0 0
          %1704 = vmatprep.subr.bf16.mxu0 0
          %1705 = vmatpush1.bf16.msra.mxu0 0
          %1706 = vmatprep.mubr.bf16.mxu0 0
          %1707 = vmatmul.mubr.bf16.gmra.mrb[0].mxu0 %v1672
          %v1708 = vpop.f32.mrb[0].mxu0
          %v1709 = vadd.f32 %v1657, %v1708
          %v1710 = vpop.f32.mrb[0].mxu0
          %v1711 = vpop.f32.mrb[0].mxu0
          %v1712 = vpop.f32.mrb[0].mxu0
          %1713 = vdwg.mxu0
          %v1714 = vmax.f32 %v1709, 0.0
          %v1715 = vpack.c.bf16 %v1714, %v1714
          %s1716 = scalar_lea.vmem %s11, 64
          %v1717 = vld [vmem:[%s1716] sm:$0xf]
          %v1718 = vld [vmem:[%s1716 + $0x4] sm:$0xf]
          %v1719 = vld [vmem:[%s1716 + $0x8] sm:$0xf]
          %v1720 = vld [vmem:[%s1716 + $0xc] sm:$0xf]
          %v1721 = vld [vmem:[%s1716 + $0x10] sm:$0xf]
          %v1722 = vld [vmem:[%s1716 + $0x14] sm:$0xf]
          %v1723 = vld [vmem:[%s1716 + $0x18] sm:$0xf]
          %v1724 = vld [vmem:[%s1716 + $0x1c] sm:$0xf]
          %s1725 = scalar_lea.vmem %s12, 2
          %v1726 = vld [vmem:[%s1725] sm:$0x1]
          %v1728 = vlaneseq
          %v1729 = vshrl.u32 %v1728, 7
          %v1730 = vsub.s32 0, %v1729
          %v1731 = vrot.slane %v1726, %v1730
          %v1741 = vunpack.c.l.b16 %v1717
          %v1742 = vunpack.c.l.b16 %v1718
          %v1743 = vunpack.c.l.b16 %v1719
          %v1744 = vunpack.c.l.b16 %v1720
          %v1745 = vunpack.c.l.b16 %v1721
          %v1746 = vunpack.c.l.b16 %v1722
          %v1747 = vunpack.c.l.b16 %v1723
          %v1748 = vunpack.c.l.b16 %v1724
          %v1749 = vpack.c.b16 %v1742, %v1741
          %v1750 = vpack.c.b16 %v1744, %v1743
          %v1751 = vpack.c.b16 %v1746, %v1745
          %v1752 = vpack.c.b16 %v1748, %v1747
          %vm1757 = vcmask 523264
          %v1759 = vsel %vm1757, %v1715, 0
          %1761 = vmatprep.subr.bf16.mxu0 0
          %1762 = vmatpush1.bf16.msra.mxu0 %v1749
          %1763 = vmatprep.subr.bf16.mxu0 0
          %1764 = vmatpush1.bf16.msra.mxu0 %v1750
          %1765 = vmatprep.subr.bf16.mxu0 0
          %1766 = vmatpush1.bf16.msra.mxu0 %v1751
          %1767 = vmatprep.subr.bf16.mxu0 0
          %1768 = vmatpush1.bf16.msra.mxu0 %v1752
          %1769 = vmatprep.subr.bf16.mxu0 0
          %1770 = vmatpush1.bf16.msra.mxu0 0
          %1771 = vmatprep.subr.bf16.mxu0 0
          %1772 = vmatpush1.bf16.msra.mxu0 0
          %1773 = vmatprep.subr.bf16.mxu0 0
          %1774 = vmatpush1.bf16.msra.mxu0 0
          %1775 = vmatprep.subr.bf16.mxu0 0
          %1776 = vmatpush1.bf16.msra.mxu0 0
          %1777 = vmatprep.subr.bf16.mxu0 0
          %1778 = vmatpush1.bf16.msra.mxu0 0
          %1779 = vmatprep.subr.bf16.mxu0 0
          %1780 = vmatpush1.bf16.msra.mxu0 0
          %1781 = vmatprep.subr.bf16.mxu0 0
          %1782 = vmatpush1.bf16.msra.mxu0 0
          %1783 = vmatprep.subr.bf16.mxu0 0
          %1784 = vmatpush1.bf16.msra.mxu0 0
          %1785 = vmatprep.subr.bf16.mxu0 0
          %1786 = vmatpush1.bf16.msra.mxu0 0
          %1787 = vmatprep.subr.bf16.mxu0 0
          %1788 = vmatpush1.bf16.msra.mxu0 0
          %1789 = vmatprep.subr.bf16.mxu0 0
          %1790 = vmatpush1.bf16.msra.mxu0 0
          %1791 = vmatprep.subr.bf16.mxu0 0
          %1792 = vmatpush1.bf16.msra.mxu0 0
          %1793 = vmatprep.mubr.bf16.mxu0 0
          %1794 = vmatmul.mubr.bf16.gmra.mrb[0].mxu0 %v1759
          %v1795 = vpop.f32.mrb[0].mxu0
          %v1796 = vadd.f32 %v1731, %v1795
          %v1797 = vpop.f32.mrb[0].mxu0
          %v1798 = vpop.f32.mrb[0].mxu0
          %v1799 = vpop.f32.mrb[0].mxu0
          %1800 = vdwg.mxu0
          %v1801 = vld [vmem:[#allocation2] sm:$0xff]
          %1803 = vset.pattern.permute.xlu0 2
          %1804 = vperm.xlu0 %1803, %v1275
          %v1805 = vpop.permute.xlu0 %1804
          %v1807 = vmul.f32 %v1805, %v1796
          %v1808 = vadd.f32 %v1801, %v1807
          %1809 = vst.msk [vmem:[#allocation2] sm:$0xff] %vm516, %v1808
        $region92: #{tpu_custom_call.1} parent=79 // pred_fallthru
          _
        %vm1810 = vcmask 31768
        %v1811 = vsel %vm1810, %v1275, -inf
        %1812 = vmax.xlane.f32.xlu0 %v1811
        %v1813 = vpop.xlane.xlu0 %1812
        %v1814 = vrot.slane %v1813, 4
        %v1815 = vmax.f32 %v1813, %v1814
        %v1816 = vrot.slane %v1815, 2
        %v1817 = vmax.f32 %v1815, %v1816
        %v1818 = vrot.slane %v1817, 1
        %v1819 = vmax.f32 %v1817, %v1818
        %s1820 = vtos %v1819
        %p1821 = scmp.gt.f32.partialorder %s1820, 0.0
        // Predicated region
        $region93: #{tpu_custom_call.1} parent=79 // pred_check
          %p1822 = pneg %p1821
        $region94: #{tpu_custom_call.1} parent=79 // pred_check_branch
          %1824 = sbr.rel (%p1822) target = $region96
        $region95: #{tpu_custom_call.1} parent=79 // pred_region
          %s1825 = scalar_lea.vmem %s9, 48
          %v1826 = vld [vmem:[%s1825] sm:$0xf]
          %v1827 = vld [vmem:[%s1825 + $0x4] sm:$0xf]
          %v1828 = vld [vmem:[%s1825 + $0x8] sm:$0xf]
          %v1829 = vld [vmem:[%s1825 + $0xc] sm:$0xf]
          %s1830 = scalar_lea.vmem %s10, 3
          %v1831 = vld [vmem:[%s1830] sm:$0x1]
          %v1833 = vlaneseq
          %v1834 = vshrl.u32 %v1833, 7
          %v1835 = vsub.s32 0, %v1834
          %v1836 = vrot.slane %v1831, %v1835
          %v1842 = vunpack.c.l.b16 %v1826
          %v1843 = vunpack.c.l.b16 %v1827
          %v1844 = vunpack.c.l.b16 %v1828
          %v1845 = vunpack.c.l.b16 %v1829
          %v1846 = vpack.c.b16 %v1843, %v1842
          %v1847 = vpack.c.b16 %v1845, %v1844
          %v1851 = vsel %vm516, %v1131, 0
          %1853 = vmatprep.subr.bf16.mxu0 0
          %1854 = vmatpush1.bf16.msra.mxu0 %v1846
          %1855 = vmatprep.subr.bf16.mxu0 0
          %1856 = vmatpush1.bf16.msra.mxu0 %v1847
          %1857 = vmatprep.subr.bf16.mxu0 0
          %1858 = vmatpush1.bf16.msra.mxu0 0
          %1859 = vmatprep.subr.bf16.mxu0 0
          %1860 = vmatpush1.bf16.msra.mxu0 0
          %1861 = vmatprep.subr.bf16.mxu0 0
          %1862 = vmatpush1.bf16.msra.mxu0 0
          %1863 = vmatprep.subr.bf16.mxu0 0
          %1864 = vmatpush1.bf16.msra.mxu0 0
          %1865 = vmatprep.subr.bf16.mxu0 0
          %1866 = vmatpush1.bf16.msra.mxu0 0
          %1867 = vmatprep.subr.bf16.mxu0 0
          %1868 = vmatpush1.bf16.msra.mxu0 0
          %1869 = vmatprep.subr.bf16.mxu0 0
          %1870 = vmatpush1.bf16.msra.mxu0 0
          %1871 = vmatprep.subr.bf16.mxu0 0
          %1872 = vmatpush1.bf16.msra.mxu0 0
          %1873 = vmatprep.subr.bf16.mxu0 0
          %1874 = vmatpush1.bf16.msra.mxu0 0
          %1875 = vmatprep.subr.bf16.mxu0 0
          %1876 = vmatpush1.bf16.msra.mxu0 0
          %1877 = vmatprep.subr.bf16.mxu0 0
          %1878 = vmatpush1.bf16.msra.mxu0 0
          %1879 = vmatprep.subr.bf16.mxu0 0
          %1880 = vmatpush1.bf16.msra.mxu0 0
          %1881 = vmatprep.subr.bf16.mxu0 0
          %1882 = vmatpush1.bf16.msra.mxu0 0
          %1883 = vmatprep.subr.bf16.mxu0 0
          %1884 = vmatpush1.bf16.msra.mxu0 0
          %1885 = vmatprep.mubr.bf16.mxu0 0
          %1886 = vmatmul.mubr.bf16.gmra.mrb[0].mxu0 %v1851
          %v1887 = vpop.f32.mrb[0].mxu0
          %v1888 = vadd.f32 %v1836, %v1887
          %v1889 = vpop.f32.mrb[0].mxu0
          %v1890 = vpop.f32.mrb[0].mxu0
          %v1891 = vpop.f32.mrb[0].mxu0
          %1892 = vdwg.mxu0
          %v1893 = vmax.f32 %v1888, 0.0
          %v1894 = vpack.c.bf16 %v1893, %v1893
          %s1895 = scalar_lea.vmem %s11, 96
          %v1896 = vld [vmem:[%s1895] sm:$0xf]
          %v1897 = vld [vmem:[%s1895 + $0x4] sm:$0xf]
          %v1898 = vld [vmem:[%s1895 + $0x8] sm:$0xf]
          %v1899 = vld [vmem:[%s1895 + $0xc] sm:$0xf]
          %v1900 = vld [vmem:[%s1895 + $0x10] sm:$0xf]
          %v1901 = vld [vmem:[%s1895 + $0x14] sm:$0xf]
          %v1902 = vld [vmem:[%s1895 + $0x18] sm:$0xf]
          %v1903 = vld [vmem:[%s1895 + $0x1c] sm:$0xf]
          %s1904 = scalar_lea.vmem %s12, 3
          %v1905 = vld [vmem:[%s1904] sm:$0x1]
          %v1907 = vlaneseq
          %v1908 = vshrl.u32 %v1907, 7
          %v1909 = vsub.s32 0, %v1908
          %v1910 = vrot.slane %v1905, %v1909
          %v1920 = vunpack.c.l.b16 %v1896
          %v1921 = vunpack.c.l.b16 %v1897
          %v1922 = vunpack.c.l.b16 %v1898
          %v1923 = vunpack.c.l.b16 %v1899
          %v1924 = vunpack.c.l.b16 %v1900
          %v1925 = vunpack.c.l.b16 %v1901
          %v1926 = vunpack.c.l.b16 %v1902
          %v1927 = vunpack.c.l.b16 %v1903
          %v1928 = vpack.c.b16 %v1921, %v1920
          %v1929 = vpack.c.b16 %v1923, %v1922
          %v1930 = vpack.c.b16 %v1925, %v1924
          %v1931 = vpack.c.b16 %v1927, %v1926
          %vm1936 = vcmask 523264
          %v1938 = vsel %vm1936, %v1894, 0
          %1940 = vmatprep.subr.bf16.mxu0 0
          %1941 = vmatpush1.bf16.msra.mxu0 %v1928
          %1942 = vmatprep.subr.bf16.mxu0 0
          %1943 = vmatpush1.bf16.msra.mxu0 %v1929
          %1944 = vmatprep.subr.bf16.mxu0 0
          %1945 = vmatpush1.bf16.msra.mxu0 %v1930
          %1946 = vmatprep.subr.bf16.mxu0 0
          %1947 = vmatpush1.bf16.msra.mxu0 %v1931
          %1948 = vmatprep.subr.bf16.mxu0 0
          %1949 = vmatpush1.bf16.msra.mxu0 0
          %1950 = vmatprep.subr.bf16.mxu0 0
          %1951 = vmatpush1.bf16.msra.mxu0 0
          %1952 = vmatprep.subr.bf16.mxu0 0
          %1953 = vmatpush1.bf16.msra.mxu0 0
          %1954 = vmatprep.subr.bf16.mxu0 0
          %1955 = vmatpush1.bf16.msra.mxu0 0
          %1956 = vmatprep.subr.bf16.mxu0 0
          %1957 = vmatpush1.bf16.msra.mxu0 0
          %1958 = vmatprep.subr.bf16.mxu0 0
          %1959 = vmatpush1.bf16.msra.mxu0 0
          %1960 = vmatprep.subr.bf16.mxu0 0
          %1961 = vmatpush1.bf16.msra.mxu0 0
          %1962 = vmatprep.subr.bf16.mxu0 0
          %1963 = vmatpush1.bf16.msra.mxu0 0
          %1964 = vmatprep.subr.bf16.mxu0 0
          %1965 = vmatpush1.bf16.msra.mxu0 0
          %1966 = vmatprep.subr.bf16.mxu0 0
          %1967 = vmatpush1.bf16.msra.mxu0 0
          %1968 = vmatprep.subr.bf16.mxu0 0
          %1969 = vmatpush1.bf16.msra.mxu0 0
          %1970 = vmatprep.subr.bf16.mxu0 0
          %1971 = vmatpush1.bf16.msra.mxu0 0
          %1972 = vmatprep.mubr.bf16.mxu0 0
          %1973 = vmatmul.mubr.bf16.gmra.mrb[0].mxu0 %v1938
          %v1974 = vpop.f32.mrb[0].mxu0
          %v1975 = vadd.f32 %v1910, %v1974
          %v1976 = vpop.f32.mrb[0].mxu0
          %v1977 = vpop.f32.mrb[0].mxu0
          %v1978 = vpop.f32.mrb[0].mxu0
          %1979 = vdwg.mxu0
          %v1980 = vld [vmem:[#allocation2] sm:$0xff]
          %1982 = vset.pattern.permute.xlu0 3
          %1983 = vperm.xlu0 %1982, %v1275
          %v1984 = vpop.permute.xlu0 %1983
          %v1986 = vmul.f32 %v1984, %v1975
          %v1987 = vadd.f32 %v1980, %v1986
          %1988 = vst.msk [vmem:[#allocation2] sm:$0xff] %vm516, %v1987
        $region96: #{tpu_custom_call.1} parent=79 // pred_fallthru
          _
        %v1989 = vld [vmem:[#allocation2] sm:$0xff]
        %v1990 = vadd.f32 %v1130, %v1989
        %v1991 = vld [vmem:[%s13] sm:$0x1]
        %v1992 = vld [vmem:[%s14] sm:$0x1]
        %v1993 = vsel %vm516, %v1990, 0.0
        %1994 = vadd.xlane.f32.xlu0 %v1993
        %v1995 = vpop.xlane.xlu0 %1994
        %v1996 = vmul.f32 %v1995, %v1106
        %v1997 = vsub.f32 %v1990, %v1996
        %v1998 = vmul.f32 %v1997, %v1997
        %v1999 = vsel %vm516, %v1998, 0.0
        %2000 = vadd.xlane.f32.xlu0 %v1999
        %v2001 = vpop.xlane.xlu0 %2000
        %v2002 = vmul.f32 %v2001, %v1106
        %v2003 = vadd.f32 %v2002, 1e-05
        %v2004 = vrsqrt.pop %v2003
        %v2005 = vmul.f32 %v1997, %v2004
        %v2007 = vlaneseq
        %v2008 = vshrl.u32 %v2007, 7
        %v2009 = vsub.s32 0, %v2008
        %v2010 = vrot.slane %v1991, %v2009
        %v2012 = vmul.f32 %v2005, %v2010
        %v2014 = vlaneseq
        %v2015 = vshrl.u32 %v2014, 7
        %v2016 = vsub.s32 0, %v2015
        %v2017 = vrot.slane %v1992, %v2016
        %v2019 = vadd.f32 %v2012, %v2017
        %2020 = vst.msk [vmem:[%s485] sm:$0xff] %vm516, %v2019
        %s2021 = sand.u32 %s357, 1
        %s2022 = scalar_lea.sflag [#allocation4], %s2021
        %s2023 = sand.u32 %s357, 1
        %s2024 = smul.addr %s2023, 8
        %s2025 = scalar_lea.vmem [#allocation3], %s2024
        // Predicated region
        $region97: #{tpu_custom_call.1} parent=79 // pred_check
          %p2026 = pneg %p367
        $region98: #{tpu_custom_call.1} parent=79 // pred_check_branch
          %2028 = sbr.rel (%p2026) target = $region100
        $region99: #{tpu_custom_call.1} parent=79 // pred_region
          %s2030 = ssub.s32 128, 128
          %2031 = vsyncadd %s2022, %s2030
          %s2032 = smul.addr %s29, 128
          %s2033 = scalar_lea.hbm %s15, %s2032
          %s2035 = sshll.u32 %s2025, 4
          %s2036 = int_to_ptr.vmem [resolvable:$true] %s2035
          %2038 = dma.vmem_to_hbm [thread:$0]  %s2036, 128, %s2033, %s2022
        $region100: #{tpu_custom_call.1} parent=79 // pred_fallthru
          _
      $region80: #{tpu_custom_call.1} parent=5 // pred_fallthru
        _
      %p2039 = scmp.le.s32.totalorder 2, %s24
      // Predicated region
      $region101: #{tpu_custom_call.1} parent=5 // pred_check
        %p2040 = pneg %p2039
      $region102: #{tpu_custom_call.1} parent=5 // pred_check_branch
        %2042 = sbr.rel (%p2040) target = $region104
      $region103: #{tpu_custom_call.1} parent=5 // pred_region
        %s2043 = ssub.s32 %s24, 2
        // Predicated region
        $region105: #{tpu_custom_call.1} parent=103 // pred_check
          %p2044 = pneg %p373
        $region106: #{tpu_custom_call.1} parent=103 // pred_check_branch
          %2046 = sbr.rel (%p2044) target = $region108
        $region107: #{tpu_custom_call.1} parent=103 // pred_region
          %s2047 = sand.u32 %s358, 1
          %s2048 = scalar_lea.sflag [#allocation4], %s2047
          %s2049 = sand.u32 %s358, 1
          %s2050 = smul.addr %s2049, 8
          %s2051 = scalar_lea.vmem [#allocation3], %s2050
          %2052 = dma.done %s2048, 128
        $region108: #{tpu_custom_call.1} parent=103 // pred_fallthru
          _
      $region104: #{tpu_custom_call.1} parent=5 // pred_fallthru
        _
    $region6: #{tpu_custom_call.1} parent=1 // loop_footer
      %s28 = sadd.s32 1, %s24
    $region7: #{tpu_custom_call.1} parent=1 // loop_footer_branch
      %23 = sbr.rel target = $region3
    $region8: #{tpu_custom_call.1} parent=1 // loop_exit
      _
    %2053 = vsyncpa [#allocation4], 1
    %s2054 = scalar_lea.sflag [#allocation4], 1
    %2055 = vsyncpa %s2054, 1

// kernel: tpu_custom_call.1
$region0: #{tpu_custom_call.1}
  #allocation0 [shape = 'u32[]', space=smem, size = 0x4, offset = 0x4, fixed_abs, tag = 'smem constant byte address 0x4 - core index']
  #allocation1 [shape = 'u32[144,128]{1,0:T(1,128)}', space=vmem, size = 0x12000, scoped, tag = 'internal scratch']
  #allocation2 [shape = 'f32[8,32]{1,0:T(8,128)}', space=vmem, size = 0x1000, scoped, tag = 'scratch operand']
  %s0 = inlined_call_operand.vmem [shape: f32[16,32], index: 0, kind: input, shape index: {}]
  %s1 = inlined_call_operand.vmem [shape: bf16[32,96], index: 1, kind: input, shape index: {}]
  %s2 = inlined_call_operand.vmem [shape: f32[1,96], index: 2, kind: input, shape index: {}]
  %s3 = inlined_call_operand.vmem [shape: bf16[32,32], index: 3, kind: input, shape index: {}]
  %s4 = inlined_call_operand.vmem [shape: f32[1,32], index: 4, kind: input, shape index: {}]
  %s5 = inlined_call_operand.vmem [shape: f32[1,32], index: 5, kind: input, shape index: {}]
  %s6 = inlined_call_operand.vmem [shape: f32[1,32], index: 6, kind: input, shape index: {}]
  %s7 = inlined_call_operand.vmem [shape: f32[32,4], index: 7, kind: input, shape index: {}]
  %s8 = inlined_call_operand.vmem [shape: f32[1,4], index: 8, kind: input, shape index: {}]
  %s9 = inlined_call_operand.vmem [shape: bf16[4,32,64], index: 9, kind: input, shape index: {}]
  %s10 = inlined_call_operand.vmem [shape: f32[4,1,64], index: 10, kind: input, shape index: {}]
  %s11 = inlined_call_operand.vmem [shape: bf16[4,64,32], index: 11, kind: input, shape index: {}]
  %s12 = inlined_call_operand.vmem [shape: f32[4,1,32], index: 12, kind: input, shape index: {}]
  %s13 = inlined_call_operand.vmem [shape: f32[1,32], index: 13, kind: input, shape index: {}]
  %s14 = inlined_call_operand.vmem [shape: f32[1,32], index: 14, kind: input, shape index: {}]
  %s15 = inlined_call_operand.hbm [shape: f32[16,32], index: 15, kind: output, shape index: {}]
  %s16 = sld [smem:[#allocation0]]
  $region109: #{tpu_custom_call.1} parent=0
    _
  %s18 = ssub.s32 1, %s16
  %s19 = scalar_select 0, %s18, %s16
  $region1: #{tpu_custom_call.1} parent=0
    #allocation3 [shape = 'u8[8192]{0}', space=vmem, size = 0x2000, scoped, tag = 'output window, operand 0']
    #allocation4 [shape = 's32[2]{0}', space=sflag, size = 0x8, scoped, tag = 'scoped memory for tpu_custom_call.1']
    %20 = vsyncpa [#allocation4], 0
    %s21 = scalar_lea.sflag [#allocation4], 1
    %22 = vsyncpa %s21, 0
    loop: start=0, step=1, limit=4
    $region2: #{tpu_custom_call.1} parent=1 // loop_pre_header
      _
    $region3: #{tpu_custom_call.1} parent=1 // loop_header
      %s24 = sphi 0, %s28
      %p25 = scmp.ge.s32.totalorder %s24, 4
      %s34 = sphi 0, %s36
      %s37 = sphi 0, %s34
      %s38 = sphi 0, %s37
      %s54 = sphi 0, %s38
      %s58 = sphi 0, %s58
      %s60 = sphi 0, %s58
      %s61 = sphi 0, %s60
      %s75 = sphi 0, %s61
      %s79 = sphi 0, %s79
      %s81 = sphi 0, %s79
      %s82 = sphi 0, %s81
      %s96 = sphi 0, %s82
      %s100 = sphi 0, %s100
      %s102 = sphi 0, %s100
      %s103 = sphi 0, %s102
      %s117 = sphi 0, %s103
      %s121 = sphi 0, %s121
      %s123 = sphi 0, %s121
      %s124 = sphi 0, %s123
      %s138 = sphi 0, %s124
      %s142 = sphi 0, %s142
      %s144 = sphi 0, %s142
      %s145 = sphi 0, %s144
      %s159 = sphi 0, %s145
      %s163 = sphi 0, %s163
      %s165 = sphi 0, %s163
      %s166 = sphi 0, %s165
      %s180 = sphi 0, %s166
      %s184 = sphi 0, %s184
      %s186 = sphi 0, %s184
      %s187 = sphi 0, %s186
      %s201 = sphi 0, %s187
      %s205 = sphi 0, %s205
      %s207 = sphi 0, %s205
      %s208 = sphi 0, %s207
      %s222 = sphi 0, %s208
      %s226 = sphi 0, %s226
      %s228 = sphi 0, %s226
      %s229 = sphi 0, %s228
      %s243 = sphi 0, %s229
      %s247 = sphi 0, %s247
      %s249 = sphi 0, %s247
      %s250 = sphi 0, %s249
      %s264 = sphi 0, %s250
      %s268 = sphi 0, %s268
      %s270 = sphi 0, %s268
      %s271 = sphi 0, %s270
      %s285 = sphi 0, %s271
      %s289 = sphi 0, %s289
      %s291 = sphi 0, %s289
      %s292 = sphi 0, %s291
      %s306 = sphi 0, %s292
      %s310 = sphi 0, %s310
      %s312 = sphi 0, %s310
      %s313 = sphi 0, %s312
      %s327 = sphi 0, %s313
      %s331 = sphi 0, %s331
      %s333 = sphi 0, %s331
      %s334 = sphi 0, %s333
      %s348 = sphi 0, %s334
      %s354 = sphi 0, %s356
      %s357 = sphi 0, %s354
      %s358 = sphi 0, %s357
      %s374 = sphi 0, %s358
    $region4: #{tpu_custom_call.1} parent=1 // loop_header_branch
      %27 = sbr.rel (%p25) target = $region8
    $region5: #{tpu_custom_call.1} parent=1 // loop_body
      %s29 = ssub.s32 %s24, 1
      %s30 = ssub.s32 %s24, 2
      %s31 = sadd.s32 %s24, 1
      %s32 = ssub.s32 %s24, %s31
      %p33 = scmp.eq.s32.totalorder %s32, 0
      %s35 = sadd.s32 %s34, 1
      %s36 = scalar_select %p33, %s34, %s35
      %p39 = pneg %p33
      %p40 = scmp.eq.s32.totalorder %s24, 1
      %p41 = por %p39, %p40
      %p42 = scmp.ne.s32.totalorder %s34, %s37
      %p43 = scmp.eq.s32.totalorder %s24, 0
      %p44 = por %p42, %p43
      %p45 = scmp.ne.s32.totalorder %s34, %s37
      %p46 = scmp.eq.s32.totalorder %s29, 1
      %p47 = por %p45, %p46
      %p48 = scmp.ne.s32.totalorder %s37, %s38
      %p49 = scmp.eq.s32.totalorder %s29, 0
      %p50 = por %p48, %p49
      %p51 = scmp.ne.s32.totalorder %s37, %s38
      %p52 = scmp.eq.s32.totalorder %s30, 1
      %p53 = por %p51, %p52
      %p55 = scmp.ne.s32.totalorder %s38, %s54
      %p56 = scmp.eq.s32.totalorder %s30, 0
      %p57 = por %p55, %p56
      %s59 = sadd.s32 %s58, 1
      %p62 = scmp.eq.s32.totalorder %s24, 1
      %p63 = scmp.ne.s32.totalorder %s58, %s60
      %p64 = scmp.eq.s32.totalorder %s24, 0
      %p65 = por %p63, %p64
      %p66 = scmp.ne.s32.totalorder %s58, %s60
      %p67 = scmp.eq.s32.totalorder %s29, 1
      %p68 = por %p66, %p67
      %p69 = scmp.ne.s32.totalorder %s60, %s61
      %p70 = scmp.eq.s32.totalorder %s29, 0
      %p71 = por %p69, %p70
      %p72 = scmp.ne.s32.totalorder %s60, %s61
      %p73 = scmp.eq.s32.totalorder %s30, 1
      %p74 = por %p72, %p73
      %p76 = scmp.ne.s32.totalorder %s61, %s75
      %p77 = scmp.eq.s32.totalorder %s30, 0
      %p78 = por %p76, %p77
      %s80 = sadd.s32 %s79, 1
      %p83 = scmp.eq.s32.totalorder %s24, 1
      %p84 = scmp.ne.s32.totalorder %s79, %s81
      %p85 = scmp.eq.s32.totalorder %s24, 0
      %p86 = por %p84, %p85
      %p87 = scmp.ne.s32.totalorder %s79, %s81
      %p88 = scmp.eq.s32.totalorder %s29, 1
      %p89 = por %p87, %p88
      %p90 = scmp.ne.s32.totalorder %s81, %s82
      %p91 = scmp.eq.s32.totalorder %s29, 0
      %p92 = por %p90, %p91
      %p93 = scmp.ne.s32.totalorder %s81, %s82
      %p94 = scmp.eq.s32.totalorder %s30, 1
      %p95 = por %p93, %p94
      %p97 = scmp.ne.s32.totalorder %s82, %s96
      %p98 = scmp.eq.s32.totalorder %s30, 0
      %p99 = por %p97, %p98
      %s101 = sadd.s32 %s100, 1
      %p104 = scmp.eq.s32.totalorder %s24, 1
      %p105 = scmp.ne.s32.totalorder %s100, %s102
      %p106 = scmp.eq.s32.totalorder %s24, 0
      %p107 = por %p105, %p106
      %p108 = scmp.ne.s32.totalorder %s100, %s102
      %p109 = scmp.eq.s32.totalorder %s29, 1
      %p110 = por %p108, %p109
      %p111 = scmp.ne.s32.totalorder %s102, %s103
      %p112 = scmp.eq.s32.totalorder %s29, 0
      %p113 = por %p111, %p112
      %p114 = scmp.ne.s32.totalorder %s102, %s103
      %p115 = scmp.eq.s32.totalorder %s30, 1
      %p116 = por %p114, %p115
      %p118 = scmp.ne.s32.totalorder %s103, %s117
      %p119 = scmp.eq.s32.totalorder %s30, 0
      %p120 = por %p118, %p119
      %s122 = sadd.s32 %s121, 1
      %p125 = scmp.eq.s32.totalorder %s24, 1
      %p126 = scmp.ne.s32.totalorder %s121, %s123
      %p127 = scmp.eq.s32.totalorder %s24, 0
      %p128 = por %p126, %p127
      %p129 = scmp.ne.s32.totalorder %s121, %s123
      %p130 = scmp.eq.s32.totalorder %s29, 1
      %p131 = por %p129, %p130
      %p132 = scmp.ne.s32.totalorder %s123, %s124
      %p133 = scmp.eq.s32.totalorder %s29, 0
      %p134 = por %p132, %p133
      %p135 = scmp.ne.s32.totalorder %s123, %s124
      %p136 = scmp.eq.s32.totalorder %s30, 1
      %p137 = por %p135, %p136
      %p139 = scmp.ne.s32.totalorder %s124, %s138
      %p140 = scmp.eq.s32.totalorder %s30, 0
      %p141 = por %p139, %p140
      %s143 = sadd.s32 %s142, 1
      %p146 = scmp.eq.s32.totalorder %s24, 1
      %p147 = scmp.ne.s32.totalorder %s142, %s144
      %p148 = scmp.eq.s32.totalorder %s24, 0
      %p149 = por %p147, %p148
      %p150 = scmp.ne.s32.totalorder %s142, %s144
      %p151 = scmp.eq.s32.totalorder %s29, 1
      %p152 = por %p150, %p151
      %p153 = scmp.ne.s32.totalorder %s144, %s145
      %p154 = scmp.eq.s32.totalorder %s29, 0
      %p155 = por %p153, %p154
      %p156 = scmp.ne.s32.totalorder %s144, %s145
      %p157 = scmp.eq.s32.totalorder %s30, 1
      %p158 = por %p156, %p157
      %p160 = scmp.ne.s32.totalorder %s145, %s159
      %p161 = scmp.eq.s32.totalorder %s30, 0
      %p162 = por %p160, %p161
      %s164 = sadd.s32 %s163, 1
      %p167 = scmp.eq.s32.totalorder %s24, 1
      %p168 = scmp.ne.s32.totalorder %s163, %s165
      %p169 = scmp.eq.s32.totalorder %s24, 0
      %p170 = por %p168, %p169
      %p171 = scmp.ne.s32.totalorder %s163, %s165
      %p172 = scmp.eq.s32.totalorder %s29, 1
      %p173 = por %p171, %p172
      %p174 = scmp.ne.s32.totalorder %s165, %s166
      %p175 = scmp.eq.s32.totalorder %s29, 0
      %p176 = por %p174, %p175
      %p177 = scmp.ne.s32.totalorder %s165, %s166
      %p178 = scmp.eq.s32.totalorder %s30, 1
      %p179 = por %p177, %p178
      %p181 = scmp.ne.s32.totalorder %s166, %s180
      %p182 = scmp.eq.s32.totalorder %s30, 0
      %p183 = por %p181, %p182
      %s185 = sadd.s32 %s184, 1
      %p188 = scmp.eq.s32.totalorder %s24, 1
      %p189 = scmp.ne.s32.totalorder %s184, %s186
      %p190 = scmp.eq.s32.totalorder %s24, 0
      %p191 = por %p189, %p190
      %p192 = scmp.ne.s32.totalorder %s184, %s186
      %p193 = scmp.eq.s32.totalorder %s29, 1
      %p194 = por %p192, %p193
      %p195 = scmp.ne.s32.totalorder %s186, %s187
      %p196 = scmp.eq.s32.totalorder %s29, 0
      %p197 = por %p195, %p196
      %p198 = scmp.ne.s32.totalorder %s186, %s187
      %p199 = scmp.eq.s32.totalorder %s30, 1
      %p200 = por %p198, %p199
      %p202 = scmp.ne.s32.totalorder %s187, %s201
      %p203 = scmp.eq.s32.totalorder %s30, 0
      %p204 = por %p202, %p203
      %s206 = sadd.s32 %s205, 1
      %p209 = scmp.eq.s32.totalorder %s24, 1
      %p210 = scmp.ne.s32.totalorder %s205, %s207
      %p211 = scmp.eq.s32.totalorder %s24, 0
      %p212 = por %p210, %p211
      %p213 = scmp.ne.s32.totalorder %s205, %s207
      %p214 = scmp.eq.s32.totalorder %s29, 1
      %p215 = por %p213, %p214
      %p216 = scmp.ne.s32.totalorder %s207, %s208
      %p217 = scmp.eq.s32.totalorder %s29, 0
      %p218 = por %p216, %p217
      %p219 = scmp.ne.s32.totalorder %s207, %s208
      %p220 = scmp.eq.s32.totalorder %s30, 1
      %p221 = por %p219, %p220
      %p223 = scmp.ne.s32.totalorder %s208, %s222
      %p224 = scmp.eq.s32.totalorder %s30, 0
      %p225 = por %p223, %p224
      %s227 = sadd.s32 %s226, 1
      %p230 = scmp.eq.s32.totalorder %s24, 1
      %p231 = scmp.ne.s32.totalorder %s226, %s228
      %p232 = scmp.eq.s32.totalorder %s24, 0
      %p233 = por %p231, %p232
      %p234 = scmp.ne.s32.totalorder %s226, %s228
      %p235 = scmp.eq.s32.totalorder %s29, 1
      %p236 = por %p234, %p235
      %p237 = scmp.ne.s32.totalorder %s228, %s229
      %p238 = scmp.eq.s32.totalorder %s29, 0
      %p239 = por %p237, %p238
      %p240 = scmp.ne.s32.totalorder %s228, %s229
      %p241 = scmp.eq.s32.totalorder %s30, 1
      %p242 = por %p240, %p241
      %p244 = scmp.ne.s32.totalorder %s229, %s243
      %p245 = scmp.eq.s32.totalorder %s30, 0
      %p246 = por %p244, %p245
      %s248 = sadd.s32 %s247, 1
      %p251 = scmp.eq.s32.totalorder %s24, 1
      %p252 = scmp.ne.s32.totalorder %s247, %s249
      %p253 = scmp.eq.s32.totalorder %s24, 0
      %p254 = por %p252, %p253
      %p255 = scmp.ne.s32.totalorder %s247, %s249
      %p256 = scmp.eq.s32.totalorder %s29, 1
      %p257 = por %p255, %p256
      %p258 = scmp.ne.s32.totalorder %s249, %s250
      %p259 = scmp.eq.s32.totalorder %s29, 0
      %p260 = por %p258, %p259
      %p261 = scmp.ne.s32.totalorder %s249, %s250
      %p262 = scmp.eq.s32.totalorder %s30, 1
      %p263 = por %p261, %p262
      %p265 = scmp.ne.s32.totalorder %s250, %s264
      %p266 = scmp.eq.s32.totalorder %s30, 0
      %p267 = por %p265, %p266
      %s269 = sadd.s32 %s268, 1
      %p272 = scmp.eq.s32.totalorder %s24, 1
      %p273 = scmp.ne.s32.totalorder %s268, %s270
      %p274 = scmp.eq.s32.totalorder %s24, 0
      %p275 = por %p273, %p274
      %p276 = scmp.ne.s32.totalorder %s268, %s270
      %p277 = scmp.eq.s32.totalorder %s29, 1
      %p278 = por %p276, %p277
      %p279 = scmp.ne.s32.totalorder %s270, %s271
      %p280 = scmp.eq.s32.totalorder %s29, 0
      %p281 = por %p279, %p280
      %p282 = scmp.ne.s32.totalorder %s270, %s271
      %p283 = scmp.eq.s32.totalorder %s30, 1
      %p284 = por %p282, %p283
      %p286 = scmp.ne.s32.totalorder %s271, %s285
      %p287 = scmp.eq.s32.totalorder %s30, 0
      %p288 = por %p286, %p287
      %s290 = sadd.s32 %s289, 1
      %p293 = scmp.eq.s32.totalorder %s24, 1
      %p294 = scmp.ne.s32.totalorder %s289, %s291
      %p295 = scmp.eq.s32.totalorder %s24, 0
      %p296 = por %p294, %p295
      %p297 = scmp.ne.s32.totalorder %s289, %s291
      %p298 = scmp.eq.s32.totalorder %s29, 1
      %p299 = por %p297, %p298
      %p300 = scmp.ne.s32.totalorder %s291, %s292
      %p301 = scmp.eq.s32.totalorder %s29, 0
      %p302 = por %p300, %p301
      %p303 = scmp.ne.s32.totalorder %s291, %s292
      %p304 = scmp.eq.s32.totalorder %s30, 1
      %p305 = por %p303, %p304
      %p307 = scmp.ne.s32.totalorder %s292, %s306
      %p308 = scmp.eq.s32.totalorder %s30, 0
      %p309 = por %p307, %p308
      %s311 = sadd.s32 %s310, 1
      %p314 = scmp.eq.s32.totalorder %s24, 1
      %p315 = scmp.ne.s32.totalorder %s310, %s312
      %p316 = scmp.eq.s32.totalorder %s24, 0
      %p317 = por %p315, %p316
      %p318 = scmp.ne.s32.totalorder %s310, %s312
      %p319 = scmp.eq.s32.totalorder %s29, 1
      %p320 = por %p318, %p319
      %p321 = scmp.ne.s32.totalorder %s312, %s313
      %p322 = scmp.eq.s32.totalorder %s29, 0
      %p323 = por %p321, %p322
      %p324 = scmp.ne.s32.totalorder %s312, %s313
      %p325 = scmp.eq.s32.totalorder %s30, 1
      %p326 = por %p324, %p325
      %p328 = scmp.ne.s32.totalorder %s313, %s327
      %p329 = scmp.eq.s32.totalorder %s30, 0
      %p330 = por %p328, %p329
      %s332 = sadd.s32 %s331, 1
      %p335 = scmp.eq.s32.totalorder %s24, 1
      %p336 = scmp.ne.s32.totalorder %s331, %s333
      %p337 = scmp.eq.s32.totalorder %s24, 0
      %p338 = por %p336, %p337
      %p339 = scmp.ne.s32.totalorder %s331, %s333
      %p340 = scmp.eq.s32.totalorder %s29, 1
      %p341 = por %p339, %p340
      %p342 = scmp.ne.s32.totalorder %s333, %s334
      %p343 = scmp.eq.s32.totalorder %s29, 0
      %p344 = por %p342, %p343
      %p345 = scmp.ne.s32.totalorder %s333, %s334
      %p346 = scmp.eq.s32.totalorder %s30, 1
      %p347 = por %p345, %p346
      %p349 = scmp.ne.s32.totalorder %s334, %s348
      %p350 = scmp.eq.s32.totalorder %s30, 0
      %p351 = por %p349, %p350
      %s352 = ssub.s32 %s24, %s31
      %p353 = scmp.eq.s32.totalorder %s352, 0
      %s355 = sadd.s32 %s354, 1
      %s356 = scalar_select %p353, %s354, %s355
      %p359 = pneg %p353
      %p360 = scmp.eq.s32.totalorder %s24, 1
      %p361 = por %p359, %p360
      %p362 = scmp.ne.s32.totalorder %s354, %s357
      %p363 = scmp.eq.s32.totalorder %s24, 0
      %p364 = por %p362, %p363
      %p365 = scmp.ne.s32.totalorder %s354, %s357
      %p366 = scmp.eq.s32.totalorder %s29, 1
      %p367 = por %p365, %p366
      %p368 = scmp.ne.s32.totalorder %s357, %s358
      %p369 = scmp.eq.s32.totalorder %s29, 0
      %p370 = por %p368, %p369
      %p371 = scmp.ne.s32.totalorder %s357, %s358
      %p372 = scmp.eq.s32.totalorder %s30, 1
      %p373 = por %p371, %p372
      %p375 = scmp.ne.s32.totalorder %s358, %s374
      %p376 = scmp.eq.s32.totalorder %s30, 0
      %p377 = por %p375, %p376
      %p378 = scmp.le.s32.totalorder 1, %s24
      %p379 = scmp.lt.s32.totalorder %s24, 3
      %p380 = pnand %p378, %p379
      %p381 = pneg %p380
      // Predicated region
      $region9: #{tpu_custom_call.1} parent=5 // pred_check
        _
      $region10: #{tpu_custom_call.1} parent=5 // pred_check_branch
        %383 = sbr.rel (%p380) target = $region12
      $region11: #{tpu_custom_call.1} parent=5 // pred_region
        %s384 = ssub.s32 %s24, 1
        // Predicated region
        $region13: #{tpu_custom_call.1} parent=11 // pred_check
          %p385 = pneg %p71
        $region14: #{tpu_custom_call.1} parent=11 // pred_check_branch
          %387 = sbr.rel (%p385) target = $region16
        $region15: #{tpu_custom_call.1} parent=11 // pred_region
          _
        $region16: #{tpu_custom_call.1} parent=11 // pred_fallthru
          _
        // Predicated region
        $region17: #{tpu_custom_call.1} parent=11 // pred_check
          %p388 = pneg %p92
        $region18: #{tpu_custom_call.1} parent=11 // pred_check_branch
          %390 = sbr.rel (%p388) target = $region20
        $region19: #{tpu_custom_call.1} parent=11 // pred_region
          _
        $region20: #{tpu_custom_call.1} parent=11 // pred_fallthru
          _
        // Predicated region
        $region21: #{tpu_custom_call.1} parent=11 // pred_check
          %p391 = pneg %p113
        $region22: #{tpu_custom_call.1} parent=11 // pred_check_branch
          %393 = sbr.rel (%p391) target = $region24
        $region23: #{tpu_custom_call.1} parent=11 // pred_region
          _
        $region24: #{tpu_custom_call.1} parent=11 // pred_fallthru
          _
        // Predicated region
        $region25: #{tpu_custom_call.1} parent=11 // pred_check
          %p394 = pneg %p134
        $region26: #{tpu_custom_call.1} parent=11 // pred_check_branch
          %396 = sbr.rel (%p394) target = $region28
        $region27: #{tpu_custom_call.1} parent=11 // pred_region
          _
        $region28: #{tpu_custom_call.1} parent=11 // pred_fallthru
          _
        // Predicated region
        $region29: #{tpu_custom_call.1} parent=11 // pred_check
          %p397 = pneg %p155
        $region30: #{tpu_custom_call.1} parent=11 // pred_check_branch
          %399 = sbr.rel (%p397) target = $region32
        $region31: #{tpu_custom_call.1} parent=11 // pred_region
          _
        $region32: #{tpu_custom_call.1} parent=11 // pred_fallthru
          _
        // Predicated region
        $region33: #{tpu_custom_call.1} parent=11 // pred_check
          %p400 = pneg %p176
        $region34: #{tpu_custom_call.1} parent=11 // pred_check_branch
          %402 = sbr.rel (%p400) target = $region36
        $region35: #{tpu_custom_call.1} parent=11 // pred_region
          _
        $region36: #{tpu_custom_call.1} parent=11 // pred_fallthru
          _
        // Predicated region
        $region37: #{tpu_custom_call.1} parent=11 // pred_check
          %p403 = pneg %p197
        $region38: #{tpu_custom_call.1} parent=11 // pred_check_branch
          %405 = sbr.rel (%p403) target = $region40
        $region39: #{tpu_custom_call.1} parent=11 // pred_region
          _
        $region40: #{tpu_custom_call.1} parent=11 // pred_fallthru
          _
        // Predicated region
        $region41: #{tpu_custom_call.1} parent=11 // pred_check
          %p406 = pneg %p218
        $region42: #{tpu_custom_call.1} parent=11 // pred_check_branch
          %408 = sbr.rel (%p406) target = $region44
        $region43: #{tpu_custom_call.1} parent=11 // pred_region
          _
        $region44: #{tpu_custom_call.1} parent=11 // pred_fallthru
          _
        // Predicated region
        $region45: #{tpu_custom_call.1} parent=11 // pred_check
          %p409 = pneg %p239
        $region46: #{tpu_custom_call.1} parent=11 // pred_check_branch
          %411 = sbr.rel (%p409) target = $region48
        $region47: #{tpu_custom_call.1} parent=11 // pred_region
          _
        $region48: #{tpu_custom_call.1} parent=11 // pred_fallthru
          _
        // Predicated region
        $region49: #{tpu_custom_call.1} parent=11 // pred_check
          %p412 = pneg %p260
        $region50: #{tpu_custom_call.1} parent=11 // pred_check_branch
          %414 = sbr.rel (%p412) target = $region52
        $region51: #{tpu_custom_call.1} parent=11 // pred_region
          _
        $region52: #{tpu_custom_call.1} parent=11 // pred_fallthru
          _
        // Predicated region
        $region53: #{tpu_custom_call.1} parent=11 // pred_check
          %p415 = pneg %p281
        $region54: #{tpu_custom_call.1} parent=11 // pred_check_branch
          %417 = sbr.rel (%p415) target = $region56
        $region55: #{tpu_custom_call.1} parent=11 // pred_region
          _
        $region56: #{tpu_custom_call.1} parent=11 // pred_fallthru
          _
        // Predicated region
        $region57: #{tpu_custom_call.1} parent=11 // pred_check
          %p418 = pneg %p302
        $region58: #{tpu_custom_call.1} parent=11 // pred_check_branch
          %420 = sbr.rel (%p418) target = $region60
        $region59: #{tpu_custom_call.1} parent=11 // pred_region
          _
        $region60: #{tpu_custom_call.1} parent=11 // pred_fallthru
          _
        // Predicated region
        $region61: #{tpu_custom_call.1} parent=11 // pred_check
          %p421 = pneg %p323
        $region62: #{tpu_custom_call.1} parent=11 // pred_check_branch
          %423 = sbr.rel (%p421) target = $region64
        $region63: #{tpu_custom_call.1} parent=11 // pred_region
          _
        $region64: #{tpu_custom_call.1} parent=11 // pred_fallthru
          _
        // Predicated region
        $region65: #{tpu_custom_call.1} parent=11 // pred_check
          %p424 = pneg %p344
        $region66: #{tpu_custom_call.1} parent=11 // pred_check_branch
          %426 = sbr.rel (%p424) target = $region68
        $region67: #{tpu_custom_call.1} parent=11 // pred_region
          _
        $region68: #{tpu_custom_call.1} parent=11 // pred_fallthru
          _
      $region12: #{tpu_custom_call.1} parent=5 // pred_fallthru
        _
      %p427 = scmp.lt.s32.totalorder %s24, 2
      // Predicated region
      $region69: #{tpu_custom_call.1} parent=5 // pred_check
        %p428 = pneg %p427
      $region70: #{tpu_custom_call.1} parent=5 // pred_check_branch
        %430 = sbr.rel (%p428) target = $region72
      $region71: #{tpu_custom_call.1} parent=5 // pred_region
        // Predicated region
        $region73: #{tpu_custom_call.1} parent=71 // pred_check
          %p431 = pneg %p44
        $region74: #{tpu_custom_call.1} parent=71 // pred_check_branch
          %433 = sbr.rel (%p431) target = $region76
        $region75: #{tpu_custom_call.1} parent=71 // pred_region
          %p434 = scmp.lt.s32.totalorder %s24, 1
          %s435 = scalar_select %p434, %s24, 1
          %s436 = smul.addr %s435, 8
          %s437 = scalar_lea.vmem %s0, %s436
        $region76: #{tpu_custom_call.1} parent=71 // pred_fallthru
          _
      $region72: #{tpu_custom_call.1} parent=5 // pred_fallthru
        _
      %p438 = scmp.le.s32.totalorder 1, %s24
      %p439 = scmp.lt.s32.totalorder %s24, 3
      %p440 = pnand %p438, %p439
      %p441 = pneg %p440
      // Predicated region
      $region77: #{tpu_custom_call.1} parent=5 // pred_check
        _
      $region78: #{tpu_custom_call.1} parent=5 // pred_check_branch
        %443 = sbr.rel (%p440) target = $region80
      $region79: #{tpu_custom_call.1} parent=5 // pred_region
        %s444 = ssub.s32 %s24, 1
        %p445 = scmp.lt.s32.totalorder %s29, 1
        %s446 = scalar_select %p445, %s29, 1
        %s447 = smul.addr %s446, 8
        %s448 = scalar_lea.vmem %s0, %s447
        %p449 = pneg %p50
        %p450 = pneg %p47
        %p451 = pneg %p71
        %p452 = pneg %p68
        %p453 = pneg %p92
        %p454 = pneg %p89
        %p455 = pneg %p113
        %p456 = pneg %p110
        %p457 = pneg %p134
        %p458 = pneg %p131
        %p459 = pneg %p155
        %p460 = pneg %p152
        %p461 = pneg %p176
        %p462 = pneg %p173
        %p463 = pneg %p197
        %p464 = pneg %p194
        %p465 = pneg %p218
        %p466 = pneg %p215
        %p467 = pneg %p239
        %p468 = pneg %p236
        %p469 = pneg %p260
        %p470 = pneg %p257
        %p471 = pneg %p281
        %p472 = pneg %p278
        %p473 = pneg %p302
        %p474 = pneg %p299
        %p475 = pneg %p323
        %p476 = pneg %p320
        %p477 = pneg %p344
        %p478 = pneg %p341
        %p479 = pneg %p370
        %p480 = pneg %p367
        %s481 = sand.u32 %s357, 1
        %s482 = scalar_lea.sflag [#allocation4], %s481
        %s483 = sand.u32 %s357, 1
        %s484 = smul.addr %s483, 8
        %s485 = scalar_lea.vmem [#allocation3], %s484
        %p486 = scmp.lt.s32.totalorder %s29, 1
        %s487 = scalar_select %p486, %s29, 1
        %s488 = smul.addr %s487, 8
        %s489 = scalar_lea.vmem %s0, %s488
        %v491 = vld [vmem:[%s489] sm:$0xff]
        %v492 = vpack.c.bf16 %v491, %v491
        %v493 = vld [vmem:[%s1] sm:$0xf]
        %v494 = vld [vmem:[%s1 + $0x4] sm:$0xf]
        %v495 = vld [vmem:[%s1 + $0x8] sm:$0xf]
        %v496 = vld [vmem:[%s1 + $0xc] sm:$0xf]
        %v497 = vld [vmem:[%s2] sm:$0x1]
        %v499 = vlaneseq
        %v500 = vshrl.u32 %v499, 7
        %v501 = vsub.s32 0, %v500
        %v502 = vrot.slane %v497, %v501
        %v508 = vunpack.c.l.b16 %v493
        %v509 = vunpack.c.l.b16 %v494
        %v510 = vunpack.c.l.b16 %v495
        %v511 = vunpack.c.l.b16 %v496
        %v512 = vpack.c.b16 %v509, %v508
        %v513 = vpack.c.b16 %v511, %v510
        %vm516 = vcmask 261120
        %v518 = vsel %vm516, %v492, 0
        %520 = vmatprep.subr.bf16.mxu0 0
        %521 = vmatpush1.bf16.msra.mxu0 %v512
        %522 = vmatprep.subr.bf16.mxu0 0
        %523 = vmatpush1.bf16.msra.mxu0 %v513
        %524 = vmatprep.subr.bf16.mxu0 0
        %525 = vmatpush1.bf16.msra.mxu0 0
        %526 = vmatprep.subr.bf16.mxu0 0
        %527 = vmatpush1.bf16.msra.mxu0 0
        %528 = vmatprep.subr.bf16.mxu0 0
        %529 = vmatpush1.bf16.msra.mxu0 0
        %530 = vmatprep.subr.bf16.mxu0 0
        %531 = vmatpush1.bf16.msra.mxu0 0
        %532 = vmatprep.subr.bf16.mxu0 0
        %533 = vmatpush1.bf16.msra.mxu0 0
        %534 = vmatprep.subr.bf16.mxu0 0
        %535 = vmatpush1.bf16.msra.mxu0 0
        %536 = vmatprep.subr.bf16.mxu0 0
        %537 = vmatpush1.bf16.msra.mxu0 0
        %538 = vmatprep.subr.bf16.mxu0 0
        %539 = vmatpush1.bf16.msra.mxu0 0
        %540 = vmatprep.subr.bf16.mxu0 0
        %541 = vmatpush1.bf16.msra.mxu0 0
        %542 = vmatprep.subr.bf16.mxu0 0
        %543 = vmatpush1.bf16.msra.mxu0 0
        %544 = vmatprep.subr.bf16.mxu0 0
        %545 = vmatpush1.bf16.msra.mxu0 0
        %546 = vmatprep.subr.bf16.mxu0 0
        %547 = vmatpush1.bf16.msra.mxu0 0
        %548 = vmatprep.subr.bf16.mxu0 0
        %549 = vmatpush1.bf16.msra.mxu0 0
        %550 = vmatprep.subr.bf16.mxu0 0
        %551 = vmatpush1.bf16.msra.mxu0 0
        %552 = vmatprep.mubr.bf16.mxu0 0
        %553 = vmatmul.mubr.bf16.gmra.mrb[0].mxu0 %v518
        %v554 = vpop.f32.mrb[0].mxu0
        %v555 = vadd.f32 %v502, %v554
        %v556 = vpop.f32.mrb[0].mxu0
        %v557 = vpop.f32.mrb[0].mxu0
        %v558 = vpop.f32.mrb[0].mxu0
        %559 = vdwg.mxu0
        %561 = vrot.lane.b32.xlu0 %v555, 120
        %v562 = vpop.permute.xlu0 %561
        %564 = vrot.lane.b32.xlu0 %v555, 112
        %v565 = vpop.permute.xlu0 %564
        %567 = vrot.lane.b32.xlu0 %v555, 104
        %v568 = vpop.permute.xlu0 %567
        %v570 = vpack.c.bf16 %v555, %v555
        %v571 = vpack.c.bf16 %v562, %v562
        %v572 = vpack.c.bf16 %v565, %v565
        %v573 = vpack.c.bf16 %v568, %v568
        %575 = vrot.lane.b32.xlu0 %v570, 96
        %v576 = vpop.permute.xlu0 %575
        %vm577 = vcmask 64512
        %v579 = vsel %vm577, %v570, 0
        %v582 = vsel %vm577, %v576, 0
        %584 = vmatprep.subr.bf16.mxu0 0
        %585 = vmatpush1.bf16.xpose.msra.mxu0 %v582
        %586 = vmatprep.subr.bf16.mxu0 0
        %587 = vmatpush1.bf16.xpose.msra.mxu0 0
        %588 = vmatprep.subr.bf16.mxu0 0
        %589 = vmatpush1.bf16.xpose.msra.mxu0 0
        %590 = vmatprep.subr.bf16.mxu0 0
        %591 = vmatpush1.bf16.xpose.msra.mxu0 0
        %592 = vmatprep.subr.bf16.mxu0 0
        %593 = vmatpush1.bf16.xpose.msra.mxu0 0
        %594 = vmatprep.subr.bf16.mxu0 0
        %595 = vmatpush1.bf16.xpose.msra.mxu0 0
        %596 = vmatprep.subr.bf16.mxu0 0
        %597 = vmatpush1.bf16.xpose.msra.mxu0 0
        %598 = vmatprep.subr.bf16.mxu0 0
        %599 = vmatpush1.bf16.xpose.msra.mxu0 0
        %600 = vmatprep.subr.bf16.mxu0 0
        %601 = vmatpush1.bf16.xpose.msra.mxu0 0
        %602 = vmatprep.subr.bf16.mxu0 0
        %603 = vmatpush1.bf16.xpose.msra.mxu0 0
        %604 = vmatprep.subr.bf16.mxu0 0
        %605 = vmatpush1.bf16.xpose.msra.mxu0 0
        %606 = vmatprep.subr.bf16.mxu0 0
        %607 = vmatpush1.bf16.xpose.msra.mxu0 0
        %608 = vmatprep.subr.bf16.mxu0 0
        %609 = vmatpush1.bf16.xpose.msra.mxu0 0
        %610 = vmatprep.subr.bf16.mxu0 0
        %611 = vmatpush1.bf16.xpose.msra.mxu0 0
        %612 = vmatprep.subr.bf16.mxu0 0
        %613 = vmatpush1.bf16.xpose.msra.mxu0 0
        %614 = vmatprep.subr.bf16.mxu0 0
        %615 = vmatpush1.bf16.xpose.msra.mxu0 0
        %616 = vmatprep.mubr.bf16.mxu0 0
        %617 = vmatmul.mubr.bf16.gmra.mrb[0].mxu0 %v579
        %v618 = vpop.f32.mrb[0].mxu0
        %v619 = vadd.f32 0.0, %v618
        %v620 = vpop.f32.mrb[0].mxu0
        %v621 = vpop.f32.mrb[0].mxu0
        %v622 = vpop.f32.mrb[0].mxu0
        %623 = vdwg.mxu0
        %625 = vrot.lane.b32.xlu0 %v571, 96
        %v626 = vpop.permute.xlu0 %625
        %v628 = vsel %vm577, %v571, 0
        %v631 = vsel %vm577, %v626, 0
        %633 = vmatprep.subr.bf16.mxu0 0
        %634 = vmatpush1.bf16.xpose.msra.mxu0 %v631
        %635 = vmatprep.subr.bf16.mxu0 0
        %636 = vmatpush1.bf16.xpose.msra.mxu0 0
        %637 = vmatprep.subr.bf16.mxu0 0
        %638 = vmatpush1.bf16.xpose.msra.mxu0 0
        %639 = vmatprep.subr.bf16.mxu0 0
        %640 = vmatpush1.bf16.xpose.msra.mxu0 0
        %641 = vmatprep.subr.bf16.mxu0 0
        %642 = vmatpush1.bf16.xpose.msra.mxu0 0
        %643 = vmatprep.subr.bf16.mxu0 0
        %644 = vmatpush1.bf16.xpose.msra.mxu0 0
        %645 = vmatprep.subr.bf16.mxu0 0
        %646 = vmatpush1.bf16.xpose.msra.mxu0 0
        %647 = vmatprep.subr.bf16.mxu0 0
        %648 = vmatpush1.bf16.xpose.msra.mxu0 0
        %649 = vmatprep.subr.bf16.mxu0 0
        %650 = vmatpush1.bf16.xpose.msra.mxu0 0
        %651 = vmatprep.subr.bf16.mxu0 0
        %652 = vmatpush1.bf16.xpose.msra.mxu0 0
        %653 = vmatprep.subr.bf16.mxu0 0
        %654 = vmatpush1.bf16.xpose.msra.mxu0 0
        %655 = vmatprep.subr.bf16.mxu0 0
        %656 = vmatpush1.bf16.xpose.msra.mxu0 0
        %657 = vmatprep.subr.bf16.mxu0 0
        %658 = vmatpush1.bf16.xpose.msra.mxu0 0
        %659 = vmatprep.subr.bf16.mxu0 0
        %660 = vmatpush1.bf16.xpose.msra.mxu0 0
        %661 = vmatprep.subr.bf16.mxu0 0
        %662 = vmatpush1.bf16.xpose.msra.mxu0 0
        %663 = vmatprep.subr.bf16.mxu0 0
        %664 = vmatpush1.bf16.xpose.msra.mxu0 0
        %665 = vmatprep.mubr.bf16.mxu0 0
        %666 = vmatmul.mubr.bf16.gmra.mrb[0].mxu0 %v628
        %v667 = vpop.f32.mrb[0].mxu0
        %v668 = vadd.f32 0.0, %v667
        %v669 = vpop.f32.mrb[0].mxu0
        %v670 = vpop.f32.mrb[0].mxu0
        %v671 = vpop.f32.mrb[0].mxu0
        %672 = vdwg.mxu0
        %674 = vrot.lane.b32.xlu0 %v572, 96
        %v675 = vpop.permute.xlu0 %674
        %v677 = vsel %vm577, %v572, 0
        %v680 = vsel %vm577, %v675, 0
        %682 = vmatprep.subr.bf16.mxu0 0
        %683 = vmatpush1.bf16.xpose.msra.mxu0 %v680
        %684 = vmatprep.subr.bf16.mxu0 0
        %685 = vmatpush1.bf16.xpose.msra.mxu0 0
        %686 = vmatprep.subr.bf16.mxu0 0
        %687 = vmatpush1.bf16.xpose.msra.mxu0 0
        %688 = vmatprep.subr.bf16.mxu0 0
        %689 = vmatpush1.bf16.xpose.msra.mxu0 0
        %690 = vmatprep.subr.bf16.mxu0 0
        %691 = vmatpush1.bf16.xpose.msra.mxu0 0
        %692 = vmatprep.subr.bf16.mxu0 0
        %693 = vmatpush1.bf16.xpose.msra.mxu0 0
        %694 = vmatprep.subr.bf16.mxu0 0
        %695 = vmatpush1.bf16.xpose.msra.mxu0 0
        %696 = vmatprep.subr.bf16.mxu0 0
        %697 = vmatpush1.bf16.xpose.msra.mxu0 0
        %698 = vmatprep.subr.bf16.mxu0 0
        %699 = vmatpush1.bf16.xpose.msra.mxu0 0
        %700 = vmatprep.subr.bf16.mxu0 0
        %701 = vmatpush1.bf16.xpose.msra.mxu0 0
        %702 = vmatprep.subr.bf16.mxu0 0
        %703 = vmatpush1.bf16.xpose.msra.mxu0 0
        %704 = vmatprep.subr.bf16.mxu0 0
        %705 = vmatpush1.bf16.xpose.msra.mxu0 0
        %706 = vmatprep.subr.bf16.mxu0 0
        %707 = vmatpush1.bf16.xpose.msra.mxu0 0
        %708 = vmatprep.subr.bf16.mxu0 0
        %709 = vmatpush1.bf16.xpose.msra.mxu0 0
        %710 = vmatprep.subr.bf16.mxu0 0
        %711 = vmatpush1.bf16.xpose.msra.mxu0 0
        %712 = vmatprep.subr.bf16.mxu0 0
        %713 = vmatpush1.bf16.xpose.msra.mxu0 0
        %714 = vmatprep.mubr.bf16.mxu0 0
        %715 = vmatmul.mubr.bf16.gmra.mrb[0].mxu0 %v677
        %v716 = vpop.f32.mrb[0].mxu0
        %v717 = vadd.f32 0.0, %v716
        %v718 = vpop.f32.mrb[0].mxu0
        %v719 = vpop.f32.mrb[0].mxu0
        %v720 = vpop.f32.mrb[0].mxu0
        %721 = vdwg.mxu0
        %723 = vrot.lane.b32.xlu0 %v573, 96
        %v724 = vpop.permute.xlu0 %723
        %v726 = vsel %vm577, %v573, 0
        %v729 = vsel %vm577, %v724, 0
        %731 = vmatprep.subr.bf16.mxu0 0
        %732 = vmatpush1.bf16.xpose.msra.mxu0 %v729
        %733 = vmatprep.subr.bf16.mxu0 0
        %734 = vmatpush1.bf16.xpose.msra.mxu0 0
        %735 = vmatprep.subr.bf16.mxu0 0
        %736 = vmatpush1.bf16.xpose.msra.mxu0 0
        %737 = vmatprep.subr.bf16.mxu0 0
        %738 = vmatpush1.bf16.xpose.msra.mxu0 0
        %739 = vmatprep.subr.bf16.mxu0 0
        %740 = vmatpush1.bf16.xpose.msra.mxu0 0
        %741 = vmatprep.subr.bf16.mxu0 0
        %742 = vmatpush1.bf16.xpose.msra.mxu0 0
        %743 = vmatprep.subr.bf16.mxu0 0
        %744 = vmatpush1.bf16.xpose.msra.mxu0 0
        %745 = vmatprep.subr.bf16.mxu0 0
        %746 = vmatpush1.bf16.xpose.msra.mxu0 0
        %747 = vmatprep.subr.bf16.mxu0 0
        %748 = vmatpush1.bf16.xpose.msra.mxu0 0
        %749 = vmatprep.subr.bf16.mxu0 0
        %750 = vmatpush1.bf16.xpose.msra.mxu0 0
        %751 = vmatprep.subr.bf16.mxu0 0
        %752 = vmatpush1.bf16.xpose.msra.mxu0 0
        %753 = vmatprep.subr.bf16.mxu0 0
        %754 = vmatpush1.bf16.xpose.msra.mxu0 0
        %755 = vmatprep.subr.bf16.mxu0 0
        %756 = vmatpush1.bf16.xpose.msra.mxu0 0
        %757 = vmatprep.subr.bf16.mxu0 0
        %758 = vmatpush1.bf16.xpose.msra.mxu0 0
        %759 = vmatprep.subr.bf16.mxu0 0
        %760 = vmatpush1.bf16.xpose.msra.mxu0 0
        %761 = vmatprep.subr.bf16.mxu0 0
        %762 = vmatpush1.bf16.xpose.msra.mxu0 0
        %763 = vmatprep.mubr.bf16.mxu0 0
        %764 = vmatmul.mubr.bf16.gmra.mrb[0].mxu0 %v726
        %v765 = vpop.f32.mrb[0].mxu0
        %v766 = vadd.f32 0.0, %v765
        %v767 = vpop.f32.mrb[0].mxu0
        %v768 = vpop.f32.mrb[0].mxu0
        %v769 = vpop.f32.mrb[0].mxu0
        %770 = vdwg.mxu0
        %v771 = vmul.f32 %v619, 0.35355338
        %v772 = vmul.f32 %v668, 0.35355338
        %v773 = vmul.f32 %v717, 0.35355338
        %v774 = vmul.f32 %v766, 0.35355338
        %v775 = vsel %vm577, %v771, -inf
        %776 = vmax.xlane.f32.xlu0 %v775
        %v777 = vpop.xlane.xlu0 %776
        %v778 = vsel %vm577, %v772, -inf
        %779 = vmax.xlane.f32.xlu0 %v778
        %v780 = vpop.xlane.xlu0 %779
        %v781 = vsel %vm577, %v773, -inf
        %782 = vmax.xlane.f32.xlu0 %v781
        %v783 = vpop.xlane.xlu0 %782
        %v784 = vsel %vm577, %v774, -inf
        %785 = vmax.xlane.f32.xlu0 %v784
        %v786 = vpop.xlane.xlu0 %785
        %v787 = vsub.f32 %v771, %v777
        %v788 = vsub.f32 %v772, %v780
        %v789 = vsub.f32 %v773, %v783
        %v790 = vsub.f32 %v774, %v786
        %v791 = vmul.f32 %v787, 1.442695
        %v792 = vpow.pop %v791
        %v793 = vmul.f32 %v788, 1.442695
        %v794 = vpow.pop %v793
        %v795 = vmul.f32 %v789, 1.442695
        %v796 = vpow.pop %v795
        %v797 = vmul.f32 %v790, 1.442695
        %v798 = vpow.pop %v797
        %v799 = vsel %vm577, %v792, 0.0
        %800 = vadd.xlane.f32.xlu0 %v799
        %v801 = vpop.xlane.xlu0 %800
        %v802 = vsel %vm577, %v794, 0.0
        %803 = vadd.xlane.f32.xlu0 %v802
        %v804 = vpop.xlane.xlu0 %803
        %v805 = vsel %vm577, %v796, 0.0
        %806 = vadd.xlane.f32.xlu0 %v805
        %v807 = vpop.xlane.xlu0 %806
        %v808 = vsel %vm577, %v798, 0.0
        %809 = vadd.xlane.f32.xlu0 %v808
        %v810 = vpop.xlane.xlu0 %809
        %v811 = vrcp.pop %v801
        %v812 = vrcp.pop %v804
        %v813 = vrcp.pop %v807
        %v814 = vrcp.pop %v810
        %v815 = vmul.f32 %v792, %v811
        %v816 = vmul.f32 %v794, %v812
        %v817 = vmul.f32 %v796, %v813
        %v818 = vmul.f32 %v798, %v814
        %v819 = vpack.c.bf16 %v815, %v815
        %v820 = vpack.c.bf16 %v816, %v816
        %v821 = vpack.c.bf16 %v817, %v817
        %v822 = vpack.c.bf16 %v818, %v818
        %823 = vrot.lane.b32.xlu0 %v570, 64
        %v824 = vpop.permute.xlu0 %823
        %v826 = vsel %vm577, %v819, 0
        %vm828 = vcmask 1043456
        %v830 = vsel %vm828, %v824, 0
        %832 = vmatprep.subr.bf16.mxu0 0
        %833 = vmatpush1.bf16.msra.mxu0 %v830
        %834 = vmatprep.subr.bf16.mxu0 0
        %835 = vmatpush1.bf16.msra.mxu0 0
        %836 = vmatprep.subr.bf16.mxu0 0
        %837 = vmatpush1.bf16.msra.mxu0 0
        %838 = vmatprep.subr.bf16.mxu0 0
        %839 = vmatpush1.bf16.msra.mxu0 0
        %840 = vmatprep.subr.bf16.mxu0 0
        %841 = vmatpush1.bf16.msra.mxu0 0
        %842 = vmatprep.subr.bf16.mxu0 0
        %843 = vmatpush1.bf16.msra.mxu0 0
        %844 = vmatprep.subr.bf16.mxu0 0
        %845 = vmatpush1.bf16.msra.mxu0 0
        %846 = vmatprep.subr.bf16.mxu0 0
        %847 = vmatpush1.bf16.msra.mxu0 0
        %848 = vmatprep.subr.bf16.mxu0 0
        %849 = vmatpush1.bf16.msra.mxu0 0
        %850 = vmatprep.subr.bf16.mxu0 0
        %851 = vmatpush1.bf16.msra.mxu0 0
        %852 = vmatprep.subr.bf16.mxu0 0
        %853 = vmatpush1.bf16.msra.mxu0 0
        %854 = vmatprep.subr.bf16.mxu0 0
        %855 = vmatpush1.bf16.msra.mxu0 0
        %856 = vmatprep.subr.bf16.mxu0 0
        %857 = vmatpush1.bf16.msra.mxu0 0
        %858 = vmatprep.subr.bf16.mxu0 0
        %859 = vmatpush1.bf16.msra.mxu0 0
        %860 = vmatprep.subr.bf16.mxu0 0
        %861 = vmatpush1.bf16.msra.mxu0 0
        %862 = vmatprep.subr.bf16.mxu0 0
        %863 = vmatpush1.bf16.msra.mxu0 0
        %864 = vmatprep.mubr.bf16.mxu0 0
        %865 = vmatmul.mubr.bf16.gmra.mrb[0].mxu0 %v826
        %v866 = vpop.f32.mrb[0].mxu0
        %v867 = vadd.f32 0.0, %v866
        %v868 = vpop.f32.mrb[0].mxu0
        %v869 = vpop.f32.mrb[0].mxu0
        %v870 = vpop.f32.mrb[0].mxu0
        %871 = vdwg.mxu0
        %872 = vrot.lane.b32.xlu0 %v571, 64
        %v873 = vpop.permute.xlu0 %872
        %v875 = vsel %vm577, %v820, 0
        %v878 = vsel %vm828, %v873, 0
        %880 = vmatprep.subr.bf16.mxu0 0
        %881 = vmatpush1.bf16.msra.mxu0 %v878
        %882 = vmatprep.subr.bf16.mxu0 0
        %883 = vmatpush1.bf16.msra.mxu0 0
        %884 = vmatprep.subr.bf16.mxu0 0
        %885 = vmatpush1.bf16.msra.mxu0 0
        %886 = vmatprep.subr.bf16.mxu0 0
        %887 = vmatpush1.bf16.msra.mxu0 0
        %888 = vmatprep.subr.bf16.mxu0 0
        %889 = vmatpush1.bf16.msra.mxu0 0
        %890 = vmatprep.subr.bf16.mxu0 0
        %891 = vmatpush1.bf16.msra.mxu0 0
        %892 = vmatprep.subr.bf16.mxu0 0
        %893 = vmatpush1.bf16.msra.mxu0 0
        %894 = vmatprep.subr.bf16.mxu0 0
        %895 = vmatpush1.bf16.msra.mxu0 0
        %896 = vmatprep.subr.bf16.mxu0 0
        %897 = vmatpush1.bf16.msra.mxu0 0
        %898 = vmatprep.subr.bf16.mxu0 0
        %899 = vmatpush1.bf16.msra.mxu0 0
        %900 = vmatprep.subr.bf16.mxu0 0
        %901 = vmatpush1.bf16.msra.mxu0 0
        %902 = vmatprep.subr.bf16.mxu0 0
        %903 = vmatpush1.bf16.msra.mxu0 0
        %904 = vmatprep.subr.bf16.mxu0 0
        %905 = vmatpush1.bf16.msra.mxu0 0
        %906 = vmatprep.subr.bf16.mxu0 0
        %907 = vmatpush1.bf16.msra.mxu0 0
        %908 = vmatprep.subr.bf16.mxu0 0
        %909 = vmatpush1.bf16.msra.mxu0 0
        %910 = vmatprep.subr.bf16.mxu0 0
        %911 = vmatpush1.bf16.msra.mxu0 0
        %912 = vmatprep.mubr.bf16.mxu0 0
        %913 = vmatmul.mubr.bf16.gmra.mrb[0].mxu0 %v875
        %v914 = vpop.f32.mrb[0].mxu0
        %v915 = vadd.f32 0.0, %v914
        %v916 = vpop.f32.mrb[0].mxu0
        %v917 = vpop.f32.mrb[0].mxu0
        %v918 = vpop.f32.mrb[0].mxu0
        %919 = vdwg.mxu0
        %920 = vrot.lane.b32.xlu0 %v572, 64
        %v921 = vpop.permute.xlu0 %920
        %v923 = vsel %vm577, %v821, 0
        %v926 = vsel %vm828, %v921, 0
        %928 = vmatprep.subr.bf16.mxu0 0
        %929 = vmatpush1.bf16.msra.mxu0 %v926
        %930 = vmatprep.subr.bf16.mxu0 0
        %931 = vmatpush1.bf16.msra.mxu0 0
        %932 = vmatprep.subr.bf16.mxu0 0
        %933 = vmatpush1.bf16.msra.mxu0 0
        %934 = vmatprep.subr.bf16.mxu0 0
        %935 = vmatpush1.bf16.msra.mxu0 0
        %936 = vmatprep.subr.bf16.mxu0 0
        %937 = vmatpush1.bf16.msra.mxu0 0
        %938 = vmatprep.subr.bf16.mxu0 0
        %939 = vmatpush1.bf16.msra.mxu0 0
        %940 = vmatprep.subr.bf16.mxu0 0
        %941 = vmatpush1.bf16.msra.mxu0 0
        %942 = vmatprep.subr.bf16.mxu0 0
        %943 = vmatpush1.bf16.msra.mxu0 0
        %944 = vmatprep.subr.bf16.mxu0 0
        %945 = vmatpush1.bf16.msra.mxu0 0
        %946 = vmatprep.subr.bf16.mxu0 0
        %947 = vmatpush1.bf16.msra.mxu0 0
        %948 = vmatprep.subr.bf16.mxu0 0
        %949 = vmatpush1.bf16.msra.mxu0 0
        %950 = vmatprep.subr.bf16.mxu0 0
        %951 = vmatpush1.bf16.msra.mxu0 0
        %952 = vmatprep.subr.bf16.mxu0 0
        %953 = vmatpush1.bf16.msra.mxu0 0
        %954 = vmatprep.subr.bf16.mxu0 0
        %955 = vmatpush1.bf16.msra.mxu0 0
        %956 = vmatprep.subr.bf16.mxu0 0
        %957 = vmatpush1.bf16.msra.mxu0 0
        %958 = vmatprep.subr.bf16.mxu0 0
        %959 = vmatpush1.bf16.msra.mxu0 0
        %960 = vmatprep.mubr.bf16.mxu0 0
        %961 = vmatmul.mubr.bf16.gmra.mrb[0].mxu0 %v923
        %v962 = vpop.f32.mrb[0].mxu0
        %v963 = vadd.f32 0.0, %v962
        %v964 = vpop.f32.mrb[0].mxu0
        %v965 = vpop.f32.mrb[0].mxu0
        %v966 = vpop.f32.mrb[0].mxu0
        %967 = vdwg.mxu0
        %968 = vrot.lane.b32.xlu0 %v573, 64
        %v969 = vpop.permute.xlu0 %968
        %v971 = vsel %vm577, %v822, 0
        %v974 = vsel %vm828, %v969, 0
        %976 = vmatprep.subr.bf16.mxu0 0
        %977 = vmatpush1.bf16.msra.mxu0 %v974
        %978 = vmatprep.subr.bf16.mxu0 0
        %979 = vmatpush1.bf16.msra.mxu0 0
        %980 = vmatprep.subr.bf16.mxu0 0
        %981 = vmatpush1.bf16.msra.mxu0 0
        %982 = vmatprep.subr.bf16.mxu0 0
        %983 = vmatpush1.bf16.msra.mxu0 0
        %984 = vmatprep.subr.bf16.mxu0 0
        %985 = vmatpush1.bf16.msra.mxu0 0
        %986 = vmatprep.subr.bf16.mxu0 0
        %987 = vmatpush1.bf16.msra.mxu0 0
        %988 = vmatprep.subr.bf16.mxu0 0
        %989 = vmatpush1.bf16.msra.mxu0 0
        %990 = vmatprep.subr.bf16.mxu0 0
        %991 = vmatpush1.bf16.msra.mxu0 0
        %992 = vmatprep.subr.bf16.mxu0 0
        %993 = vmatpush1.bf16.msra.mxu0 0
        %994 = vmatprep.subr.bf16.mxu0 0
        %995 = vmatpush1.bf16.msra.mxu0 0
        %996 = vmatprep.subr.bf16.mxu0 0
        %997 = vmatpush1.bf16.msra.mxu0 0
        %998 = vmatprep.subr.bf16.mxu0 0
        %999 = vmatpush1.bf16.msra.mxu0 0
        %1000 = vmatprep.subr.bf16.mxu0 0
        %1001 = vmatpush1.bf16.msra.mxu0 0
        %1002 = vmatprep.subr.bf16.mxu0 0
        %1003 = vmatpush1.bf16.msra.mxu0 0
        %1004 = vmatprep.subr.bf16.mxu0 0
        %1005 = vmatpush1.bf16.msra.mxu0 0
        %1006 = vmatprep.subr.bf16.mxu0 0
        %1007 = vmatpush1.bf16.msra.mxu0 0
        %1008 = vmatprep.mubr.bf16.mxu0 0
        %1009 = vmatmul.mubr.bf16.gmra.mrb[0].mxu0 %v971
        %v1010 = vpop.f32.mrb[0].mxu0
        %v1011 = vadd.f32 0.0, %v1010
        %v1012 = vpop.f32.mrb[0].mxu0
        %v1013 = vpop.f32.mrb[0].mxu0
        %v1014 = vpop.f32.mrb[0].mxu0
        %1015 = vdwg.mxu0
        %1017 = vrot.lane.b32.xlu0 %v915, 8
        %v1018 = vpop.permute.xlu0 %1017
        %1021 = vrot.lane.b32.xlu0 %v963, 16
        %v1022 = vpop.permute.xlu0 %1021
        %1025 = vrot.lane.b32.xlu0 %v1011, 24
        %v1026 = vpop.permute.xlu0 %1025
        %v1028 = vsel %vm577, %v867, %v1018
        %vm1029 = vcmask 130048
        %v1030 = vsel %vm1029, %v1028, %v1022
        %vm1031 = vcmask 195584
        %v1032 = vsel %vm1031, %v1030, %v1026
        %v1033 = vpack.c.bf16 %v1032, %v1032
        %v1034 = vld [vmem:[%s3] sm:$0xf]
        %v1035 = vld [vmem:[%s3 + $0x4] sm:$0xf]
        %v1036 = vld [vmem:[%s3 + $0x8] sm:$0xf]
        %v1037 = vld [vmem:[%s3 + $0xc] sm:$0xf]
        %v1038 = vld [vmem:[%s4] sm:$0x1]
        %v1040 = vlaneseq
        %v1041 = vshrl.u32 %v1040, 7
        %v1042 = vsub.s32 0, %v1041
        %v1043 = vrot.slane %v1038, %v1042
        %v1049 = vunpack.c.l.b16 %v1034
        %v1050 = vunpack.c.l.b16 %v1035
        %v1051 = vunpack.c.l.b16 %v1036
        %v1052 = vunpack.c.l.b16 %v1037
        %v1053 = vpack.c.b16 %v1050, %v1049
        %v1054 = vpack.c.b16 %v1052, %v1051
        %v1058 = vsel %vm516, %v1033, 0
        %1060 = vmatprep.subr.bf16.mxu0 0
        %1061 = vmatpush1.bf16.msra.mxu0 %v1053
        %1062 = vmatprep.subr.bf16.mxu0 0
        %1063 = vmatpush1.bf16.msra.mxu0 %v1054
        %1064 = vmatprep.subr.bf16.mxu0 0
        %1065 = vmatpush1.bf16.msra.mxu0 0
        %1066 = vmatprep.subr.bf16.mxu0 0
        %1067 = vmatpush1.bf16.msra.mxu0 0
        %1068 = vmatprep.subr.bf16.mxu0 0
        %1069 = vmatpush1.bf16.msra.mxu0 0
        %1070 = vmatprep.subr.bf16.mxu0 0
        %1071 = vmatpush1.bf16.msra.mxu0 0
        %1072 = vmatprep.subr.bf16.mxu0 0
        %1073 = vmatpush1.bf16.msra.mxu0 0
        %1074 = vmatprep.subr.bf16.mxu0 0
        %1075 = vmatpush1.bf16.msra.mxu0 0
        %1076 = vmatprep.subr.bf16.mxu0 0
        %1077 = vmatpush1.bf16.msra.mxu0 0
        %1078 = vmatprep.subr.bf16.mxu0 0
        %1079 = vmatpush1.bf16.msra.mxu0 0
        %1080 = vmatprep.subr.bf16.mxu0 0
        %1081 = vmatpush1.bf16.msra.mxu0 0
        %1082 = vmatprep.subr.bf16.mxu0 0
        %1083 = vmatpush1.bf16.msra.mxu0 0
        %1084 = vmatprep.subr.bf16.mxu0 0
        %1085 = vmatpush1.bf16.msra.mxu0 0
        %1086 = vmatprep.subr.bf16.mxu0 0
        %1087 = vmatpush1.bf16.msra.mxu0 0
        %1088 = vmatprep.subr.bf16.mxu0 0
        %1089 = vmatpush1.bf16.msra.mxu0 0
        %1090 = vmatprep.subr.bf16.mxu0 0
        %1091 = vmatpush1.bf16.msra.mxu0 0
        %1092 = vmatprep.mubr.bf16.mxu0 0
        %1093 = vmatmul.mubr.bf16.gmra.mrb[0].mxu0 %v1058
        %v1094 = vpop.f32.mrb[0].mxu0
        %v1095 = vadd.f32 %v1043, %v1094
        %v1096 = vpop.f32.mrb[0].mxu0
        %v1097 = vpop.f32.mrb[0].mxu0
        %v1098 = vpop.f32.mrb[0].mxu0
        %1099 = vdwg.mxu0
        %v1100 = vadd.f32 %v491, %v1095
        %v1101 = vld [vmem:[%s5] sm:$0x1]
        %v1102 = vld [vmem:[%s6] sm:$0x1]
        %v1103 = vsel %vm516, %v1100, 0.0
        %1104 = vadd.xlane.f32.xlu0 %v1103
        %v1105 = vpop.xlane.xlu0 %1104
        %v1106 = vrcp.pop 32.0
        %v1107 = vmul.f32 %v1105, %v1106
        %v1108 = vsub.f32 %v1100, %v1107
        %v1109 = vmul.f32 %v1108, %v1108
        %v1110 = vsel %vm516, %v1109, 0.0
        %1111 = vadd.xlane.f32.xlu0 %v1110
        %v1112 = vpop.xlane.xlu0 %1111
        %v1113 = vmul.f32 %v1112, %v1106
        %v1114 = vadd.f32 %v1113, 1e-05
        %v1115 = vrsqrt.pop %v1114
        %v1116 = vmul.f32 %v1108, %v1115
        %v1118 = vlaneseq
        %v1119 = vshrl.u32 %v1118, 7
        %v1120 = vsub.s32 0, %v1119
        %v1121 = vrot.slane %v1101, %v1120
        %v1123 = vmul.f32 %v1116, %v1121
        %v1125 = vlaneseq
        %v1126 = vshrl.u32 %v1125, 7
        %v1127 = vsub.s32 0, %v1126
        %v1128 = vrot.slane %v1102, %v1127
        %v1130 = vadd.f32 %v1123, %v1128
        %v1131 = vpack.c.bf16 %v1130, %v1130
        %v1132 = vld [vmem:[%s7] sm:$0xff]
        %v1133 = vld [vmem:[%s7 + $0x8] sm:$0xff]
        %v1134 = vld [vmem:[%s7 + $0x10] sm:$0xff]
        %v1135 = vld [vmem:[%s7 + $0x18] sm:$0xff]
        %v1136 = vld [vmem:[%s8] sm:$0x1]
        %v1138 = vlaneseq
        %v1139 = vshrl.u32 %v1138, 7
        %v1140 = vsub.s32 0, %v1139
        %v1141 = vrot.slane %v1136, %v1140
        %v1144 = vsel %vm516, %v1130, 0
        %1146 = vmatprep.subr.mxu0 0.0
        %1147 = vmatpush1.msra.mxu0 %v1132
        %1148 = vmatprep.subr.mxu0 0.0
        %1149 = vmatpush1.msra.mxu0 %v1133
        %1150 = vmatprep.subr.mxu0 0.0
        %1151 = vmatpush1.msra.mxu0 %v1134
        %1152 = vmatprep.subr.mxu0 0.0
        %1153 = vmatpush1.msra.mxu0 %v1135
        %1154 = vmatprep.subr.mxu0 0.0
        %1155 = vmatpush1.msra.mxu0 0.0
        %1156 = vmatprep.subr.mxu0 0.0
        %1157 = vmatpush1.msra.mxu0 0.0
        %1158 = vmatprep.subr.mxu0 0.0
        %1159 = vmatpush1.msra.mxu0 0.0
        %1160 = vmatprep.subr.mxu0 0.0
        %1161 = vmatpush1.msra.mxu0 0.0
        %1162 = vmatprep.subr.mxu0 0.0
        %1163 = vmatpush1.msra.mxu0 0.0
        %1164 = vmatprep.subr.mxu0 0.0
        %1165 = vmatpush1.msra.mxu0 0.0
        %1166 = vmatprep.subr.mxu0 0.0
        %1167 = vmatpush1.msra.mxu0 0.0
        %1168 = vmatprep.subr.mxu0 0.0
        %1169 = vmatpush1.msra.mxu0 0.0
        %1170 = vmatprep.subr.mxu0 0.0
        %1171 = vmatpush1.msra.mxu0 0.0
        %1172 = vmatprep.subr.mxu0 0.0
        %1173 = vmatpush1.msra.mxu0 0.0
        %1174 = vmatprep.subr.mxu0 0.0
        %1175 = vmatpush1.msra.mxu0 0.0
        %1176 = vmatprep.subr.mxu0 0.0
        %1177 = vmatpush1.msra.mxu0 0.0
        %1178 = vmatprep.subr.mxu0 0.0
        %1179 = vmatpush1.msra.mxu0 0.0
        %1180 = vmatprep.subr.mxu0 0.0
        %1181 = vmatpush1.msra.mxu0 0.0
        %1182 = vmatprep.subr.mxu0 0.0
        %1183 = vmatpush1.msra.mxu0 0.0
        %1184 = vmatprep.subr.mxu0 0.0
        %1185 = vmatpush1.msra.mxu0 0.0
        %1186 = vmatprep.subr.mxu0 0.0
        %1187 = vmatpush1.msra.mxu0 0.0
        %1188 = vmatprep.subr.mxu0 0.0
        %1189 = vmatpush1.msra.mxu0 0.0
        %1190 = vmatprep.subr.mxu0 0.0
        %1191 = vmatpush1.msra.mxu0 0.0
        %1192 = vmatprep.subr.mxu0 0.0
        %1193 = vmatpush1.msra.mxu0 0.0
        %1194 = vmatprep.subr.mxu0 0.0
        %1195 = vmatpush1.msra.mxu0 0.0
        %1196 = vmatprep.subr.mxu0 0.0
        %1197 = vmatpush1.msra.mxu0 0.0
        %1198 = vmatprep.subr.mxu0 0.0
        %1199 = vmatpush1.msra.mxu0 0.0
        %1200 = vmatprep.subr.mxu0 0.0
        %1201 = vmatpush1.msra.mxu0 0.0
        %1202 = vmatprep.subr.mxu0 0.0
        %1203 = vmatpush1.msra.mxu0 0.0
        %1204 = vmatprep.subr.mxu0 0.0
        %1205 = vmatpush1.msra.mxu0 0.0
        %1206 = vmatprep.subr.mxu0 0.0
        %1207 = vmatpush1.msra.mxu0 0.0
        %1208 = vmatprep.subr.mxu0 0.0
        %1209 = vmatpush1.msra.mxu0 0.0
        %1210 = vmatprep.mubr.f32.mxu0 0.0
        %1211 = vmatmul.mubr.f32.gmra.mrb[0].mxu0 %v1144
        %v1212 = vpop.f32.mrb[0].mxu0
        %v1213 = vadd.f32 %v1141, %v1212
        %v1214 = vpop.f32.mrb[0].mxu0
        %1215 = vdwg.mxu0
        %vm1216 = vcmask 31744
        %v1217 = vsel %vm1216, %v1213, -inf
        %1218 = vmax.xlane.f32.xlu0 %v1217
        %v1219 = vpop.xlane.xlu0 %1218
        %v1220 = vsub.f32 %v1213, %v1219
        %v1221 = vmul.f32 %v1220, 1.442695
        %v1222 = vpow.pop %v1221
        %v1223 = vsel %vm1216, %v1222, 0.0
        %1224 = vadd.xlane.f32.xlu0 %v1223
        %v1225 = vpop.xlane.xlu0 %1224
        %v1226 = vrcp.pop %v1225
        %v1227 = vmul.f32 %v1222, %v1226
        %v1228 = vlaneseq
        %v1229 = vand.u32 %v1228, 127
        %v1230 = vsel %vm1216, %v1227, -inf
        %1231 = vmax.xlane.f32.xlu0 %v1230
        %v1232 = vpop.xlane.xlu0 %1231
        %vm1233 = vcmp.eq.f32.partialorder %v1227, %v1232
        %v1234 = vsel %vm1233, %v1229, 4
        %v1235 = vsel %vm1216, %v1234, 2147483647
        %v1236 = vand.u32 %v1235, 65535
        %v1237 = vshra.s32 %v1235, 16
        %v1238 = vcvt.s32.f32 %v1236
        %v1239 = vcvt.s32.f32 %v1237
        %1240 = vmin.xlane.f32.xlu0 %v1239
        %v1241 = vpop.xlane.xlu0 %1240
        %vm1242 = vcmp.eq.f32.partialorder %v1239, %v1241
        %v1243 = vsel %vm1242, %v1238, inf
        %1244 = vmin.xlane.f32.xlu0 %v1243
        %v1245 = vpop.xlane.xlu0 %1244
        %v1246 = vcvt.f32.s32 %v1245
        %v1247 = vcvt.f32.s32 %v1241
        %v1248 = vshll.u32 %v1247, 16
        %v1249 = vadd.s32 %v1248, %v1246
        %vm1250 = vcmp.eq.s32.totalorder %v1229, %v1249
        %v1251 = vsel %vm1250, -inf, %v1227
        %v1252 = vsel %vm1216, %v1251, -inf
        %1253 = vmax.xlane.f32.xlu0 %v1252
        %v1254 = vpop.xlane.xlu0 %1253
        %vm1255 = vcmp.eq.f32.partialorder %v1251, %v1254
        %v1256 = vsel %vm1255, %v1229, 4
        %v1257 = vsel %vm1216, %v1256, 2147483647
        %v1258 = vand.u32 %v1257, 65535
        %v1259 = vshra.s32 %v1257, 16
        %v1260 = vcvt.s32.f32 %v1258
        %v1261 = vcvt.s32.f32 %v1259
        %1262 = vmin.xlane.f32.xlu0 %v1261
        %v1263 = vpop.xlane.xlu0 %1262
        %vm1264 = vcmp.eq.f32.partialorder %v1261, %v1263
        %v1265 = vsel %vm1264, %v1260, inf
        %1266 = vmin.xlane.f32.xlu0 %v1265
        %v1267 = vpop.xlane.xlu0 %1266
        %v1268 = vcvt.f32.s32 %v1267
        %v1269 = vcvt.f32.s32 %v1263
        %v1270 = vshll.u32 %v1269, 16
        %v1271 = vadd.s32 %v1270, %v1268
        %v1272 = vsel %vm1250, %v1232, 0.0
        %vm1273 = vcmp.eq.s32.totalorder %v1229, %v1271
        %v1274 = vsel %vm1273, %v1254, 0.0
        %v1275 = vadd.f32 %v1272, %v1274
        %1276 = vst.msk [vmem:[#allocation2] sm:$0xff] %vm516, 0.0
        %vm1277 = vcmask 7168
        %v1278 = vsel %vm1277, %v1275, -inf
        %1279 = vmax.xlane.f32.xlu0 %v1278
        %v1280 = vpop.xlane.xlu0 %1279
        %v1281 = vrot.slane %v1280, 4
        %v1282 = vmax.f32 %v1280, %v1281
        %v1283 = vrot.slane %v1282, 2
        %v1284 = vmax.f32 %v1282, %v1283
        %v1285 = vrot.slane %v1284, 1
        %v1286 = vmax.f32 %v1284, %v1285
        %s1287 = vtos %v1286
        %p1288 = scmp.gt.f32.partialorder %s1287, 0.0
        // Predicated region
        $region81: #{tpu_custom_call.1} parent=79 // pred_check
          %p1289 = pneg %p1288
        $region82: #{tpu_custom_call.1} parent=79 // pred_check_branch
          %1291 = sbr.rel (%p1289) target = $region84
        $region83: #{tpu_custom_call.1} parent=79 // pred_region
          %v1292 = vld [vmem:[%s9] sm:$0xf]
          %v1293 = vld [vmem:[%s9 + $0x4] sm:$0xf]
          %v1294 = vld [vmem:[%s9 + $0x8] sm:$0xf]
          %v1295 = vld [vmem:[%s9 + $0xc] sm:$0xf]
          %v1296 = vld [vmem:[%s10] sm:$0x1]
          %v1298 = vlaneseq
          %v1299 = vshrl.u32 %v1298, 7
          %v1300 = vsub.s32 0, %v1299
          %v1301 = vrot.slane %v1296, %v1300
          %v1307 = vunpack.c.l.b16 %v1292
          %v1308 = vunpack.c.l.b16 %v1293
          %v1309 = vunpack.c.l.b16 %v1294
          %v1310 = vunpack.c.l.b16 %v1295
          %v1311 = vpack.c.b16 %v1308, %v1307
          %v1312 = vpack.c.b16 %v1310, %v1309
          %v1316 = vsel %vm516, %v1131, 0
          %1318 = vmatprep.subr.bf16.mxu0 0
          %1319 = vmatpush1.bf16.msra.mxu0 %v1311
          %1320 = vmatprep.subr.bf16.mxu0 0
          %1321 = vmatpush1.bf16.msra.mxu0 %v1312
          %1322 = vmatprep.subr.bf16.mxu0 0
          %1323 = vmatpush1.bf16.msra.mxu0 0
          %1324 = vmatprep.subr.bf16.mxu0 0
          %1325 = vmatpush1.bf16.msra.mxu0 0
          %1326 = vmatprep.subr.bf16.mxu0 0
          %1327 = vmatpush1.bf16.msra.mxu0 0
          %1328 = vmatprep.subr.bf16.mxu0 0
          %1329 = vmatpush1.bf16.msra.mxu0 0
          %1330 = vmatprep.subr.bf16.mxu0 0
          %1331 = vmatpush1.bf16.msra.mxu0 0
          %1332 = vmatprep.subr.bf16.mxu0 0
          %1333 = vmatpush1.bf16.msra.mxu0 0
          %1334 = vmatprep.subr.bf16.mxu0 0
          %1335 = vmatpush1.bf16.msra.mxu0 0
          %1336 = vmatprep.subr.bf16.mxu0 0
          %1337 = vmatpush1.bf16.msra.mxu0 0
          %1338 = vmatprep.subr.bf16.mxu0 0
          %1339 = vmatpush1.bf16.msra.mxu0 0
          %1340 = vmatprep.subr.bf16.mxu0 0
          %1341 = vmatpush1.bf16.msra.mxu0 0
          %1342 = vmatprep.subr.bf16.mxu0 0
          %1343 = vmatpush1.bf16.msra.mxu0 0
          %1344 = vmatprep.subr.bf16.mxu0 0
          %1345 = vmatpush1.bf16.msra.mxu0 0
          %1346 = vmatprep.subr.bf16.mxu0 0
          %1347 = vmatpush1.bf16.msra.mxu0 0
          %1348 = vmatprep.subr.bf16.mxu0 0
          %1349 = vmatpush1.bf16.msra.mxu0 0
          %1350 = vmatprep.mubr.bf16.mxu0 0
          %1351 = vmatmul.mubr.bf16.gmra.mrb[0].mxu0 %v1316
          %v1352 = vpop.f32.mrb[0].mxu0
          %v1353 = vadd.f32 %v1301, %v1352
          %v1354 = vpop.f32.mrb[0].mxu0
          %v1355 = vpop.f32.mrb[0].mxu0
          %v1356 = vpop.f32.mrb[0].mxu0
          %1357 = vdwg.mxu0
          %v1358 = vmax.f32 %v1353, 0.0
          %v1359 = vpack.c.bf16 %v1358, %v1358
          %v1360 = vld [vmem:[%s11] sm:$0xf]
          %v1361 = vld [vmem:[%s11 + $0x4] sm:$0xf]
          %v1362 = vld [vmem:[%s11 + $0x8] sm:$0xf]
          %v1363 = vld [vmem:[%s11 + $0xc] sm:$0xf]
          %v1364 = vld [vmem:[%s11 + $0x10] sm:$0xf]
          %v1365 = vld [vmem:[%s11 + $0x14] sm:$0xf]
          %v1366 = vld [vmem:[%s11 + $0x18] sm:$0xf]
          %v1367 = vld [vmem:[%s11 + $0x1c] sm:$0xf]
          %v1368 = vld [vmem:[%s12] sm:$0x1]
          %v1370 = vlaneseq
          %v1371 = vshrl.u32 %v1370, 7
          %v1372 = vsub.s32 0, %v1371
          %v1373 = vrot.slane %v1368, %v1372
          %v1383 = vunpack.c.l.b16 %v1360
          %v1384 = vunpack.c.l.b16 %v1361
          %v1385 = vunpack.c.l.b16 %v1362
          %v1386 = vunpack.c.l.b16 %v1363
          %v1387 = vunpack.c.l.b16 %v1364
          %v1388 = vunpack.c.l.b16 %v1365
          %v1389 = vunpack.c.l.b16 %v1366
          %v1390 = vunpack.c.l.b16 %v1367
          %v1391 = vpack.c.b16 %v1384, %v1383
          %v1392 = vpack.c.b16 %v1386, %v1385
          %v1393 = vpack.c.b16 %v1388, %v1387
          %v1394 = vpack.c.b16 %v1390, %v1389
          %vm1399 = vcmask 523264
          %v1401 = vsel %vm1399, %v1359, 0
          %1403 = vmatprep.subr.bf16.mxu0 0
          %1404 = vmatpush1.bf16.msra.mxu0 %v1391
          %1405 = vmatprep.subr.bf16.mxu0 0
          %1406 = vmatpush1.bf16.msra.mxu0 %v1392
          %1407 = vmatprep.subr.bf16.mxu0 0
          %1408 = vmatpush1.bf16.msra.mxu0 %v1393
          %1409 = vmatprep.subr.bf16.mxu0 0
          %1410 = vmatpush1.bf16.msra.mxu0 %v1394
          %1411 = vmatprep.subr.bf16.mxu0 0
          %1412 = vmatpush1.bf16.msra.mxu0 0
          %1413 = vmatprep.subr.bf16.mxu0 0
          %1414 = vmatpush1.bf16.msra.mxu0 0
          %1415 = vmatprep.subr.bf16.mxu0 0
          %1416 = vmatpush1.bf16.msra.mxu0 0
          %1417 = vmatprep.subr.bf16.mxu0 0
          %1418 = vmatpush1.bf16.msra.mxu0 0
          %1419 = vmatprep.subr.bf16.mxu0 0
          %1420 = vmatpush1.bf16.msra.mxu0 0
          %1421 = vmatprep.subr.bf16.mxu0 0
          %1422 = vmatpush1.bf16.msra.mxu0 0
          %1423 = vmatprep.subr.bf16.mxu0 0
          %1424 = vmatpush1.bf16.msra.mxu0 0
          %1425 = vmatprep.subr.bf16.mxu0 0
          %1426 = vmatpush1.bf16.msra.mxu0 0
          %1427 = vmatprep.subr.bf16.mxu0 0
          %1428 = vmatpush1.bf16.msra.mxu0 0
          %1429 = vmatprep.subr.bf16.mxu0 0
          %1430 = vmatpush1.bf16.msra.mxu0 0
          %1431 = vmatprep.subr.bf16.mxu0 0
          %1432 = vmatpush1.bf16.msra.mxu0 0
          %1433 = vmatprep.subr.bf16.mxu0 0
          %1434 = vmatpush1.bf16.msra.mxu0 0
          %1435 = vmatprep.mubr.bf16.mxu0 0
          %1436 = vmatmul.mubr.bf16.gmra.mrb[0].mxu0 %v1401
          %v1437 = vpop.f32.mrb[0].mxu0
          %v1438 = vadd.f32 %v1373, %v1437
          %v1439 = vpop.f32.mrb[0].mxu0
          %v1440 = vpop.f32.mrb[0].mxu0
          %v1441 = vpop.f32.mrb[0].mxu0
          %1442 = vdwg.mxu0
          %v1443 = vld [vmem:[#allocation2] sm:$0xff]
          %1445 = vset.pattern.permute.xlu0 0
          %1446 = vperm.xlu0 %1445, %v1275
          %v1447 = vpop.permute.xlu0 %1446
          %v1449 = vmul.f32 %v1447, %v1438
          %v1450 = vadd.f32 %v1443, %v1449
          %1451 = vst.msk [vmem:[#allocation2] sm:$0xff] %vm516, %v1450
        $region84: #{tpu_custom_call.1} parent=79 // pred_fallthru
          _
        %vm1452 = vcmask 15368
        %v1453 = vsel %vm1452, %v1275, -inf
        %1454 = vmax.xlane.f32.xlu0 %v1453
        %v1455 = vpop.xlane.xlu0 %1454
        %v1456 = vrot.slane %v1455, 4
        %v1457 = vmax.f32 %v1455, %v1456
        %v1458 = vrot.slane %v1457, 2
        %v1459 = vmax.f32 %v1457, %v1458
        %v1460 = vrot.slane %v1459, 1
        %v1461 = vmax.f32 %v1459, %v1460
        %s1462 = vtos %v1461
        %p1463 = scmp.gt.f32.partialorder %s1462, 0.0
        // Predicated region
        $region85: #{tpu_custom_call.1} parent=79 // pred_check
          %p1464 = pneg %p1463
        $region86: #{tpu_custom_call.1} parent=79 // pred_check_branch
          %1466 = sbr.rel (%p1464) target = $region88
        $region87: #{tpu_custom_call.1} parent=79 // pred_region
          %s1467 = scalar_lea.vmem %s9, 16
          %v1468 = vld [vmem:[%s1467] sm:$0xf]
          %v1469 = vld [vmem:[%s1467 + $0x4] sm:$0xf]
          %v1470 = vld [vmem:[%s1467 + $0x8] sm:$0xf]
          %v1471 = vld [vmem:[%s1467 + $0xc] sm:$0xf]
          %s1472 = scalar_lea.vmem %s10, 1
          %v1473 = vld [vmem:[%s1472] sm:$0x1]
          %v1475 = vlaneseq
          %v1476 = vshrl.u32 %v1475, 7
          %v1477 = vsub.s32 0, %v1476
          %v1478 = vrot.slane %v1473, %v1477
          %v1484 = vunpack.c.l.b16 %v1468
          %v1485 = vunpack.c.l.b16 %v1469
          %v1486 = vunpack.c.l.b16 %v1470
          %v1487 = vunpack.c.l.b16 %v1471
          %v1488 = vpack.c.b16 %v1485, %v1484
          %v1489 = vpack.c.b16 %v1487, %v1486
          %v1493 = vsel %vm516, %v1131, 0
          %1495 = vmatprep.subr.bf16.mxu0 0
          %1496 = vmatpush1.bf16.msra.mxu0 %v1488
          %1497 = vmatprep.subr.bf16.mxu0 0
          %1498 = vmatpush1.bf16.msra.mxu0 %v1489
          %1499 = vmatprep.subr.bf16.mxu0 0
          %1500 = vmatpush1.bf16.msra.mxu0 0
          %1501 = vmatprep.subr.bf16.mxu0 0
          %1502 = vmatpush1.bf16.msra.mxu0 0
          %1503 = vmatprep.subr.bf16.mxu0 0
          %1504 = vmatpush1.bf16.msra.mxu0 0
          %1505 = vmatprep.subr.bf16.mxu0 0
          %1506 = vmatpush1.bf16.msra.mxu0 0
          %1507 = vmatprep.subr.bf16.mxu0 0
          %1508 = vmatpush1.bf16.msra.mxu0 0
          %1509 = vmatprep.subr.bf16.mxu0 0
          %1510 = vmatpush1.bf16.msra.mxu0 0
          %1511 = vmatprep.subr.bf16.mxu0 0
          %1512 = vmatpush1.bf16.msra.mxu0 0
          %1513 = vmatprep.subr.bf16.mxu0 0
          %1514 = vmatpush1.bf16.msra.mxu0 0
          %1515 = vmatprep.subr.bf16.mxu0 0
          %1516 = vmatpush1.bf16.msra.mxu0 0
          %1517 = vmatprep.subr.bf16.mxu0 0
          %1518 = vmatpush1.bf16.msra.mxu0 0
          %1519 = vmatprep.subr.bf16.mxu0 0
          %1520 = vmatpush1.bf16.msra.mxu0 0
          %1521 = vmatprep.subr.bf16.mxu0 0
          %1522 = vmatpush1.bf16.msra.mxu0 0
          %1523 = vmatprep.subr.bf16.mxu0 0
          %1524 = vmatpush1.bf16.msra.mxu0 0
          %1525 = vmatprep.subr.bf16.mxu0 0
          %1526 = vmatpush1.bf16.msra.mxu0 0
          %1527 = vmatprep.mubr.bf16.mxu0 0
          %1528 = vmatmul.mubr.bf16.gmra.mrb[0].mxu0 %v1493
          %v1529 = vpop.f32.mrb[0].mxu0
          %v1530 = vadd.f32 %v1478, %v1529
          %v1531 = vpop.f32.mrb[0].mxu0
          %v1532 = vpop.f32.mrb[0].mxu0
          %v1533 = vpop.f32.mrb[0].mxu0
          %1534 = vdwg.mxu0
          %v1535 = vmax.f32 %v1530, 0.0
          %v1536 = vpack.c.bf16 %v1535, %v1535
          %s1537 = scalar_lea.vmem %s11, 32
          %v1538 = vld [vmem:[%s1537] sm:$0xf]
          %v1539 = vld [vmem:[%s1537 + $0x4] sm:$0xf]
          %v1540 = vld [vmem:[%s1537 + $0x8] sm:$0xf]
          %v1541 = vld [vmem:[%s1537 + $0xc] sm:$0xf]
          %v1542 = vld [vmem:[%s1537 + $0x10] sm:$0xf]
          %v1543 = vld [vmem:[%s1537 + $0x14] sm:$0xf]
          %v1544 = vld [vmem:[%s1537 + $0x18] sm:$0xf]
          %v1545 = vld [vmem:[%s1537 + $0x1c] sm:$0xf]
          %s1546 = scalar_lea.vmem %s12, 1
          %v1547 = vld [vmem:[%s1546] sm:$0x1]
          %v1549 = vlaneseq
          %v1550 = vshrl.u32 %v1549, 7
          %v1551 = vsub.s32 0, %v1550
          %v1552 = vrot.slane %v1547, %v1551
          %v1562 = vunpack.c.l.b16 %v1538
          %v1563 = vunpack.c.l.b16 %v1539
          %v1564 = vunpack.c.l.b16 %v1540
          %v1565 = vunpack.c.l.b16 %v1541
          %v1566 = vunpack.c.l.b16 %v1542
          %v1567 = vunpack.c.l.b16 %v1543
          %v1568 = vunpack.c.l.b16 %v1544
          %v1569 = vunpack.c.l.b16 %v1545
          %v1570 = vpack.c.b16 %v1563, %v1562
          %v1571 = vpack.c.b16 %v1565, %v1564
          %v1572 = vpack.c.b16 %v1567, %v1566
          %v1573 = vpack.c.b16 %v1569, %v1568
          %vm1578 = vcmask 523264
          %v1580 = vsel %vm1578, %v1536, 0
          %1582 = vmatprep.subr.bf16.mxu0 0
          %1583 = vmatpush1.bf16.msra.mxu0 %v1570
          %1584 = vmatprep.subr.bf16.mxu0 0
          %1585 = vmatpush1.bf16.msra.mxu0 %v1571
          %1586 = vmatprep.subr.bf16.mxu0 0
          %1587 = vmatpush1.bf16.msra.mxu0 %v1572
          %1588 = vmatprep.subr.bf16.mxu0 0
          %1589 = vmatpush1.bf16.msra.mxu0 %v1573
          %1590 = vmatprep.subr.bf16.mxu0 0
          %1591 = vmatpush1.bf16.msra.mxu0 0
          %1592 = vmatprep.subr.bf16.mxu0 0
          %1593 = vmatpush1.bf16.msra.mxu0 0
          %1594 = vmatprep.subr.bf16.mxu0 0
          %1595 = vmatpush1.bf16.msra.mxu0 0
          %1596 = vmatprep.subr.bf16.mxu0 0
          %1597 = vmatpush1.bf16.msra.mxu0 0
          %1598 = vmatprep.subr.bf16.mxu0 0
          %1599 = vmatpush1.bf16.msra.mxu0 0
          %1600 = vmatprep.subr.bf16.mxu0 0
          %1601 = vmatpush1.bf16.msra.mxu0 0
          %1602 = vmatprep.subr.bf16.mxu0 0
          %1603 = vmatpush1.bf16.msra.mxu0 0
          %1604 = vmatprep.subr.bf16.mxu0 0
          %1605 = vmatpush1.bf16.msra.mxu0 0
          %1606 = vmatprep.subr.bf16.mxu0 0
          %1607 = vmatpush1.bf16.msra.mxu0 0
          %1608 = vmatprep.subr.bf16.mxu0 0
          %1609 = vmatpush1.bf16.msra.mxu0 0
          %1610 = vmatprep.subr.bf16.mxu0 0
          %1611 = vmatpush1.bf16.msra.mxu0 0
          %1612 = vmatprep.subr.bf16.mxu0 0
          %1613 = vmatpush1.bf16.msra.mxu0 0
          %1614 = vmatprep.mubr.bf16.mxu0 0
          %1615 = vmatmul.mubr.bf16.gmra.mrb[0].mxu0 %v1580
          %v1616 = vpop.f32.mrb[0].mxu0
          %v1617 = vadd.f32 %v1552, %v1616
          %v1618 = vpop.f32.mrb[0].mxu0
          %v1619 = vpop.f32.mrb[0].mxu0
          %v1620 = vpop.f32.mrb[0].mxu0
          %1621 = vdwg.mxu0
          %v1622 = vld [vmem:[#allocation2] sm:$0xff]
          %1624 = vset.pattern.permute.xlu0 1
          %1625 = vperm.xlu0 %1624, %v1275
          %v1626 = vpop.permute.xlu0 %1625
          %v1628 = vmul.f32 %v1626, %v1617
          %v1629 = vadd.f32 %v1622, %v1628
          %1630 = vst.msk [vmem:[#allocation2] sm:$0xff] %vm516, %v1629
        $region88: #{tpu_custom_call.1} parent=79 // pred_fallthru
          _
        %vm1631 = vcmask 23568
        %v1632 = vsel %vm1631, %v1275, -inf
        %1633 = vmax.xlane.f32.xlu0 %v1632
        %v1634 = vpop.xlane.xlu0 %1633
        %v1635 = vrot.slane %v1634, 4
        %v1636 = vmax.f32 %v1634, %v1635
        %v1637 = vrot.slane %v1636, 2
        %v1638 = vmax.f32 %v1636, %v1637
        %v1639 = vrot.slane %v1638, 1
        %v1640 = vmax.f32 %v1638, %v1639
        %s1641 = vtos %v1640
        %p1642 = scmp.gt.f32.partialorder %s1641, 0.0
        // Predicated region
        $region89: #{tpu_custom_call.1} parent=79 // pred_check
          %p1643 = pneg %p1642
        $region90: #{tpu_custom_call.1} parent=79 // pred_check_branch
          %1645 = sbr.rel (%p1643) target = $region92
        $region91: #{tpu_custom_call.1} parent=79 // pred_region
          %s1646 = scalar_lea.vmem %s9, 32
          %v1647 = vld [vmem:[%s1646] sm:$0xf]
          %v1648 = vld [vmem:[%s1646 + $0x4] sm:$0xf]
          %v1649 = vld [vmem:[%s1646 + $0x8] sm:$0xf]
          %v1650 = vld [vmem:[%s1646 + $0xc] sm:$0xf]
          %s1651 = scalar_lea.vmem %s10, 2
          %v1652 = vld [vmem:[%s1651] sm:$0x1]
          %v1654 = vlaneseq
          %v1655 = vshrl.u32 %v1654, 7
          %v1656 = vsub.s32 0, %v1655
          %v1657 = vrot.slane %v1652, %v1656
          %v1663 = vunpack.c.l.b16 %v1647
          %v1664 = vunpack.c.l.b16 %v1648
          %v1665 = vunpack.c.l.b16 %v1649
          %v1666 = vunpack.c.l.b16 %v1650
          %v1667 = vpack.c.b16 %v1664, %v1663
          %v1668 = vpack.c.b16 %v1666, %v1665
          %v1672 = vsel %vm516, %v1131, 0
          %1674 = vmatprep.subr.bf16.mxu0 0
          %1675 = vmatpush1.bf16.msra.mxu0 %v1667
          %1676 = vmatprep.subr.bf16.mxu0 0
          %1677 = vmatpush1.bf16.msra.mxu0 %v1668
          %1678 = vmatprep.subr.bf16.mxu0 0
          %1679 = vmatpush1.bf16.msra.mxu0 0
          %1680 = vmatprep.subr.bf16.mxu0 0
          %1681 = vmatpush1.bf16.msra.mxu0 0
          %1682 = vmatprep.subr.bf16.mxu0 0
          %1683 = vmatpush1.bf16.msra.mxu0 0
          %1684 = vmatprep.subr.bf16.mxu0 0
          %1685 = vmatpush1.bf16.msra.mxu0 0
          %1686 = vmatprep.subr.bf16.mxu0 0
          %1687 = vmatpush1.bf16.msra.mxu0 0
          %1688 = vmatprep.subr.bf16.mxu0 0
          %1689 = vmatpush1.bf16.msra.mxu0 0
          %1690 = vmatprep.subr.bf16.mxu0 0
          %1691 = vmatpush1.bf16.msra.mxu0 0
          %1692 = vmatprep.subr.bf16.mxu0 0
          %1693 = vmatpush1.bf16.msra.mxu0 0
          %1694 = vmatprep.subr.bf16.mxu0 0
          %1695 = vmatpush1.bf16.msra.mxu0 0
          %1696 = vmatprep.subr.bf16.mxu0 0
          %1697 = vmatpush1.bf16.msra.mxu0 0
          %1698 = vmatprep.subr.bf16.mxu0 0
          %1699 = vmatpush1.bf16.msra.mxu0 0
          %1700 = vmatprep.subr.bf16.mxu0 0
          %1701 = vmatpush1.bf16.msra.mxu0 0
          %1702 = vmatprep.subr.bf16.mxu0 0
          %1703 = vmatpush1.bf16.msra.mxu0 0
          %1704 = vmatprep.subr.bf16.mxu0 0
          %1705 = vmatpush1.bf16.msra.mxu0 0
          %1706 = vmatprep.mubr.bf16.mxu0 0
          %1707 = vmatmul.mubr.bf16.gmra.mrb[0].mxu0 %v1672
          %v1708 = vpop.f32.mrb[0].mxu0
          %v1709 = vadd.f32 %v1657, %v1708
          %v1710 = vpop.f32.mrb[0].mxu0
          %v1711 = vpop.f32.mrb[0].mxu0
          %v1712 = vpop.f32.mrb[0].mxu0
          %1713 = vdwg.mxu0
          %v1714 = vmax.f32 %v1709, 0.0
          %v1715 = vpack.c.bf16 %v1714, %v1714
          %s1716 = scalar_lea.vmem %s11, 64
          %v1717 = vld [vmem:[%s1716] sm:$0xf]
          %v1718 = vld [vmem:[%s1716 + $0x4] sm:$0xf]
          %v1719 = vld [vmem:[%s1716 + $0x8] sm:$0xf]
          %v1720 = vld [vmem:[%s1716 + $0xc] sm:$0xf]
          %v1721 = vld [vmem:[%s1716 + $0x10] sm:$0xf]
          %v1722 = vld [vmem:[%s1716 + $0x14] sm:$0xf]
          %v1723 = vld [vmem:[%s1716 + $0x18] sm:$0xf]
          %v1724 = vld [vmem:[%s1716 + $0x1c] sm:$0xf]
          %s1725 = scalar_lea.vmem %s12, 2
          %v1726 = vld [vmem:[%s1725] sm:$0x1]
          %v1728 = vlaneseq
          %v1729 = vshrl.u32 %v1728, 7
          %v1730 = vsub.s32 0, %v1729
          %v1731 = vrot.slane %v1726, %v1730
          %v1741 = vunpack.c.l.b16 %v1717
          %v1742 = vunpack.c.l.b16 %v1718
          %v1743 = vunpack.c.l.b16 %v1719
          %v1744 = vunpack.c.l.b16 %v1720
          %v1745 = vunpack.c.l.b16 %v1721
          %v1746 = vunpack.c.l.b16 %v1722
          %v1747 = vunpack.c.l.b16 %v1723
          %v1748 = vunpack.c.l.b16 %v1724
          %v1749 = vpack.c.b16 %v1742, %v1741
          %v1750 = vpack.c.b16 %v1744, %v1743
          %v1751 = vpack.c.b16 %v1746, %v1745
          %v1752 = vpack.c.b16 %v1748, %v1747
          %vm1757 = vcmask 523264
          %v1759 = vsel %vm1757, %v1715, 0
          %1761 = vmatprep.subr.bf16.mxu0 0
          %1762 = vmatpush1.bf16.msra.mxu0 %v1749
          %1763 = vmatprep.subr.bf16.mxu0 0
          %1764 = vmatpush1.bf16.msra.mxu0 %v1750
          %1765 = vmatprep.subr.bf16.mxu0 0
          %1766 = vmatpush1.bf16.msra.mxu0 %v1751
          %1767 = vmatprep.subr.bf16.mxu0 0
          %1768 = vmatpush1.bf16.msra.mxu0 %v1752
          %1769 = vmatprep.subr.bf16.mxu0 0
          %1770 = vmatpush1.bf16.msra.mxu0 0
          %1771 = vmatprep.subr.bf16.mxu0 0
          %1772 = vmatpush1.bf16.msra.mxu0 0
          %1773 = vmatprep.subr.bf16.mxu0 0
          %1774 = vmatpush1.bf16.msra.mxu0 0
          %1775 = vmatprep.subr.bf16.mxu0 0
          %1776 = vmatpush1.bf16.msra.mxu0 0
          %1777 = vmatprep.subr.bf16.mxu0 0
          %1778 = vmatpush1.bf16.msra.mxu0 0
          %1779 = vmatprep.subr.bf16.mxu0 0
          %1780 = vmatpush1.bf16.msra.mxu0 0
          %1781 = vmatprep.subr.bf16.mxu0 0
          %1782 = vmatpush1.bf16.msra.mxu0 0
          %1783 = vmatprep.subr.bf16.mxu0 0
          %1784 = vmatpush1.bf16.msra.mxu0 0
          %1785 = vmatprep.subr.bf16.mxu0 0
          %1786 = vmatpush1.bf16.msra.mxu0 0
          %1787 = vmatprep.subr.bf16.mxu0 0
          %1788 = vmatpush1.bf16.msra.mxu0 0
          %1789 = vmatprep.subr.bf16.mxu0 0
          %1790 = vmatpush1.bf16.msra.mxu0 0
          %1791 = vmatprep.subr.bf16.mxu0 0
          %1792 = vmatpush1.bf16.msra.mxu0 0
          %1793 = vmatprep.mubr.bf16.mxu0 0
          %1794 = vmatmul.mubr.bf16.gmra.mrb[0].mxu0 %v1759
          %v1795 = vpop.f32.mrb[0].mxu0
          %v1796 = vadd.f32 %v1731, %v1795
          %v1797 = vpop.f32.mrb[0].mxu0
          %v1798 = vpop.f32.mrb[0].mxu0
          %v1799 = vpop.f32.mrb[0].mxu0
          %1800 = vdwg.mxu0
          %v1801 = vld [vmem:[#allocation2] sm:$0xff]
          %1803 = vset.pattern.permute.xlu0 2
          %1804 = vperm.xlu0 %1803, %v1275
          %v1805 = vpop.permute.xlu0 %1804
          %v1807 = vmul.f32 %v1805, %v1796
          %v1808 = vadd.f32 %v1801, %v1807
          %1809 = vst.msk [vmem:[#allocation2] sm:$0xff] %vm516, %v1808
        $region92: #{tpu_custom_call.1} parent=79 // pred_fallthru
          _
        %vm1810 = vcmask 31768
        %v1811 = vsel %vm1810, %v1275, -inf
        %1812 = vmax.xlane.f32.xlu0 %v1811
        %v1813 = vpop.xlane.xlu0 %1812
        %v1814 = vrot.slane %v1813, 4
        %v1815 = vmax.f32 %v1813, %v1814
        %v1816 = vrot.slane %v1815, 2
        %v1817 = vmax.f32 %v1815, %v1816
        %v1818 = vrot.slane %v1817, 1
        %v1819 = vmax.f32 %v1817, %v1818
        %s1820 = vtos %v1819
        %p1821 = scmp.gt.f32.partialorder %s1820, 0.0
        // Predicated region
        $region93: #{tpu_custom_call.1} parent=79 // pred_check
          %p1822 = pneg %p1821
        $region94: #{tpu_custom_call.1} parent=79 // pred_check_branch
          %1824 = sbr.rel (%p1822) target = $region96
        $region95: #{tpu_custom_call.1} parent=79 // pred_region
          %s1825 = scalar_lea.vmem %s9, 48
          %v1826 = vld [vmem:[%s1825] sm:$0xf]
          %v1827 = vld [vmem:[%s1825 + $0x4] sm:$0xf]
          %v1828 = vld [vmem:[%s1825 + $0x8] sm:$0xf]
          %v1829 = vld [vmem:[%s1825 + $0xc] sm:$0xf]
          %s1830 = scalar_lea.vmem %s10, 3
          %v1831 = vld [vmem:[%s1830] sm:$0x1]
          %v1833 = vlaneseq
          %v1834 = vshrl.u32 %v1833, 7
          %v1835 = vsub.s32 0, %v1834
          %v1836 = vrot.slane %v1831, %v1835
          %v1842 = vunpack.c.l.b16 %v1826
          %v1843 = vunpack.c.l.b16 %v1827
          %v1844 = vunpack.c.l.b16 %v1828
          %v1845 = vunpack.c.l.b16 %v1829
          %v1846 = vpack.c.b16 %v1843, %v1842
          %v1847 = vpack.c.b16 %v1845, %v1844
          %v1851 = vsel %vm516, %v1131, 0
          %1853 = vmatprep.subr.bf16.mxu0 0
          %1854 = vmatpush1.bf16.msra.mxu0 %v1846
          %1855 = vmatprep.subr.bf16.mxu0 0
          %1856 = vmatpush1.bf16.msra.mxu0 %v1847
          %1857 = vmatprep.subr.bf16.mxu0 0
          %1858 = vmatpush1.bf16.msra.mxu0 0
          %1859 = vmatprep.subr.bf16.mxu0 0
          %1860 = vmatpush1.bf16.msra.mxu0 0
          %1861 = vmatprep.subr.bf16.mxu0 0
          %1862 = vmatpush1.bf16.msra.mxu0 0
          %1863 = vmatprep.subr.bf16.mxu0 0
          %1864 = vmatpush1.bf16.msra.mxu0 0
          %1865 = vmatprep.subr.bf16.mxu0 0
          %1866 = vmatpush1.bf16.msra.mxu0 0
          %1867 = vmatprep.subr.bf16.mxu0 0
          %1868 = vmatpush1.bf16.msra.mxu0 0
          %1869 = vmatprep.subr.bf16.mxu0 0
          %1870 = vmatpush1.bf16.msra.mxu0 0
          %1871 = vmatprep.subr.bf16.mxu0 0
          %1872 = vmatpush1.bf16.msra.mxu0 0
          %1873 = vmatprep.subr.bf16.mxu0 0
          %1874 = vmatpush1.bf16.msra.mxu0 0
          %1875 = vmatprep.subr.bf16.mxu0 0
          %1876 = vmatpush1.bf16.msra.mxu0 0
          %1877 = vmatprep.subr.bf16.mxu0 0
          %1878 = vmatpush1.bf16.msra.mxu0 0
          %1879 = vmatprep.subr.bf16.mxu0 0
          %1880 = vmatpush1.bf16.msra.mxu0 0
          %1881 = vmatprep.subr.bf16.mxu0 0
          %1882 = vmatpush1.bf16.msra.mxu0 0
          %1883 = vmatprep.subr.bf16.mxu0 0
          %1884 = vmatpush1.bf16.msra.mxu0 0
          %1885 = vmatprep.mubr.bf16.mxu0 0
          %1886 = vmatmul.mubr.bf16.gmra.mrb[0].mxu0 %v1851
          %v1887 = vpop.f32.mrb[0].mxu0
          %v1888 = vadd.f32 %v1836, %v1887
          %v1889 = vpop.f32.mrb[0].mxu0
          %v1890 = vpop.f32.mrb[0].mxu0
          %v1891 = vpop.f32.mrb[0].mxu0
          %1892 = vdwg.mxu0
          %v1893 = vmax.f32 %v1888, 0.0
          %v1894 = vpack.c.bf16 %v1893, %v1893
          %s1895 = scalar_lea.vmem %s11, 96
          %v1896 = vld [vmem:[%s1895] sm:$0xf]
          %v1897 = vld [vmem:[%s1895 + $0x4] sm:$0xf]
          %v1898 = vld [vmem:[%s1895 + $0x8] sm:$0xf]
          %v1899 = vld [vmem:[%s1895 + $0xc] sm:$0xf]
          %v1900 = vld [vmem:[%s1895 + $0x10] sm:$0xf]
          %v1901 = vld [vmem:[%s1895 + $0x14] sm:$0xf]
          %v1902 = vld [vmem:[%s1895 + $0x18] sm:$0xf]
          %v1903 = vld [vmem:[%s1895 + $0x1c] sm:$0xf]
          %s1904 = scalar_lea.vmem %s12, 3
          %v1905 = vld [vmem:[%s1904] sm:$0x1]
          %v1907 = vlaneseq
          %v1908 = vshrl.u32 %v1907, 7
          %v1909 = vsub.s32 0, %v1908
          %v1910 = vrot.slane %v1905, %v1909
          %v1920 = vunpack.c.l.b16 %v1896
          %v1921 = vunpack.c.l.b16 %v1897
          %v1922 = vunpack.c.l.b16 %v1898
          %v1923 = vunpack.c.l.b16 %v1899
          %v1924 = vunpack.c.l.b16 %v1900
          %v1925 = vunpack.c.l.b16 %v1901
          %v1926 = vunpack.c.l.b16 %v1902
          %v1927 = vunpack.c.l.b16 %v1903
          %v1928 = vpack.c.b16 %v1921, %v1920
          %v1929 = vpack.c.b16 %v1923, %v1922
          %v1930 = vpack.c.b16 %v1925, %v1924
          %v1931 = vpack.c.b16 %v1927, %v1926
          %vm1936 = vcmask 523264
          %v1938 = vsel %vm1936, %v1894, 0
          %1940 = vmatprep.subr.bf16.mxu0 0
          %1941 = vmatpush1.bf16.msra.mxu0 %v1928
          %1942 = vmatprep.subr.bf16.mxu0 0
          %1943 = vmatpush1.bf16.msra.mxu0 %v1929
          %1944 = vmatprep.subr.bf16.mxu0 0
          %1945 = vmatpush1.bf16.msra.mxu0 %v1930
          %1946 = vmatprep.subr.bf16.mxu0 0
          %1947 = vmatpush1.bf16.msra.mxu0 %v1931
          %1948 = vmatprep.subr.bf16.mxu0 0
          %1949 = vmatpush1.bf16.msra.mxu0 0
          %1950 = vmatprep.subr.bf16.mxu0 0
          %1951 = vmatpush1.bf16.msra.mxu0 0
          %1952 = vmatprep.subr.bf16.mxu0 0
          %1953 = vmatpush1.bf16.msra.mxu0 0
          %1954 = vmatprep.subr.bf16.mxu0 0
          %1955 = vmatpush1.bf16.msra.mxu0 0
          %1956 = vmatprep.subr.bf16.mxu0 0
          %1957 = vmatpush1.bf16.msra.mxu0 0
          %1958 = vmatprep.subr.bf16.mxu0 0
          %1959 = vmatpush1.bf16.msra.mxu0 0
          %1960 = vmatprep.subr.bf16.mxu0 0
          %1961 = vmatpush1.bf16.msra.mxu0 0
          %1962 = vmatprep.subr.bf16.mxu0 0
          %1963 = vmatpush1.bf16.msra.mxu0 0
          %1964 = vmatprep.subr.bf16.mxu0 0
          %1965 = vmatpush1.bf16.msra.mxu0 0
          %1966 = vmatprep.subr.bf16.mxu0 0
          %1967 = vmatpush1.bf16.msra.mxu0 0
          %1968 = vmatprep.subr.bf16.mxu0 0
          %1969 = vmatpush1.bf16.msra.mxu0 0
          %1970 = vmatprep.subr.bf16.mxu0 0
          %1971 = vmatpush1.bf16.msra.mxu0 0
          %1972 = vmatprep.mubr.bf16.mxu0 0
          %1973 = vmatmul.mubr.bf16.gmra.mrb[0].mxu0 %v1938
          %v1974 = vpop.f32.mrb[0].mxu0
          %v1975 = vadd.f32 %v1910, %v1974
          %v1976 = vpop.f32.mrb[0].mxu0
          %v1977 = vpop.f32.mrb[0].mxu0
          %v1978 = vpop.f32.mrb[0].mxu0
          %1979 = vdwg.mxu0
          %v1980 = vld [vmem:[#allocation2] sm:$0xff]
          %1982 = vset.pattern.permute.xlu0 3
          %1983 = vperm.xlu0 %1982, %v1275
          %v1984 = vpop.permute.xlu0 %1983
          %v1986 = vmul.f32 %v1984, %v1975
          %v1987 = vadd.f32 %v1980, %v1986
          %1988 = vst.msk [vmem:[#allocation2] sm:$0xff] %vm516, %v1987
        $region96: #{tpu_custom_call.1} parent=79 // pred_fallthru
          _
        %v1989 = vld [vmem:[#allocation2] sm:$0xff]
        %v1990 = vadd.f32 %v1130, %v1989
        %v1991 = vld [vmem:[%s13] sm:$0x1]
        %v1992 = vld [vmem:[%s14] sm:$0x1]
        %v1993 = vsel %vm516, %v1990, 0.0
        %1994 = vadd.xlane.f32.xlu0 %v1993
        %v1995 = vpop.xlane.xlu0 %1994
        %v1996 = vmul.f32 %v1995, %v1106
        %v1997 = vsub.f32 %v1990, %v1996
        %v1998 = vmul.f32 %v1997, %v1997
        %v1999 = vsel %vm516, %v1998, 0.0
        %2000 = vadd.xlane.f32.xlu0 %v1999
        %v2001 = vpop.xlane.xlu0 %2000
        %v2002 = vmul.f32 %v2001, %v1106
        %v2003 = vadd.f32 %v2002, 1e-05
        %v2004 = vrsqrt.pop %v2003
        %v2005 = vmul.f32 %v1997, %v2004
        %v2007 = vlaneseq
        %v2008 = vshrl.u32 %v2007, 7
        %v2009 = vsub.s32 0, %v2008
        %v2010 = vrot.slane %v1991, %v2009
        %v2012 = vmul.f32 %v2005, %v2010
        %v2014 = vlaneseq
        %v2015 = vshrl.u32 %v2014, 7
        %v2016 = vsub.s32 0, %v2015
        %v2017 = vrot.slane %v1992, %v2016
        %v2019 = vadd.f32 %v2012, %v2017
        %2020 = vst.msk [vmem:[%s485] sm:$0xff] %vm516, %v2019
        %s2021 = sand.u32 %s357, 1
        %s2022 = scalar_lea.sflag [#allocation4], %s2021
        %s2023 = sand.u32 %s357, 1
        %s2024 = smul.addr %s2023, 8
        %s2025 = scalar_lea.vmem [#allocation3], %s2024
        // Predicated region
        $region97: #{tpu_custom_call.1} parent=79 // pred_check
          %p2026 = pneg %p367
        $region98: #{tpu_custom_call.1} parent=79 // pred_check_branch
          %2028 = sbr.rel (%p2026) target = $region100
        $region99: #{tpu_custom_call.1} parent=79 // pred_region
          %s2030 = ssub.s32 128, 128
          %2031 = vsyncadd %s2022, %s2030
          %s2032 = smul.addr %s29, 128
          %s2033 = scalar_lea.hbm %s15, %s2032
          %s2035 = sshll.u32 %s2025, 4
          %s2036 = int_to_ptr.vmem [resolvable:$true] %s2035
          %2038 = dma.vmem_to_hbm [thread:$0]  %s2036, 128, %s2033, %s2022
        $region100: #{tpu_custom_call.1} parent=79 // pred_fallthru
          _
      $region80: #{tpu_custom_call.1} parent=5 // pred_fallthru
        _
      %p2039 = scmp.le.s32.totalorder 2, %s24
      // Predicated region
      $region101: #{tpu_custom_call.1} parent=5 // pred_check
        %p2040 = pneg %p2039
      $region102: #{tpu_custom_call.1} parent=5 // pred_check_branch
        %2042 = sbr.rel (%p2040) target = $region104
      $region103: #{tpu_custom_call.1} parent=5 // pred_region
        %s2043 = ssub.s32 %s24, 2
        // Predicated region
        $region105: #{tpu_custom_call.1} parent=103 // pred_check
          %p2044 = pneg %p373
        $region106: #{tpu_custom_call.1} parent=103 // pred_check_branch
          %2046 = sbr.rel (%p2044) target = $region108
        $region107: #{tpu_custom_call.1} parent=103 // pred_region
          %s2047 = sand.u32 %s358, 1
          %s2048 = scalar_lea.sflag [#allocation4], %s2047
          %s2049 = sand.u32 %s358, 1
          %s2050 = smul.addr %s2049, 8
          %s2051 = scalar_lea.vmem [#allocation3], %s2050
          %2052 = dma.done %s2048, 128
        $region108: #{tpu_custom_call.1} parent=103 // pred_fallthru
          _
      $region104: #{tpu_custom_call.1} parent=5 // pred_fallthru
        _
    $region6: #{tpu_custom_call.1} parent=1 // loop_footer
      %s28 = sadd.s32 1, %s24
    $region7: #{tpu_custom_call.1} parent=1 // loop_footer_branch
      %23 = sbr.rel target = $region3
    $region8: #{tpu_custom_call.1} parent=1 // loop_exit
      _
    %2053 = vsyncpa [#allocation4], 1
    %s2054 = scalar_lea.sflag [#allocation4], 1
    %2055 = vsyncpa %s2054, 1

</llo_original>
